<compile_context>
chip_gen: v7x
topology: tpu7x:2x2x1
jax: 0.10.0
libtpu: 0.0.40
codegen_flags: <defaults>
</compile_context>

<pallas_src>
import functools

import jax
import jax.numpy as jnp
from jax import lax
from jax.experimental import pallas as pl
from jax.experimental.pallas import tpu as pltpu


def _fc(v, w, b):
    # FCLayer: linear + bias + ReLU (all activated FCLayers here use ReLU)
    return jnp.maximum(jnp.dot(v, w, preferred_element_type=jnp.float32) + b, 0.0)


def interaction_kernel(
    num_before_skip, num_after_skip,
    # inputs
    x_ref, rbf_ref, sbf_ref, idx_kj_ref, idx_ji_ref,
    w_rbf_t_ref, w_sbf_rep_ref,
    w_ji_ref, b_ji_ref, w_kj_t_ref, b_kj_t_ref,
    w_bil_ref,
    res_w_ref, res_b_ref, w_lin_ref, b_lin_ref, w_out_ref, b_out_ref,
    # output
    out_ref,
    # scratch
    xji_ref, xkjt_ref, acc_ref,
):
    t = pl.program_id(0)
    num_e, hidden = x_ref.shape          # e_pad, H
    t_blk = sbf_ref.shape[0]

    # ---- step 0: edge-level prologue (resident in VMEM scratch), zero accumulator ----
    @pl.when(t == 0)
    def _():
        x = x_ref[...]
        # rbf projection, already lane-tiled nb times across the bilinear dim: (E, B*H)
        rbf_t = jnp.dot(rbf_ref[...], w_rbf_t_ref[...],
                        preferred_element_type=jnp.float32)
        # x_ji = relu(x @ w_ji + b_ji)  (f32, feeds the residual/skip path)
        xji_ref[...] = jnp.maximum(
            jnp.dot(x, w_ji_ref[...], preferred_element_type=jnp.float32)
            + b_ji_ref[...], 0.0)
        # x_kj lane-tiled: relu(x @ tile(w_kj) + tile(b_kj)) * (rbf @ tile(w_rbf))
        xkj_t = jnp.maximum(
            jnp.dot(x, w_kj_t_ref[...], preferred_element_type=jnp.float32)
            + b_kj_t_ref[...], 0.0)
        xkjt_ref[...] = (xkj_t * rbf_t).astype(jnp.bfloat16)               # (E, B*H)
        acc_ref[...] = jnp.zeros_like(acc_ref)

    # ---- every step: gather -> bilinear (one K=B*H matmul) -> scatter-add -----------
    # sbf projection fused with the j-major lane repetition; bf16 x bf16 -> f32
    sbf_rep = jnp.dot(sbf_ref[...], w_sbf_rep_ref[...],
                      preferred_element_type=jnp.float32)                  # (T_blk, B*H)
    # gather xkj_tiled[idx_kj] via bf16 one-hot matmul (one-hot exact in bf16)
    lane_e = lax.broadcasted_iota(jnp.int32, (t_blk, num_e), 1)
    oh_kj = (idx_kj_ref[...] == lane_e).astype(jnp.bfloat16)               # (T_blk, E)
    xk_t = jnp.dot(oh_kj, xkjt_ref[...],
                   preferred_element_type=jnp.float32)                     # (T_blk, B*H)
    p = (sbf_rep * xk_t).astype(jnp.bfloat16)                              # (T_blk, B*H)
    bil = jnp.dot(p, w_bil_ref[...],
                  preferred_element_type=jnp.float32)                      # (T_blk, H)
    # scatter-sum over idx_ji: one-hot built already transposed -> plain dot.
    # bil kept f32 here (avoids a second bf16 rounding on the scatter path).
    sub_e = lax.broadcasted_iota(jnp.int32, (num_e, t_blk), 0)
    oh_ji_t = (idx_ji_ref[...] == sub_e).astype(jnp.float32)               # (E, T_blk)
    acc_ref[...] += jnp.dot(oh_ji_t, bil,
                            preferred_element_type=jnp.float32)            # (E, H)

    # ---- last step: residual stack, skip connection, output FC ----------------------
    @pl.when(t == pl.num_programs(0) - 1)
    def _():
        h = xji_ref[...] + acc_ref[...]
        for i in range(num_before_skip):
            h = h + _fc(_fc(h, res_w_ref[i, 0, :, :], res_b_ref[i, 0, :, :]),
                        res_w_ref[i, 1, :, :], res_b_ref[i, 1, :, :])
        h = _fc(h, w_lin_ref[...], b_lin_ref[...]) + x_ref[...]
        for i in range(num_after_skip):
            j = num_before_skip + i
            h = h + _fc(_fc(h, res_w_ref[j, 0, :, :], res_b_ref[j, 0, :, :]),
                        res_w_ref[j, 1, :, :], res_b_ref[j, 1, :, :])
        out_ref[...] = _fc(h, w_out_ref[...], b_out_ref[...])              # (E, O_pad)


def interaction_block(x, rbf, sbf, idx_kj, idx_ji, params,
                      num_bilinear, num_before_skip, num_after_skip, t_blk=256):
    num_edges, hidden = x.shape
    num_triplets, sbf_dim = sbf.shape
    num_radial = rbf.shape[1]
    output_dim = params["w_out"].shape[1]
    nb = num_bilinear
    bh = nb * hidden

    e_pad = ((num_edges + 127) // 128) * 128                  # lane-dense gather K
    t_pad = ((num_triplets + t_blk - 1) // t_blk) * t_blk
    o_pad = ((output_dim + 127) // 128) * 128                 # lane-dense output stores

    x_p = jnp.pad(x, ((0, e_pad - num_edges), (0, 0)))
    rbf_p = jnp.pad(rbf, ((0, e_pad - num_edges), (0, 0)))
    sbf_p = jnp.pad(sbf, ((0, t_pad - num_triplets), (0, 0))).astype(jnp.bfloat16)
    pad_t = t_pad - num_triplets
    # padded triplets get index -1 -> all-zero one-hot rows/cols -> no contribution
    idx_kj_p = jnp.pad(idx_kj.astype(jnp.int32), (0, pad_t),
                       constant_values=-1).reshape(t_pad, 1)
    idx_ji_p = jnp.pad(idx_ji.astype(jnp.int32), (0, pad_t),
                       constant_values=-1).reshape(1, t_pad)

    # kj / rbf weights tiled across the bilinear dim -> resident x_kj is already (E, B*H)
    w_kj_t = jnp.tile(params["w_kj"], (1, nb))                             # (H, B*H)
    b_kj_t = jnp.tile(params["b_kj"], (1, nb))                             # (1, B*H)
    w_rbf_t = jnp.tile(params["w_rbf"], (1, nb))                           # (R, B*H)
    # sbf projection fused with j-major repetition across H lanes (bf16)
    w_sbf_rep = jnp.repeat(params["w_sbf"], hidden, axis=1).astype(jnp.bfloat16)
    # bilinear weight flattened:  [j*H + l, i] = W[i, j, l]  (bf16)
    w_bil_flat = jnp.transpose(params["w_full"], (1, 2, 0)).reshape(
        bh, hidden).astype(jnp.bfloat16)                                   # (B*H, H)
    # pad output projection to 128 lanes (padded lanes produce relu(0+0)=0)
    w_out_p = jnp.pad(params["w_out"], ((0, 0), (0, o_pad - output_dim)))
    b_out_p = jnp.pad(params["b_out"], ((0, 0), (0, o_pad - output_dim)))

    inputs = (
        x_p, rbf_p, sbf_p, idx_kj_p, idx_ji_p,
        w_rbf_t, w_sbf_rep,
        params["w_ji"], params["b_ji"], w_kj_t, b_kj_t,
        w_bil_flat,
        params["res_w"], params["res_b"],
        params["w_lin"], params["b_lin"],
        w_out_p, b_out_p,
    )

    def full2(shape):
        return pl.BlockSpec(shape, lambda t: (0, 0))

    def full4(shape):
        return pl.BlockSpec(shape, lambda t: (0, 0, 0, 0))

    in_specs = [
        full2((e_pad, hidden)),                              # x
        full2((e_pad, num_radial)),                          # rbf
        pl.BlockSpec((t_blk, sbf_dim), lambda t: (t, 0)),    # sbf (blocked over T, bf16)
        pl.BlockSpec((t_blk, 1), lambda t: (t, 0)),          # idx_kj (column vector)
        pl.BlockSpec((1, t_blk), lambda t: (0, t)),          # idx_ji (row vector)
        full2((num_radial, bh)),                             # w_rbf tiled
        full2((sbf_dim, bh)),                                # w_sbf_rep (bf16)
        full2((hidden, hidden)),                             # w_ji
        full2((1, hidden)),                                  # b_ji
        full2((hidden, bh)),                                 # w_kj tiled
        full2((1, bh)),                                      # b_kj tiled
        full2((bh, hidden)),                                 # w_bil_flat (bf16)
        full4(params["res_w"].shape),                        # res_w
        full4(params["res_b"].shape),                        # res_b
        full2((hidden, hidden)),                             # w_lin
        full2((1, hidden)),                                  # b_lin
        full2((hidden, o_pad)),                              # w_out (padded)
        full2((1, o_pad)),                                   # b_out (padded)
    ]

    kernel = functools.partial(interaction_kernel, num_before_skip, num_after_skip)
    out_p = pl.pallas_call(
        kernel,
        out_shape=jax.ShapeDtypeStruct((e_pad, o_pad), jnp.float32),
        grid_spec=pltpu.PrefetchScalarGridSpec(
            num_scalar_prefetch=0,
            grid=(t_pad // t_blk,),
            in_specs=in_specs,
            out_specs=pl.BlockSpec((e_pad, o_pad), lambda t: (0, 0)),
            scratch_shapes=[
                pltpu.VMEM((e_pad, hidden), jnp.float32),    # x_ji
                pltpu.VMEM((e_pad, bh), jnp.bfloat16),       # x_kj * rbf, lane-tiled
                pltpu.VMEM((e_pad, hidden), jnp.float32),    # scatter accumulator
            ]),
        compiler_params=pltpu.CompilerParams(
            dimension_semantics=("arbitrary",)),
    )(*inputs)
    return out_p[:num_edges, :output_dim]


def reference(x, rbf, sbf, idx_kj, idx_ji, params, num_before, num_after):
    """Pure-JAX (f32) reference mirroring the PyTorch forward."""
    def fc(v, w, b):
        return jnp.maximum(v @ w + b, 0.0)

    rbf = rbf @ params["w_rbf"]
    sbf = sbf @ params["w_sbf"]
    x_ji = fc(x, params["w_ji"], params["b_ji"])
    x_kj = fc(x, params["w_kj"], params["b_kj"]) * rbf
    xk = jnp.einsum("wj,wl,ijl->wi", sbf, x_kj[idx_kj], params["w_full"])
    xk = jax.ops.segment_sum(xk, idx_ji, num_segments=x.shape[0])
    h = x_ji + xk
    rw, rb = params["res_w"], params["res_b"]

    def resid(v, i):
        t = fc(v, rw[i, 0], rb[i, 0])
        return v + fc(t, rw[i, 1], rb[i, 1])

    for i in range(num_before):
        h = resid(h, i)
    h = fc(h, params["w_lin"], params["b_lin"]) + x
    for i in range(num_after):
        h = resid(h, num_before + i)
    return fc(h, params["w_out"], params["b_out"])


if __name__ == "__main__":
    # module hyperparameters
    hidden_dim = 32
    output_dim = 16
    num_bilinear = 8
    num_spherical = 7
    num_radial = 6
    num_before_skip = 1
    num_after_skip = 2

    # data sizes (160 triplets fit in a single 256-triplet grid step)
    num_edges = 64
    num_triplets = 160

    key = jax.random.PRNGKey(0)
    ks = jax.random.split(key, 20)

    x = jax.random.normal(ks[0], (num_edges, hidden_dim), jnp.float32)
    rbf_in = jax.random.normal(ks[1], (num_edges, num_radial), jnp.float32)
    sbf_in = jax.random.normal(
        ks[2], (num_triplets, num_spherical * num_radial), jnp.float32)
    idx_kj = jax.random.randint(ks[3], (num_triplets,), 0, num_edges, jnp.int32)
    idx_ji = jax.random.randint(ks[4], (num_triplets,), 0, num_edges, jnp.int32)

    def lin_w(k, fan_in, fan_out):
        return jax.random.normal(k, (fan_in, fan_out), jnp.float32) / jnp.sqrt(
            jnp.float32(fan_in))

    n_res = num_before_skip + num_after_skip
    params = {
        "w_rbf": lin_w(ks[5], num_radial, hidden_dim),
        "w_sbf": lin_w(ks[6], num_spherical * num_radial, num_bilinear),
        "w_kj": lin_w(ks[7], hidden_dim, hidden_dim),
        "b_kj": 0.1 * jax.random.normal(ks[8], (1, hidden_dim), jnp.float32),
        "w_ji": lin_w(ks[9], hidden_dim, hidden_dim),
        "b_ji": 0.1 * jax.random.normal(ks[10], (1, hidden_dim), jnp.float32),
        "w_full": jax.random.normal(
            ks[11], (hidden_dim, num_bilinear, hidden_dim), jnp.float32) * (2.0 / hidden_dim),
        "res_w": jax.random.normal(
            ks[12], (n_res, 2, hidden_dim, hidden_dim), jnp.float32) / jnp.sqrt(
                jnp.float32(hidden_dim)),
        "res_b": 0.1 * jax.random.normal(
            ks[13], (n_res, 2, 1, hidden_dim), jnp.float32),
        "w_lin": lin_w(ks[14], hidden_dim, hidden_dim),
        "b_lin": 0.1 * jax.random.normal(ks[15], (1, hidden_dim), jnp.float32),
        "w_out": lin_w(ks[16], hidden_dim, output_dim),
        "b_out": 0.1 * jax.random.normal(ks[17], (1, output_dim), jnp.float32),
    }

    out = interaction_block(x, rbf_in, sbf_in, idx_kj, idx_ji, params,
                            num_bilinear, num_before_skip, num_after_skip)
    out = jax.block_until_ready(out)

    ref = reference(x, rbf_in, sbf_in, idx_kj, idx_ji, params,
                    num_before_skip, num_after_skip)
    assert out.shape == (num_edges, output_dim)
    max_err = float(jnp.max(jnp.abs(out - ref)))
    # Tolerance budget: sbf / w_sbf / x_kj / p / W_bilinear are all bf16 on the MXU
    # (f32 accumulation), so per-element error is a few 1e-2 at these magnitudes.
    assert jnp.allclose(out, ref, rtol=5e-2, atol=5e-2), (
        f"mismatch vs JAX reference (max abs err {max_err})")
    print("KERNEL_OK")
</pallas_src>

<mosaic_0001>
module attributes {stable_mosaic.version = 11 : i64} {
  func.func @interaction_kernel(%arg0: i32, %arg1: memref<128x32xf32, #tpu.memory_space<vmem>>, %arg2: memref<128x6xf32, #tpu.memory_space<vmem>>, %arg3: memref<256x42xbf16, #tpu.memory_space<vmem>>, %arg4: memref<256x1xi32, #tpu.memory_space<vmem>>, %arg5: memref<1x256xi32, #tpu.memory_space<vmem>>, %arg6: memref<6x256xf32, #tpu.memory_space<vmem>>, %arg7: memref<42x256xbf16, #tpu.memory_space<vmem>>, %arg8: memref<32x32xf32, #tpu.memory_space<vmem>>, %arg9: memref<1x32xf32, #tpu.memory_space<vmem>>, %arg10: memref<32x256xf32, #tpu.memory_space<vmem>>, %arg11: memref<1x256xf32, #tpu.memory_space<vmem>>, %arg12: memref<256x32xbf16, #tpu.memory_space<vmem>>, %arg13: memref<3x2x32x32xf32, #tpu.memory_space<vmem>>, %arg14: memref<3x2x1x32xf32, #tpu.memory_space<vmem>>, %arg15: memref<32x32xf32, #tpu.memory_space<vmem>>, %arg16: memref<1x32xf32, #tpu.memory_space<vmem>>, %arg17: memref<32x128xf32, #tpu.memory_space<vmem>>, %arg18: memref<1x128xf32, #tpu.memory_space<vmem>>, %arg19: memref<128x128xf32, #tpu.memory_space<vmem>>, %arg20: memref<128x32xf32, #tpu.memory_space<vmem>>, %arg21: memref<128x256xbf16, #tpu.memory_space<vmem>>, %arg22: memref<128x32xf32, #tpu.memory_space<vmem>>) attributes {dimension_semantics = [#tpu.dimension_semantics<arbitrary>], iteration_bounds = array<i64: 1>, scalar_prefetch = 0 : i64, scratch_operands = 3 : i64, tpu.core_type = #tpu.core_type<tc>, window_params = [{pipeline_mode = #tpu.pipeline_mode<synchronous>, transform_indices = @transform_0, window_bounds = array<i64: 128, 32>}, {pipeline_mode = #tpu.pipeline_mode<synchronous>, transform_indices = @transform_1, window_bounds = array<i64: 128, 6>}, {transform_indices = @transform_2, window_bounds = array<i64: 256, 42>}, {transform_indices = @transform_3, window_bounds = array<i64: 256, 1>}, {transform_indices = @transform_4, window_bounds = array<i64: 1, 256>}, {pipeline_mode = #tpu.pipeline_mode<synchronous>, transform_indices = @transform_5, window_bounds = array<i64: 6, 256>}, {pipeline_mode = #tpu.pipeline_mode<synchronous>, transform_indices = @transform_6, window_bounds = array<i64: 42, 256>}, {pipeline_mode = #tpu.pipeline_mode<synchronous>, transform_indices = @transform_7, window_bounds = array<i64: 32, 32>}, {pipeline_mode = #tpu.pipeline_mode<synchronous>, transform_indices = @transform_8, window_bounds = array<i64: 1, 32>}, {pipeline_mode = #tpu.pipeline_mode<synchronous>, transform_indices = @transform_9, window_bounds = array<i64: 32, 256>}, {pipeline_mode = #tpu.pipeline_mode<synchronous>, transform_indices = @transform_10, window_bounds = array<i64: 1, 256>}, {pipeline_mode = #tpu.pipeline_mode<synchronous>, transform_indices = @transform_11, window_bounds = array<i64: 256, 32>}, {pipeline_mode = #tpu.pipeline_mode<synchronous>, transform_indices = @transform_12, window_bounds = array<i64: 3, 2, 32, 32>}, {pipeline_mode = #tpu.pipeline_mode<synchronous>, transform_indices = @transform_13, window_bounds = array<i64: 3, 2, 1, 32>}, {pipeline_mode = #tpu.pipeline_mode<synchronous>, transform_indices = @transform_14, window_bounds = array<i64: 32, 32>}, {pipeline_mode = #tpu.pipeline_mode<synchronous>, transform_indices = @transform_15, window_bounds = array<i64: 1, 32>}, {pipeline_mode = #tpu.pipeline_mode<synchronous>, transform_indices = @transform_16, window_bounds = array<i64: 32, 128>}, {pipeline_mode = #tpu.pipeline_mode<synchronous>, transform_indices = @transform_17, window_bounds = array<i64: 1, 128>}, {pipeline_mode = #tpu.pipeline_mode<synchronous>, transform_indices = @transform_18, window_bounds = array<i64: 128, 128>}]} {
    %c0_i32 = arith.constant 0 : i32
    %0 = arith.cmpi eq, %arg0, %c0_i32 : i32
    %1 = arith.extui %0 : i1 to i32
    %c0_i32_0 = arith.constant 0 : i32
    %2 = arith.cmpi ne, %1, %c0_i32_0 : i32
    scf.if %2 {
      %c0_21 = arith.constant 0 : index
      %c0_22 = arith.constant 0 : index
      %32 = vector.load %arg1[%c0_21, %c0_22] : memref<128x32xf32, #tpu.memory_space<vmem>>, vector<128x32xf32>
      %c0_23 = arith.constant 0 : index
      %c0_24 = arith.constant 0 : index
      %33 = vector.load %arg2[%c0_23, %c0_24] : memref<128x6xf32, #tpu.memory_space<vmem>>, vector<128x6xf32>
      %c0_25 = arith.constant 0 : index
      %c0_26 = arith.constant 0 : index
      %34 = vector.load %arg6[%c0_25, %c0_26] : memref<6x256xf32, #tpu.memory_space<vmem>>, vector<6x256xf32>
      %cst_27 = arith.constant dense<0.000000e+00> : vector<128x256xf32>
      %35 = tpu.matmul %33, %34, %cst_27 {dimension_numbers = #tpu.dot_dimension_numbers<[1], [0], [0], [1], [0, 0, 1, 1], [], []>} : vector<128x6xf32>, vector<6x256xf32>, vector<128x256xf32> -> vector<128x256xf32>
      %c0_28 = arith.constant 0 : index
      %c0_29 = arith.constant 0 : index
      %36 = vector.load %arg8[%c0_28, %c0_29] : memref<32x32xf32, #tpu.memory_space<vmem>>, vector<32x32xf32>
      %cst_30 = arith.constant dense<0.000000e+00> : vector<128x32xf32>
      %37 = tpu.matmul %32, %36, %cst_30 {dimension_numbers = #tpu.dot_dimension_numbers<[1], [0], [0], [1], [0, 0, 1, 1], [], []>} : vector<128x32xf32>, vector<32x32xf32>, vector<128x32xf32> -> vector<128x32xf32>
      %c0_31 = arith.constant 0 : index
      %c0_32 = arith.constant 0 : index
      %38 = vector.load %arg9[%c0_31, %c0_32] : memref<1x32xf32, #tpu.memory_space<vmem>>, vector<1x32xf32>
      %39 = vector.broadcast %38 : vector<1x32xf32> to vector<128x32xf32>
      %40 = arith.addf %37, %39 : vector<128x32xf32>
      %cst_33 = arith.constant 0.000000e+00 : f32
      %41 = vector.broadcast %cst_33 : f32 to vector<128x32xf32>
      %42 = arith.maximumf %40, %41 : vector<128x32xf32>
      %c0_34 = arith.constant 0 : index
      %c0_35 = arith.constant 0 : index
      %43 = vector.load %arg20[%c0_34, %c0_35] : memref<128x32xf32, #tpu.memory_space<vmem>>, vector<128x32xf32>
      tpu.vector_store %arg20[%c0_34, %c0_35], %42 {strides = array<i32>} : memref<128x32xf32, #tpu.memory_space<vmem>>, vector<128x32xf32>,
      %c0_36 = arith.constant 0 : index
      %c0_37 = arith.constant 0 : index
      %44 = vector.load %arg10[%c0_36, %c0_37] : memref<32x256xf32, #tpu.memory_space<vmem>>, vector<32x256xf32>
      %cst_38 = arith.constant dense<0.000000e+00> : vector<128x256xf32>
      %45 = tpu.matmul %32, %44, %cst_38 {dimension_numbers = #tpu.dot_dimension_numbers<[1], [0], [0], [1], [0, 0, 1, 1], [], []>} : vector<128x32xf32>, vector<32x256xf32>, vector<128x256xf32> -> vector<128x256xf32>
      %c0_39 = arith.constant 0 : index
      %c0_40 = arith.constant 0 : index
      %46 = vector.load %arg11[%c0_39, %c0_40] : memref<1x256xf32, #tpu.memory_space<vmem>>, vector<1x256xf32>
      %47 = vector.broadcast %46 : vector<1x256xf32> to vector<128x256xf32>
      %48 = arith.addf %45, %47 : vector<128x256xf32>
      %cst_41 = arith.constant 0.000000e+00 : f32
      %49 = vector.broadcast %cst_41 : f32 to vector<128x256xf32>
      %50 = arith.maximumf %48, %49 : vector<128x256xf32>
      %51 = arith.mulf %50, %35 : vector<128x256xf32>
      %52 = arith.truncf %51 : vector<128x256xf32> to vector<128x256xbf16>
      %c0_42 = arith.constant 0 : index
      %c0_43 = arith.constant 0 : index
      %53 = vector.load %arg21[%c0_42, %c0_43] : memref<128x256xbf16, #tpu.memory_space<vmem>>, vector<128x256xbf16>
      tpu.vector_store %arg21[%c0_42, %c0_43], %52 {strides = array<i32>} : memref<128x256xbf16, #tpu.memory_space<vmem>>, vector<128x256xbf16>,
      %cst_44 = arith.constant 0.000000e+00 : f32
      %54 = vector.broadcast %cst_44 : f32 to vector<128x32xf32>
      %c0_45 = arith.constant 0 : index
      %c0_46 = arith.constant 0 : index
      %55 = vector.load %arg22[%c0_45, %c0_46] : memref<128x32xf32, #tpu.memory_space<vmem>>, vector<128x32xf32>
      tpu.vector_store %arg22[%c0_45, %c0_46], %54 {strides = array<i32>} : memref<128x32xf32, #tpu.memory_space<vmem>>, vector<128x32xf32>,
    } else {
    }
    %c0 = arith.constant 0 : index
    %c0_1 = arith.constant 0 : index
    %3 = vector.load %arg3[%c0, %c0_1] : memref<256x42xbf16, #tpu.memory_space<vmem>>, vector<256x42xbf16>
    %c0_2 = arith.constant 0 : index
    %c0_3 = arith.constant 0 : index
    %4 = vector.load %arg7[%c0_2, %c0_3] : memref<42x256xbf16, #tpu.memory_space<vmem>>, vector<42x256xbf16>
    %cst = arith.constant dense<0.000000e+00> : vector<256x256xf32>
    %5 = tpu.matmul %3, %4, %cst {dimension_numbers = #tpu.dot_dimension_numbers<[1], [0], [0], [1], [0, 0, 1, 1], [], []>} : vector<256x42xbf16>, vector<42x256xbf16>, vector<256x256xf32> -> vector<256x256xf32>
    %6 = tpu.iota {dimensions = array<i32: 1>} : vector<256x128xi32>
    %c0_4 = arith.constant 0 : index
    %c0_5 = arith.constant 0 : index
    %7 = vector.load %arg4[%c0_4, %c0_5] : memref<256x1xi32, #tpu.memory_space<vmem>>, vector<256x1xi32>
    %8 = vector.broadcast %7 : vector<256x1xi32> to vector<256x128xi32>
    %9 = arith.cmpi eq, %8, %6 : vector<256x128xi32>
    %10 = arith.extui %9 : vector<256x128xi1> to vector<256x128xi32>
    %11 = arith.sitofp %10 : vector<256x128xi32> to vector<256x128xf32>
    %12 = arith.truncf %11 : vector<256x128xf32> to vector<256x128xbf16>
    %c0_6 = arith.constant 0 : index
    %c0_7 = arith.constant 0 : index
    %13 = vector.load %arg21[%c0_6, %c0_7] : memref<128x256xbf16, #tpu.memory_space<vmem>>, vector<128x256xbf16>
    %cst_8 = arith.constant dense<0.000000e+00> : vector<256x256xf32>
    %14 = tpu.matmul %12, %13, %cst_8 {dimension_numbers = #tpu.dot_dimension_numbers<[1], [0], [0], [1], [0, 0, 1, 1], [], []>} : vector<256x128xbf16>, vector<128x256xbf16>, vector<256x256xf32> -> vector<256x256xf32>
    %15 = arith.mulf %5, %14 : vector<256x256xf32>
    %16 = arith.truncf %15 : vector<256x256xf32> to vector<256x256xbf16>
    %c0_9 = arith.constant 0 : index
    %c0_10 = arith.constant 0 : index
    %17 = vector.load %arg12[%c0_9, %c0_10] : memref<256x32xbf16, #tpu.memory_space<vmem>>, vector<256x32xbf16>
    %cst_11 = arith.constant dense<0.000000e+00> : vector<256x32xf32>
    %18 = tpu.matmul %16, %17, %cst_11 {dimension_numbers = #tpu.dot_dimension_numbers<[1], [0], [0], [1], [0, 0, 1, 1], [], []>} : vector<256x256xbf16>, vector<256x32xbf16>, vector<256x32xf32> -> vector<256x32xf32>
    %19 = tpu.iota {dimensions = array<i32: 0>} : vector<128x256xi32>
    %c0_12 = arith.constant 0 : index
    %c0_13 = arith.constant 0 : index
    %20 = vector.load %arg5[%c0_12, %c0_13] : memref<1x256xi32, #tpu.memory_space<vmem>>, vector<1x256xi32>
    %21 = vector.broadcast %20 : vector<1x256xi32> to vector<128x256xi32>
    %22 = arith.cmpi eq, %21, %19 : vector<128x256xi32>
    %23 = arith.extui %22 : vector<128x256xi1> to vector<128x256xi32>
    %24 = arith.sitofp %23 : vector<128x256xi32> to vector<128x256xf32>
    %c0_14 = arith.constant 0 : index
    %c0_15 = arith.constant 0 : index
    %25 = vector.load %arg22[%c0_14, %c0_15] : memref<128x32xf32, #tpu.memory_space<vmem>>, vector<128x32xf32>
    %cst_16 = arith.constant dense<0.000000e+00> : vector<128x32xf32>
    %26 = tpu.matmul %24, %18, %cst_16 {dimension_numbers = #tpu.dot_dimension_numbers<[1], [0], [0], [1], [0, 0, 1, 1], [], []>} : vector<128x256xf32>, vector<256x32xf32>, vector<128x32xf32> -> vector<128x32xf32>
    %27 = arith.addf %25, %26 : vector<128x32xf32>
    %c0_17 = arith.constant 0 : index
    %c0_18 = arith.constant 0 : index
    %28 = vector.load %arg22[%c0_17, %c0_18] : memref<128x32xf32, #tpu.memory_space<vmem>>, vector<128x32xf32>
    tpu.vector_store %arg22[%c0_17, %c0_18], %27 {strides = array<i32>} : memref<128x32xf32, #tpu.memory_space<vmem>>, vector<128x32xf32>,
    %c0_i32_19 = arith.constant 0 : i32
    %29 = arith.cmpi eq, %arg0, %c0_i32_19 : i32
    %30 = arith.extui %29 : i1 to i32
    %c0_i32_20 = arith.constant 0 : i32
    %31 = arith.cmpi ne, %30, %c0_i32_20 : i32
    scf.if %31 {
      %c0_21 = arith.constant 0 : index
      %c0_22 = arith.constant 0 : index
      %32 = vector.load %arg20[%c0_21, %c0_22] : memref<128x32xf32, #tpu.memory_space<vmem>>, vector<128x32xf32>
      %c0_23 = arith.constant 0 : index
      %c0_24 = arith.constant 0 : index
      %33 = vector.load %arg22[%c0_23, %c0_24] : memref<128x32xf32, #tpu.memory_space<vmem>>, vector<128x32xf32>
      %34 = arith.addf %32, %33 : vector<128x32xf32>
      %c0_25 = arith.constant 0 : index
      %c0_26 = arith.constant 0 : index
      %c0_27 = arith.constant 0 : index
      %c0_28 = arith.constant 0 : index
      %35 = vector.load %arg13[%c0_25, %c0_26, %c0_27, %c0_28] : memref<3x2x32x32xf32, #tpu.memory_space<vmem>>, vector<1x1x32x32xf32>
      %36 = vector.shape_cast %35 : vector<1x1x32x32xf32> to vector<32x32xf32>
      %c0_29 = arith.constant 0 : index
      %c0_30 = arith.constant 0 : index
      %c0_31 = arith.constant 0 : index
      %c0_32 = arith.constant 0 : index
      %37 = vector.load %arg14[%c0_29, %c0_30, %c0_31, %c0_32] : memref<3x2x1x32xf32, #tpu.memory_space<vmem>>, vector<1x1x1x32xf32>
      %38 = vector.shape_cast %37 : vector<1x1x1x32xf32> to vector<1x32xf32>
      %cst_33 = arith.constant dense<0.000000e+00> : vector<128x32xf32>
      %39 = tpu.matmul %34, %36, %cst_33 {dimension_numbers = #tpu.dot_dimension_numbers<[1], [0], [0], [1], [0, 0, 1, 1], [], []>} : vector<128x32xf32>, vector<32x32xf32>, vector<128x32xf32> -> vector<128x32xf32>
      %40 = vector.broadcast %38 : vector<1x32xf32> to vector<128x32xf32>
      %41 = arith.addf %39, %40 : vector<128x32xf32>
      %cst_34 = arith.constant 0.000000e+00 : f32
      %42 = vector.broadcast %cst_34 : f32 to vector<128x32xf32>
      %43 = arith.maximumf %41, %42 : vector<128x32xf32>
      %c0_35 = arith.constant 0 : index
      %c1 = arith.constant 1 : index
      %c0_36 = arith.constant 0 : index
      %c0_37 = arith.constant 0 : index
      %44 = vector.load %arg13[%c0_35, %c1, %c0_36, %c0_37] : memref<3x2x32x32xf32, #tpu.memory_space<vmem>>, vector<1x1x32x32xf32>
      %45 = vector.shape_cast %44 : vector<1x1x32x32xf32> to vector<32x32xf32>
      %c0_38 = arith.constant 0 : index
      %c1_39 = arith.constant 1 : index
      %c0_40 = arith.constant 0 : index
      %c0_41 = arith.constant 0 : index
      %46 = vector.load %arg14[%c0_38, %c1_39, %c0_40, %c0_41] : memref<3x2x1x32xf32, #tpu.memory_space<vmem>>, vector<1x1x1x32xf32>
      %47 = vector.shape_cast %46 : vector<1x1x1x32xf32> to vector<1x32xf32>
      %cst_42 = arith.constant dense<0.000000e+00> : vector<128x32xf32>
      %48 = tpu.matmul %43, %45, %cst_42 {dimension_numbers = #tpu.dot_dimension_numbers<[1], [0], [0], [1], [0, 0, 1, 1], [], []>} : vector<128x32xf32>, vector<32x32xf32>, vector<128x32xf32> -> vector<128x32xf32>
      %49 = vector.broadcast %47 : vector<1x32xf32> to vector<128x32xf32>
      %50 = arith.addf %48, %49 : vector<128x32xf32>
      %cst_43 = arith.constant 0.000000e+00 : f32
      %51 = vector.broadcast %cst_43 : f32 to vector<128x32xf32>
      %52 = arith.maximumf %50, %51 : vector<128x32xf32>
      %53 = arith.addf %34, %52 : vector<128x32xf32>
      %c0_44 = arith.constant 0 : index
      %c0_45 = arith.constant 0 : index
      %54 = vector.load %arg15[%c0_44, %c0_45] : memref<32x32xf32, #tpu.memory_space<vmem>>, vector<32x32xf32>
      %c0_46 = arith.constant 0 : index
      %c0_47 = arith.constant 0 : index
      %55 = vector.load %arg16[%c0_46, %c0_47] : memref<1x32xf32, #tpu.memory_space<vmem>>, vector<1x32xf32>
      %cst_48 = arith.constant dense<0.000000e+00> : vector<128x32xf32>
      %56 = tpu.matmul %53, %54, %cst_48 {dimension_numbers = #tpu.dot_dimension_numbers<[1], [0], [0], [1], [0, 0, 1, 1], [], []>} : vector<128x32xf32>, vector<32x32xf32>, vector<128x32xf32> -> vector<128x32xf32>
      %57 = vector.broadcast %55 : vector<1x32xf32> to vector<128x32xf32>
      %58 = arith.addf %56, %57 : vector<128x32xf32>
      %cst_49 = arith.constant 0.000000e+00 : f32
      %59 = vector.broadcast %cst_49 : f32 to vector<128x32xf32>
      %60 = arith.maximumf %58, %59 : vector<128x32xf32>
      %c0_50 = arith.constant 0 : index
      %c0_51 = arith.constant 0 : index
      %61 = vector.load %arg1[%c0_50, %c0_51] : memref<128x32xf32, #tpu.memory_space<vmem>>, vector<128x32xf32>
      %62 = arith.addf %60, %61 : vector<128x32xf32>
      %c1_52 = arith.constant 1 : index
      %c0_53 = arith.constant 0 : index
      %c0_54 = arith.constant 0 : index
      %c0_55 = arith.constant 0 : index
      %63 = vector.load %arg13[%c1_52, %c0_53, %c0_54, %c0_55] : memref<3x2x32x32xf32, #tpu.memory_space<vmem>>, vector<1x1x32x32xf32>
      %64 = vector.shape_cast %63 : vector<1x1x32x32xf32> to vector<32x32xf32>
      %c1_56 = arith.constant 1 : index
      %c0_57 = arith.constant 0 : index
      %c0_58 = arith.constant 0 : index
      %c0_59 = arith.constant 0 : index
      %65 = vector.load %arg14[%c1_56, %c0_57, %c0_58, %c0_59] : memref<3x2x1x32xf32, #tpu.memory_space<vmem>>, vector<1x1x1x32xf32>
      %66 = vector.shape_cast %65 : vector<1x1x1x32xf32> to vector<1x32xf32>
      %cst_60 = arith.constant dense<0.000000e+00> : vector<128x32xf32>
      %67 = tpu.matmul %62, %64, %cst_60 {dimension_numbers = #tpu.dot_dimension_numbers<[1], [0], [0], [1], [0, 0, 1, 1], [], []>} : vector<128x32xf32>, vector<32x32xf32>, vector<128x32xf32> -> vector<128x32xf32>
      %68 = vector.broadcast %66 : vector<1x32xf32> to vector<128x32xf32>
      %69 = arith.addf %67, %68 : vector<128x32xf32>
      %cst_61 = arith.constant 0.000000e+00 : f32
      %70 = vector.broadcast %cst_61 : f32 to vector<128x32xf32>
      %71 = arith.maximumf %69, %70 : vector<128x32xf32>
      %c1_62 = arith.constant 1 : index
      %c1_63 = arith.constant 1 : index
      %c0_64 = arith.constant 0 : index
      %c0_65 = arith.constant 0 : index
      %72 = vector.load %arg13[%c1_62, %c1_63, %c0_64, %c0_65] : memref<3x2x32x32xf32, #tpu.memory_space<vmem>>, vector<1x1x32x32xf32>
      %73 = vector.shape_cast %72 : vector<1x1x32x32xf32> to vector<32x32xf32>
      %c1_66 = arith.constant 1 : index
      %c1_67 = arith.constant 1 : index
      %c0_68 = arith.constant 0 : index
      %c0_69 = arith.constant 0 : index
      %74 = vector.load %arg14[%c1_66, %c1_67, %c0_68, %c0_69] : memref<3x2x1x32xf32, #tpu.memory_space<vmem>>, vector<1x1x1x32xf32>
      %75 = vector.shape_cast %74 : vector<1x1x1x32xf32> to vector<1x32xf32>
      %cst_70 = arith.constant dense<0.000000e+00> : vector<128x32xf32>
      %76 = tpu.matmul %71, %73, %cst_70 {dimension_numbers = #tpu.dot_dimension_numbers<[1], [0], [0], [1], [0, 0, 1, 1], [], []>} : vector<128x32xf32>, vector<32x32xf32>, vector<128x32xf32> -> vector<128x32xf32>
      %77 = vector.broadcast %75 : vector<1x32xf32> to vector<128x32xf32>
      %78 = arith.addf %76, %77 : vector<128x32xf32>
      %cst_71 = arith.constant 0.000000e+00 : f32
      %79 = vector.broadcast %cst_71 : f32 to vector<128x32xf32>
      %80 = arith.maximumf %78, %79 : vector<128x32xf32>
      %81 = arith.addf %62, %80 : vector<128x32xf32>
      %c2 = arith.constant 2 : index
      %c0_72 = arith.constant 0 : index
      %c0_73 = arith.constant 0 : index
      %c0_74 = arith.constant 0 : index
      %82 = vector.load %arg13[%c2, %c0_72, %c0_73, %c0_74] : memref<3x2x32x32xf32, #tpu.memory_space<vmem>>, vector<1x1x32x32xf32>
      %83 = vector.shape_cast %82 : vector<1x1x32x32xf32> to vector<32x32xf32>
      %c2_75 = arith.constant 2 : index
      %c0_76 = arith.constant 0 : index
      %c0_77 = arith.constant 0 : index
      %c0_78 = arith.constant 0 : index
      %84 = vector.load %arg14[%c2_75, %c0_76, %c0_77, %c0_78] : memref<3x2x1x32xf32, #tpu.memory_space<vmem>>, vector<1x1x1x32xf32>
      %85 = vector.shape_cast %84 : vector<1x1x1x32xf32> to vector<1x32xf32>
      %cst_79 = arith.constant dense<0.000000e+00> : vector<128x32xf32>
      %86 = tpu.matmul %81, %83, %cst_79 {dimension_numbers = #tpu.dot_dimension_numbers<[1], [0], [0], [1], [0, 0, 1, 1], [], []>} : vector<128x32xf32>, vector<32x32xf32>, vector<128x32xf32> -> vector<128x32xf32>
      %87 = vector.broadcast %85 : vector<1x32xf32> to vector<128x32xf32>
      %88 = arith.addf %86, %87 : vector<128x32xf32>
      %cst_80 = arith.constant 0.000000e+00 : f32
      %89 = vector.broadcast %cst_80 : f32 to vector<128x32xf32>
      %90 = arith.maximumf %88, %89 : vector<128x32xf32>
      %c2_81 = arith.constant 2 : index
      %c1_82 = arith.constant 1 : index
      %c0_83 = arith.constant 0 : index
      %c0_84 = arith.constant 0 : index
      %91 = vector.load %arg13[%c2_81, %c1_82, %c0_83, %c0_84] : memref<3x2x32x32xf32, #tpu.memory_space<vmem>>, vector<1x1x32x32xf32>
      %92 = vector.shape_cast %91 : vector<1x1x32x32xf32> to vector<32x32xf32>
      %c2_85 = arith.constant 2 : index
      %c1_86 = arith.constant 1 : index
      %c0_87 = arith.constant 0 : index
      %c0_88 = arith.constant 0 : index
      %93 = vector.load %arg14[%c2_85, %c1_86, %c0_87, %c0_88] : memref<3x2x1x32xf32, #tpu.memory_space<vmem>>, vector<1x1x1x32xf32>
      %94 = vector.shape_cast %93 : vector<1x1x1x32xf32> to vector<1x32xf32>
      %cst_89 = arith.constant dense<0.000000e+00> : vector<128x32xf32>
      %95 = tpu.matmul %90, %92, %cst_89 {dimension_numbers = #tpu.dot_dimension_numbers<[1], [0], [0], [1], [0, 0, 1, 1], [], []>} : vector<128x32xf32>, vector<32x32xf32>, vector<128x32xf32> -> vector<128x32xf32>
      %96 = vector.broadcast %94 : vector<1x32xf32> to vector<128x32xf32>
      %97 = arith.addf %95, %96 : vector<128x32xf32>
      %cst_90 = arith.constant 0.000000e+00 : f32
      %98 = vector.broadcast %cst_90 : f32 to vector<128x32xf32>
      %99 = arith.maximumf %97, %98 : vector<128x32xf32>
      %100 = arith.addf %81, %99 : vector<128x32xf32>
      %c0_91 = arith.constant 0 : index
      %c0_92 = arith.constant 0 : index
      %101 = vector.load %arg17[%c0_91, %c0_92] : memref<32x128xf32, #tpu.memory_space<vmem>>, vector<32x128xf32>
      %c0_93 = arith.constant 0 : index
      %c0_94 = arith.constant 0 : index
      %102 = vector.load %arg18[%c0_93, %c0_94] : memref<1x128xf32, #tpu.memory_space<vmem>>, vector<1x128xf32>
      %cst_95 = arith.constant dense<0.000000e+00> : vector<128x128xf32>
      %103 = tpu.matmul %100, %101, %cst_95 {dimension_numbers = #tpu.dot_dimension_numbers<[1], [0], [0], [1], [0, 0, 1, 1], [], []>} : vector<128x32xf32>, vector<32x128xf32>, vector<128x128xf32> -> vector<128x128xf32>
      %104 = vector.broadcast %102 : vector<1x128xf32> to vector<128x128xf32>
      %105 = arith.addf %103, %104 : vector<128x128xf32>
      %cst_96 = arith.constant 0.000000e+00 : f32
      %106 = vector.broadcast %cst_96 : f32 to vector<128x128xf32>
      %107 = arith.maximumf %105, %106 : vector<128x128xf32>
      %c0_97 = arith.constant 0 : index
      %c0_98 = arith.constant 0 : index
      %108 = vector.load %arg19[%c0_97, %c0_98] : memref<128x128xf32, #tpu.memory_space<vmem>>, vector<128x128xf32>
      tpu.vector_store %arg19[%c0_97, %c0_98], %107 {strides = array<i32>} : memref<128x128xf32, #tpu.memory_space<vmem>>, vector<128x128xf32>,
    } else {
    }
    return
  }
  func.func @transform_0(%arg0: i32) -> (i32, i32) {
    %c0_i32 = arith.constant 0 : i32
    %c0_i32_0 = arith.constant 0 : i32
    %c0_i32_1 = arith.constant 0 : i32
    return %c0_i32, %c0_i32_0 : i32, i32
  }
  func.func @transform_1(%arg0: i32) -> (i32, i32) {
    %c0_i32 = arith.constant 0 : i32
    %c0_i32_0 = arith.constant 0 : i32
    %c0_i32_1 = arith.constant 0 : i32
    return %c0_i32, %c0_i32_0 : i32, i32
  }
  func.func @transform_2(%arg0: i32) -> (i32, i32) {
    %c0_i32 = arith.constant 0 : i32
    %c0_i32_0 = arith.constant 0 : i32
    return %arg0, %c0_i32 : i32, i32
  }
  func.func @transform_3(%arg0: i32) -> (i32, i32) {
    %c0_i32 = arith.constant 0 : i32
    %c0_i32_0 = arith.constant 0 : i32
    return %arg0, %c0_i32 : i32, i32
  }
  func.func @transform_4(%arg0: i32) -> (i32, i32) {
    %c0_i32 = arith.constant 0 : i32
    %c0_i32_0 = arith.constant 0 : i32
    return %c0_i32, %arg0 : i32, i32
  }
  func.func @transform_5(%arg0: i32) -> (i32, i32) {
    %c0_i32 = arith.constant 0 : i32
    %c0_i32_0 = arith.constant 0 : i32
    %c0_i32_1 = arith.constant 0 : i32
    return %c0_i32, %c0_i32_0 : i32, i32
  }
  func.func @transform_6(%arg0: i32) -> (i32, i32) {
    %c0_i32 = arith.constant 0 : i32
    %c0_i32_0 = arith.constant 0 : i32
    %c0_i32_1 = arith.constant 0 : i32
    return %c0_i32, %c0_i32_0 : i32, i32
  }
  func.func @transform_7(%arg0: i32) -> (i32, i32) {
    %c0_i32 = arith.constant 0 : i32
    %c0_i32_0 = arith.constant 0 : i32
    %c0_i32_1 = arith.constant 0 : i32
    return %c0_i32, %c0_i32_0 : i32, i32
  }
  func.func @transform_8(%arg0: i32) -> (i32, i32) {
    %c0_i32 = arith.constant 0 : i32
    %c0_i32_0 = arith.constant 0 : i32
    %c0_i32_1 = arith.constant 0 : i32
    return %c0_i32, %c0_i32_0 : i32, i32
  }
  func.func @transform_9(%arg0: i32) -> (i32, i32) {
    %c0_i32 = arith.constant 0 : i32
    %c0_i32_0 = arith.constant 0 : i32
    %c0_i32_1 = arith.constant 0 : i32
    return %c0_i32, %c0_i32_0 : i32, i32
  }
  func.func @transform_10(%arg0: i32) -> (i32, i32) {
    %c0_i32 = arith.constant 0 : i32
    %c0_i32_0 = arith.constant 0 : i32
    %c0_i32_1 = arith.constant 0 : i32
    return %c0_i32, %c0_i32_0 : i32, i32
  }
  func.func @transform_11(%arg0: i32) -> (i32, i32) {
    %c0_i32 = arith.constant 0 : i32
    %c0_i32_0 = arith.constant 0 : i32
    %c0_i32_1 = arith.constant 0 : i32
    return %c0_i32, %c0_i32_0 : i32, i32
  }
  func.func @transform_12(%arg0: i32) -> (i32, i32, i32, i32) {
    %c0_i32 = arith.constant 0 : i32
    %c0_i32_0 = arith.constant 0 : i32
    %c0_i32_1 = arith.constant 0 : i32
    %c0_i32_2 = arith.constant 0 : i32
    %c0_i32_3 = arith.constant 0 : i32
    return %c0_i32, %c0_i32_0, %c0_i32_1, %c0_i32_2 : i32, i32, i32, i32
  }
  func.func @transform_13(%arg0: i32) -> (i32, i32, i32, i32) {
    %c0_i32 = arith.constant 0 : i32
    %c0_i32_0 = arith.constant 0 : i32
    %c0_i32_1 = arith.constant 0 : i32
    %c0_i32_2 = arith.constant 0 : i32
    %c0_i32_3 = arith.constant 0 : i32
    return %c0_i32, %c0_i32_0, %c0_i32_1, %c0_i32_2 : i32, i32, i32, i32
  }
  func.func @transform_14(%arg0: i32) -> (i32, i32) {
    %c0_i32 = arith.constant 0 : i32
    %c0_i32_0 = arith.constant 0 : i32
    %c0_i32_1 = arith.constant 0 : i32
    return %c0_i32, %c0_i32_0 : i32, i32
  }
  func.func @transform_15(%arg0: i32) -> (i32, i32) {
    %c0_i32 = arith.constant 0 : i32
    %c0_i32_0 = arith.constant 0 : i32
    %c0_i32_1 = arith.constant 0 : i32
    return %c0_i32, %c0_i32_0 : i32, i32
  }
  func.func @transform_16(%arg0: i32) -> (i32, i32) {
    %c0_i32 = arith.constant 0 : i32
    %c0_i32_0 = arith.constant 0 : i32
    %c0_i32_1 = arith.constant 0 : i32
    return %c0_i32, %c0_i32_0 : i32, i32
  }
  func.func @transform_17(%arg0: i32) -> (i32, i32) {
    %c0_i32 = arith.constant 0 : i32
    %c0_i32_0 = arith.constant 0 : i32
    %c0_i32_1 = arith.constant 0 : i32
    return %c0_i32, %c0_i32_0 : i32, i32
  }
  func.func @transform_18(%arg0: i32) -> (i32, i32) {
    %c0_i32 = arith.constant 0 : i32
    %c0_i32_0 = arith.constant 0 : i32
    %c0_i32_1 = arith.constant 0 : i32
    return %c0_i32, %c0_i32_0 : i32, i32
  }
}

</mosaic_0001>

<llo_original>
// kernel: tpu_custom_call.1
$region0: #{tpu_custom_call.1}
  #allocation0 [shape = 'u32[]', space=smem, size = 0x4, offset = 0x4, fixed_abs, tag = 'smem constant byte address 0x4 - core index']
  #allocation1 [shape = 'u32[144,128]{1,0:T(1,128)}', space=vmem, size = 0x12000, scoped, tag = 'internal scratch']
  #allocation2 [shape = 'f32[128,32]{1,0:T(8,128)}', space=vmem, size = 0x10000, scoped, tag = 'scratch operand']
  #allocation3 [shape = 'bf16[128,256]{1,0:T(16,128)(2,1)}', space=vmem, size = 0x10000, scoped, tag = 'scratch operand']
  #allocation4 [shape = 'f32[128,32]{1,0:T(8,128)}', space=vmem, size = 0x10000, scoped, tag = 'scratch operand']
  %s0 = inlined_call_operand.vmem [shape: f32[128,32], index: 0, kind: input, shape index: {}]
  %s1 = inlined_call_operand.vmem [shape: f32[128,6], index: 1, kind: input, shape index: {}]
  %s2 = inlined_call_operand.vmem [shape: bf16[256,42], index: 2, kind: input, shape index: {}]
  %s3 = inlined_call_operand.vmem [shape: s32[256,1], index: 3, kind: input, shape index: {}]
  %s4 = inlined_call_operand.vmem [shape: s32[1,256], index: 4, kind: input, shape index: {}]
  %s5 = inlined_call_operand.vmem [shape: f32[6,256], index: 5, kind: input, shape index: {}]
  %s6 = inlined_call_operand.vmem [shape: bf16[42,256], index: 6, kind: input, shape index: {}]
  %s7 = inlined_call_operand.vmem [shape: f32[32,32], index: 7, kind: input, shape index: {}]
  %s8 = inlined_call_operand.vmem [shape: f32[1,32], index: 8, kind: input, shape index: {}]
  %s9 = inlined_call_operand.vmem [shape: f32[32,256], index: 9, kind: input, shape index: {}]
  %s10 = inlined_call_operand.vmem [shape: f32[1,256], index: 10, kind: input, shape index: {}]
  %s11 = inlined_call_operand.vmem [shape: bf16[256,32], index: 11, kind: input, shape index: {}]
  %s12 = inlined_call_operand.vmem [shape: f32[3,2,32,32], index: 12, kind: input, shape index: {}]
  %s13 = inlined_call_operand.vmem [shape: f32[3,2,1,32], index: 13, kind: input, shape index: {}]
  %s14 = inlined_call_operand.vmem [shape: f32[32,32], index: 14, kind: input, shape index: {}]
  %s15 = inlined_call_operand.vmem [shape: f32[1,32], index: 15, kind: input, shape index: {}]
  %s16 = inlined_call_operand.vmem [shape: f32[32,128], index: 16, kind: input, shape index: {}]
  %s17 = inlined_call_operand.vmem [shape: f32[1,128], index: 17, kind: input, shape index: {}]
  %s18 = inlined_call_operand.hbm [shape: f32[128,128], index: 18, kind: output, shape index: {}]
  %s19 = sld [smem:[#allocation0]]
  $region90: #{tpu_custom_call.1} parent=0
    _
  %s21 = ssub.s32 1, %s19
  %s22 = scalar_select 0, %s21, %s19
  $region1: #{tpu_custom_call.1} parent=0
    #allocation5 [shape = 'u8[65536]{0}', space=vmem, size = 0x10000, scoped, tag = 'output window, operand 0, single buffered']
    #allocation6 [shape = 's32[1]{0}', space=sflag, size = 0x4, scoped, tag = 'scoped memory for tpu_custom_call.1']
    %23 = vsyncpa [#allocation6], 0
    // Predicated region
    $region2: #{tpu_custom_call.1} parent=1 // pred_check
      _
    $region3: #{tpu_custom_call.1} parent=1 // pred_check_branch
      %25 = sbr.rel (0) target = $region5
    $region4: #{tpu_custom_call.1} parent=1 // pred_region
      _
    $region5: #{tpu_custom_call.1} parent=1 // pred_fallthru
      _
    // Predicated region
    $region6: #{tpu_custom_call.1} parent=1 // pred_check
      _
    $region7: #{tpu_custom_call.1} parent=1 // pred_check_branch
      %27 = sbr.rel (0) target = $region9
    $region8: #{tpu_custom_call.1} parent=1 // pred_region
      _
    $region9: #{tpu_custom_call.1} parent=1 // pred_fallthru
      _
    // Predicated region
    $region10: #{tpu_custom_call.1} parent=1 // pred_check
      _
    $region11: #{tpu_custom_call.1} parent=1 // pred_check_branch
      %29 = sbr.rel (0) target = $region13
    $region12: #{tpu_custom_call.1} parent=1 // pred_region
      _
    $region13: #{tpu_custom_call.1} parent=1 // pred_fallthru
      _
    // Predicated region
    $region14: #{tpu_custom_call.1} parent=1 // pred_check
      _
    $region15: #{tpu_custom_call.1} parent=1 // pred_check_branch
      %31 = sbr.rel (0) target = $region17
    $region16: #{tpu_custom_call.1} parent=1 // pred_region
      _
    $region17: #{tpu_custom_call.1} parent=1 // pred_fallthru
      _
    // Predicated region
    $region18: #{tpu_custom_call.1} parent=1 // pred_check
      _
    $region19: #{tpu_custom_call.1} parent=1 // pred_check_branch
      %33 = sbr.rel (0) target = $region21
    $region20: #{tpu_custom_call.1} parent=1 // pred_region
      _
    $region21: #{tpu_custom_call.1} parent=1 // pred_fallthru
      _
    // Predicated region
    $region22: #{tpu_custom_call.1} parent=1 // pred_check
      _
    $region23: #{tpu_custom_call.1} parent=1 // pred_check_branch
      %35 = sbr.rel (0) target = $region25
    $region24: #{tpu_custom_call.1} parent=1 // pred_region
      _
    $region25: #{tpu_custom_call.1} parent=1 // pred_fallthru
      _
    // Predicated region
    $region26: #{tpu_custom_call.1} parent=1 // pred_check
      _
    $region27: #{tpu_custom_call.1} parent=1 // pred_check_branch
      %37 = sbr.rel (0) target = $region29
    $region28: #{tpu_custom_call.1} parent=1 // pred_region
      _
    $region29: #{tpu_custom_call.1} parent=1 // pred_fallthru
      _
    // Predicated region
    $region30: #{tpu_custom_call.1} parent=1 // pred_check
      _
    $region31: #{tpu_custom_call.1} parent=1 // pred_check_branch
      %39 = sbr.rel (0) target = $region33
    $region32: #{tpu_custom_call.1} parent=1 // pred_region
      _
    $region33: #{tpu_custom_call.1} parent=1 // pred_fallthru
      _
    // Predicated region
    $region34: #{tpu_custom_call.1} parent=1 // pred_check
      _
    $region35: #{tpu_custom_call.1} parent=1 // pred_check_branch
      %41 = sbr.rel (0) target = $region37
    $region36: #{tpu_custom_call.1} parent=1 // pred_region
      _
    $region37: #{tpu_custom_call.1} parent=1 // pred_fallthru
      _
    // Predicated region
    $region38: #{tpu_custom_call.1} parent=1 // pred_check
      _
    $region39: #{tpu_custom_call.1} parent=1 // pred_check_branch
      %43 = sbr.rel (0) target = $region41
    $region40: #{tpu_custom_call.1} parent=1 // pred_region
      _
    $region41: #{tpu_custom_call.1} parent=1 // pred_fallthru
      _
    // Predicated region
    $region42: #{tpu_custom_call.1} parent=1 // pred_check
      _
    $region43: #{tpu_custom_call.1} parent=1 // pred_check_branch
      %45 = sbr.rel (0) target = $region45
    $region44: #{tpu_custom_call.1} parent=1 // pred_region
      _
    $region45: #{tpu_custom_call.1} parent=1 // pred_fallthru
      _
    // Predicated region
    $region46: #{tpu_custom_call.1} parent=1 // pred_check
      _
    $region47: #{tpu_custom_call.1} parent=1 // pred_check_branch
      %47 = sbr.rel (0) target = $region49
    $region48: #{tpu_custom_call.1} parent=1 // pred_region
      _
    $region49: #{tpu_custom_call.1} parent=1 // pred_fallthru
      _
    // Predicated region
    $region50: #{tpu_custom_call.1} parent=1 // pred_check
      _
    $region51: #{tpu_custom_call.1} parent=1 // pred_check_branch
      %49 = sbr.rel (0) target = $region53
    $region52: #{tpu_custom_call.1} parent=1 // pred_region
      _
    $region53: #{tpu_custom_call.1} parent=1 // pred_fallthru
      _
    // Predicated region
    $region54: #{tpu_custom_call.1} parent=1 // pred_check
      _
    $region55: #{tpu_custom_call.1} parent=1 // pred_check_branch
      %51 = sbr.rel (0) target = $region57
    $region56: #{tpu_custom_call.1} parent=1 // pred_region
      _
    $region57: #{tpu_custom_call.1} parent=1 // pred_fallthru
      _
    // Predicated region
    $region58: #{tpu_custom_call.1} parent=1 // pred_check
      _
    $region59: #{tpu_custom_call.1} parent=1 // pred_check_branch
      %53 = sbr.rel (0) target = $region61
    $region60: #{tpu_custom_call.1} parent=1 // pred_region
      _
    $region61: #{tpu_custom_call.1} parent=1 // pred_fallthru
      _
    // Predicated region
    $region62: #{tpu_custom_call.1} parent=1 // pred_check
      _
    $region63: #{tpu_custom_call.1} parent=1 // pred_check_branch
      %55 = sbr.rel (0) target = $region65
    $region64: #{tpu_custom_call.1} parent=1 // pred_region
      _
    $region65: #{tpu_custom_call.1} parent=1 // pred_fallthru
      _
    // Predicated region
    $region66: #{tpu_custom_call.1} parent=1 // pred_check
      _
    $region67: #{tpu_custom_call.1} parent=1 // pred_check_branch
      %57 = sbr.rel (0) target = $region69
    $region68: #{tpu_custom_call.1} parent=1 // pred_region
      _
    $region69: #{tpu_custom_call.1} parent=1 // pred_fallthru
      _
    // Predicated region
    $region70: #{tpu_custom_call.1} parent=1 // pred_check
      _
    $region71: #{tpu_custom_call.1} parent=1 // pred_check_branch
      %59 = sbr.rel (0) target = $region73
    $region72: #{tpu_custom_call.1} parent=1 // pred_region
      _
    $region73: #{tpu_custom_call.1} parent=1 // pred_fallthru
      _
    %p61 = scmp.eq.s32.totalorder 0, 0
    // Predicated region
    $region74: #{tpu_custom_call.1} parent=1 // pred_check
      %p62 = pneg %p61
    $region75: #{tpu_custom_call.1} parent=1 // pred_check_branch
      %64 = sbr.rel (%p62) target = $region77
    $region76: #{tpu_custom_call.1} parent=1 // pred_region
      %v65 = vld [vmem:[%s0] sm:$0xff]
      %v66 = vld [vmem:[%s0 + $0x8] sm:$0xff]
      %v67 = vld [vmem:[%s0 + $0x10] sm:$0xff]
      %v68 = vld [vmem:[%s0 + $0x18] sm:$0xff]
      %v69 = vld [vmem:[%s0 + $0x20] sm:$0xff]
      %v70 = vld [vmem:[%s0 + $0x28] sm:$0xff]
      %v71 = vld [vmem:[%s0 + $0x30] sm:$0xff]
      %v72 = vld [vmem:[%s0 + $0x38] sm:$0xff]
      %v73 = vld [vmem:[%s0 + $0x40] sm:$0xff]
      %v74 = vld [vmem:[%s0 + $0x48] sm:$0xff]
      %v75 = vld [vmem:[%s0 + $0x50] sm:$0xff]
      %v76 = vld [vmem:[%s0 + $0x58] sm:$0xff]
      %v77 = vld [vmem:[%s0 + $0x60] sm:$0xff]
      %v78 = vld [vmem:[%s0 + $0x68] sm:$0xff]
      %v79 = vld [vmem:[%s0 + $0x70] sm:$0xff]
      %v80 = vld [vmem:[%s0 + $0x78] sm:$0xff]
      %v81 = vld [vmem:[%s1] sm:$0xff]
      %v82 = vld [vmem:[%s1 + $0x8] sm:$0xff]
      %v83 = vld [vmem:[%s1 + $0x10] sm:$0xff]
      %v84 = vld [vmem:[%s1 + $0x18] sm:$0xff]
      %v85 = vld [vmem:[%s1 + $0x20] sm:$0xff]
      %v86 = vld [vmem:[%s1 + $0x28] sm:$0xff]
      %v87 = vld [vmem:[%s1 + $0x30] sm:$0xff]
      %v88 = vld [vmem:[%s1 + $0x38] sm:$0xff]
      %v89 = vld [vmem:[%s1 + $0x40] sm:$0xff]
      %v90 = vld [vmem:[%s1 + $0x48] sm:$0xff]
      %v91 = vld [vmem:[%s1 + $0x50] sm:$0xff]
      %v92 = vld [vmem:[%s1 + $0x58] sm:$0xff]
      %v93 = vld [vmem:[%s1 + $0x60] sm:$0xff]
      %v94 = vld [vmem:[%s1 + $0x68] sm:$0xff]
      %v95 = vld [vmem:[%s1 + $0x70] sm:$0xff]
      %v96 = vld [vmem:[%s1 + $0x78] sm:$0xff]
      %v97 = vld [vmem:[%s5] sm:$0x3f]
      %v98 = vld [vmem:[%s5 + $0x8] sm:$0x3f]
      %vm99 = vcmask 48128
      %v101 = vsel %vm99, %v81, 0
      %v104 = vsel %vm99, %v82, 0
      %v107 = vsel %vm99, %v83, 0
      %v110 = vsel %vm99, %v84, 0
      %v113 = vsel %vm99, %v85, 0
      %v116 = vsel %vm99, %v86, 0
      %v119 = vsel %vm99, %v87, 0
      %v122 = vsel %vm99, %v88, 0
      %v125 = vsel %vm99, %v89, 0
      %v128 = vsel %vm99, %v90, 0
      %v131 = vsel %vm99, %v91, 0
      %v134 = vsel %vm99, %v92, 0
      %v137 = vsel %vm99, %v93, 0
      %v140 = vsel %vm99, %v94, 0
      %v143 = vsel %vm99, %v95, 0
      %v146 = vsel %vm99, %v96, 0
      %vm148 = vcmask 1045504
      %v150 = vsel %vm148, %v97, 0
      %v153 = vsel %vm148, %v98, 0
      %155 = vmatprep.subr.mxu0 %v153
      %156 = vmatpush1.msra.mxu0 %v150
      %157 = vmatprep.subr.mxu0 0.0
      %158 = vmatpush1.msra.mxu0 0.0
      %159 = vmatprep.subr.mxu0 0.0
      %160 = vmatpush1.msra.mxu0 0.0
      %161 = vmatprep.subr.mxu0 0.0
      %162 = vmatpush1.msra.mxu0 0.0
      %163 = vmatprep.subr.mxu0 0.0
      %164 = vmatpush1.msra.mxu0 0.0
      %165 = vmatprep.subr.mxu0 0.0
      %166 = vmatpush1.msra.mxu0 0.0
      %167 = vmatprep.subr.mxu0 0.0
      %168 = vmatpush1.msra.mxu0 0.0
      %169 = vmatprep.subr.mxu0 0.0
      %170 = vmatpush1.msra.mxu0 0.0
      %171 = vmatprep.subr.mxu0 0.0
      %172 = vmatpush1.msra.mxu0 0.0
      %173 = vmatprep.subr.mxu0 0.0
      %174 = vmatpush1.msra.mxu0 0.0
      %175 = vmatprep.subr.mxu0 0.0
      %176 = vmatpush1.msra.mxu0 0.0
      %177 = vmatprep.subr.mxu0 0.0
      %178 = vmatpush1.msra.mxu0 0.0
      %179 = vmatprep.subr.mxu0 0.0
      %180 = vmatpush1.msra.mxu0 0.0
      %181 = vmatprep.subr.mxu0 0.0
      %182 = vmatpush1.msra.mxu0 0.0
      %183 = vmatprep.subr.mxu0 0.0
      %184 = vmatpush1.msra.mxu0 0.0
      %185 = vmatprep.subr.mxu0 0.0
      %186 = vmatpush1.msra.mxu0 0.0
      %187 = vmatprep.subr.mxu0 0.0
      %188 = vmatpush1.msra.mxu0 0.0
      %189 = vmatprep.subr.mxu0 0.0
      %190 = vmatpush1.msra.mxu0 0.0
      %191 = vmatprep.subr.mxu0 0.0
      %192 = vmatpush1.msra.mxu0 0.0
      %193 = vmatprep.subr.mxu0 0.0
      %194 = vmatpush1.msra.mxu0 0.0
      %195 = vmatprep.subr.mxu0 0.0
      %196 = vmatpush1.msra.mxu0 0.0
      %197 = vmatprep.subr.mxu0 0.0
      %198 = vmatpush1.msra.mxu0 0.0
      %199 = vmatprep.subr.mxu0 0.0
      %200 = vmatpush1.msra.mxu0 0.0
      %201 = vmatprep.subr.mxu0 0.0
      %202 = vmatpush1.msra.mxu0 0.0
      %203 = vmatprep.subr.mxu0 0.0
      %204 = vmatpush1.msra.mxu0 0.0
      %205 = vmatprep.subr.mxu0 0.0
      %206 = vmatpush1.msra.mxu0 0.0
      %207 = vmatprep.subr.mxu0 0.0
      %208 = vmatpush1.msra.mxu0 0.0
      %209 = vmatprep.subr.mxu0 0.0
      %210 = vmatpush1.msra.mxu0 0.0
      %211 = vmatprep.subr.mxu0 0.0
      %212 = vmatpush1.msra.mxu0 0.0
      %213 = vmatprep.subr.mxu0 0.0
      %214 = vmatpush1.msra.mxu0 0.0
      %215 = vmatprep.subr.mxu0 0.0
      %216 = vmatpush1.msra.mxu0 0.0
      %217 = vmatprep.subr.mxu0 0.0
      %218 = vmatpush1.msra.mxu0 0.0
      %219 = vmatprep.mubr.f32.mxu0 0.0
      %220 = vmatmul.mubr.f32.gmra.mrb[0].mxu0 %v101
      %v221 = vpop.f32.mrb[0].mxu0
      %v222 = vadd.f32 0.0, %v221
      %v223 = vpop.f32.mrb[0].mxu0
      %v224 = vadd.f32 0.0, %v223
      %225 = vmatprep.mubr.f32.mxu0 0.0
      %226 = vmatmul.mubr.f32.gmra.mrb[0].mxu0 %v104
      %v227 = vpop.f32.mrb[0].mxu0
      %v228 = vadd.f32 0.0, %v227
      %v229 = vpop.f32.mrb[0].mxu0
      %v230 = vadd.f32 0.0, %v229
      %231 = vmatprep.mubr.f32.mxu0 0.0
      %232 = vmatmul.mubr.f32.gmra.mrb[0].mxu0 %v107
      %v233 = vpop.f32.mrb[0].mxu0
      %v234 = vadd.f32 0.0, %v233
      %v235 = vpop.f32.mrb[0].mxu0
      %v236 = vadd.f32 0.0, %v235
      %237 = vmatprep.mubr.f32.mxu0 0.0
      %238 = vmatmul.mubr.f32.gmra.mrb[0].mxu0 %v110
      %v239 = vpop.f32.mrb[0].mxu0
      %v240 = vadd.f32 0.0, %v239
      %v241 = vpop.f32.mrb[0].mxu0
      %v242 = vadd.f32 0.0, %v241
      %243 = vmatprep.mubr.f32.mxu0 0.0
      %244 = vmatmul.mubr.f32.gmra.mrb[0].mxu0 %v113
      %v245 = vpop.f32.mrb[0].mxu0
      %v246 = vadd.f32 0.0, %v245
      %v247 = vpop.f32.mrb[0].mxu0
      %v248 = vadd.f32 0.0, %v247
      %249 = vmatprep.mubr.f32.mxu0 0.0
      %250 = vmatmul.mubr.f32.gmra.mrb[0].mxu0 %v116
      %v251 = vpop.f32.mrb[0].mxu0
      %v252 = vadd.f32 0.0, %v251
      %v253 = vpop.f32.mrb[0].mxu0
      %v254 = vadd.f32 0.0, %v253
      %255 = vmatprep.mubr.f32.mxu0 0.0
      %256 = vmatmul.mubr.f32.gmra.mrb[0].mxu0 %v119
      %v257 = vpop.f32.mrb[0].mxu0
      %v258 = vadd.f32 0.0, %v257
      %v259 = vpop.f32.mrb[0].mxu0
      %v260 = vadd.f32 0.0, %v259
      %261 = vmatprep.mubr.f32.mxu0 0.0
      %262 = vmatmul.mubr.f32.gmra.mrb[0].mxu0 %v122
      %v263 = vpop.f32.mrb[0].mxu0
      %v264 = vadd.f32 0.0, %v263
      %v265 = vpop.f32.mrb[0].mxu0
      %v266 = vadd.f32 0.0, %v265
      %267 = vmatprep.mubr.f32.mxu0 0.0
      %268 = vmatmul.mubr.f32.gmra.mrb[0].mxu0 %v125
      %v269 = vpop.f32.mrb[0].mxu0
      %v270 = vadd.f32 0.0, %v269
      %v271 = vpop.f32.mrb[0].mxu0
      %v272 = vadd.f32 0.0, %v271
      %273 = vmatprep.mubr.f32.mxu0 0.0
      %274 = vmatmul.mubr.f32.gmra.mrb[0].mxu0 %v128
      %v275 = vpop.f32.mrb[0].mxu0
      %v276 = vadd.f32 0.0, %v275
      %v277 = vpop.f32.mrb[0].mxu0
      %v278 = vadd.f32 0.0, %v277
      %279 = vmatprep.mubr.f32.mxu0 0.0
      %280 = vmatmul.mubr.f32.gmra.mrb[0].mxu0 %v131
      %v281 = vpop.f32.mrb[0].mxu0
      %v282 = vadd.f32 0.0, %v281
      %v283 = vpop.f32.mrb[0].mxu0
      %v284 = vadd.f32 0.0, %v283
      %285 = vmatprep.mubr.f32.mxu0 0.0
      %286 = vmatmul.mubr.f32.gmra.mrb[0].mxu0 %v134
      %v287 = vpop.f32.mrb[0].mxu0
      %v288 = vadd.f32 0.0, %v287
      %v289 = vpop.f32.mrb[0].mxu0
      %v290 = vadd.f32 0.0, %v289
      %291 = vmatprep.mubr.f32.mxu0 0.0
      %292 = vmatmul.mubr.f32.gmra.mrb[0].mxu0 %v137
      %v293 = vpop.f32.mrb[0].mxu0
      %v294 = vadd.f32 0.0, %v293
      %v295 = vpop.f32.mrb[0].mxu0
      %v296 = vadd.f32 0.0, %v295
      %297 = vmatprep.mubr.f32.mxu0 0.0
      %298 = vmatmul.mubr.f32.gmra.mrb[0].mxu0 %v140
      %v299 = vpop.f32.mrb[0].mxu0
      %v300 = vadd.f32 0.0, %v299
      %v301 = vpop.f32.mrb[0].mxu0
      %v302 = vadd.f32 0.0, %v301
      %303 = vmatprep.mubr.f32.mxu0 0.0
      %304 = vmatmul.mubr.f32.gmra.mrb[0].mxu0 %v143
      %v305 = vpop.f32.mrb[0].mxu0
      %v306 = vadd.f32 0.0, %v305
      %v307 = vpop.f32.mrb[0].mxu0
      %v308 = vadd.f32 0.0, %v307
      %309 = vmatprep.mubr.f32.mxu0 0.0
      %310 = vmatmul.mubr.f32.gmra.mrb[0].mxu0 %v146
      %v311 = vpop.f32.mrb[0].mxu0
      %v312 = vadd.f32 0.0, %v311
      %v313 = vpop.f32.mrb[0].mxu0
      %v314 = vadd.f32 0.0, %v313
      %315 = vdwg.mxu0
      %v316 = vld [vmem:[%s7] sm:$0xff]
      %v317 = vld [vmem:[%s7 + $0x8] sm:$0xff]
      %v318 = vld [vmem:[%s7 + $0x10] sm:$0xff]
      %v319 = vld [vmem:[%s7 + $0x18] sm:$0xff]
      %v320 = vld [vmem:[%s8] sm:$0x1]
      %v322 = vlaneseq
      %v323 = vshrl.u32 %v322, 7
      %v324 = vsub.s32 0, %v323
      %v325 = vrot.slane %v320, %v324
      %vm327 = vcmask 261120
      %v329 = vsel %vm327, %v65, 0
      %v332 = vsel %vm327, %v66, 0
      %v335 = vsel %vm327, %v67, 0
      %v338 = vsel %vm327, %v68, 0
      %v341 = vsel %vm327, %v69, 0
      %v344 = vsel %vm327, %v70, 0
      %v347 = vsel %vm327, %v71, 0
      %v350 = vsel %vm327, %v72, 0
      %v353 = vsel %vm327, %v73, 0
      %v356 = vsel %vm327, %v74, 0
      %v359 = vsel %vm327, %v75, 0
      %v362 = vsel %vm327, %v76, 0
      %v365 = vsel %vm327, %v77, 0
      %v368 = vsel %vm327, %v78, 0
      %v371 = vsel %vm327, %v79, 0
      %v374 = vsel %vm327, %v80, 0
      %376 = vmatprep.subr.mxu0 0.0
      %377 = vmatpush1.msra.mxu0 %v316
      %378 = vmatprep.subr.mxu0 0.0
      %379 = vmatpush1.msra.mxu0 %v317
      %380 = vmatprep.subr.mxu0 0.0
      %381 = vmatpush1.msra.mxu0 %v318
      %382 = vmatprep.subr.mxu0 0.0
      %383 = vmatpush1.msra.mxu0 %v319
      %384 = vmatprep.subr.mxu0 0.0
      %385 = vmatpush1.msra.mxu0 0.0
      %386 = vmatprep.subr.mxu0 0.0
      %387 = vmatpush1.msra.mxu0 0.0
      %388 = vmatprep.subr.mxu0 0.0
      %389 = vmatpush1.msra.mxu0 0.0
      %390 = vmatprep.subr.mxu0 0.0
      %391 = vmatpush1.msra.mxu0 0.0
      %392 = vmatprep.subr.mxu0 0.0
      %393 = vmatpush1.msra.mxu0 0.0
      %394 = vmatprep.subr.mxu0 0.0
      %395 = vmatpush1.msra.mxu0 0.0
      %396 = vmatprep.subr.mxu0 0.0
      %397 = vmatpush1.msra.mxu0 0.0
      %398 = vmatprep.subr.mxu0 0.0
      %399 = vmatpush1.msra.mxu0 0.0
      %400 = vmatprep.subr.mxu0 0.0
      %401 = vmatpush1.msra.mxu0 0.0
      %402 = vmatprep.subr.mxu0 0.0
      %403 = vmatpush1.msra.mxu0 0.0
      %404 = vmatprep.subr.mxu0 0.0
      %405 = vmatpush1.msra.mxu0 0.0
      %406 = vmatprep.subr.mxu0 0.0
      %407 = vmatpush1.msra.mxu0 0.0
      %408 = vmatprep.subr.mxu0 0.0
      %409 = vmatpush1.msra.mxu0 0.0
      %410 = vmatprep.subr.mxu0 0.0
      %411 = vmatpush1.msra.mxu0 0.0
      %412 = vmatprep.subr.mxu0 0.0
      %413 = vmatpush1.msra.mxu0 0.0
      %414 = vmatprep.subr.mxu0 0.0
      %415 = vmatpush1.msra.mxu0 0.0
      %416 = vmatprep.subr.mxu0 0.0
      %417 = vmatpush1.msra.mxu0 0.0
      %418 = vmatprep.subr.mxu0 0.0
      %419 = vmatpush1.msra.mxu0 0.0
      %420 = vmatprep.subr.mxu0 0.0
      %421 = vmatpush1.msra.mxu0 0.0
      %422 = vmatprep.subr.mxu0 0.0
      %423 = vmatpush1.msra.mxu0 0.0
      %424 = vmatprep.subr.mxu0 0.0
      %425 = vmatpush1.msra.mxu0 0.0
      %426 = vmatprep.subr.mxu0 0.0
      %427 = vmatpush1.msra.mxu0 0.0
      %428 = vmatprep.subr.mxu0 0.0
      %429 = vmatpush1.msra.mxu0 0.0
      %430 = vmatprep.subr.mxu0 0.0
      %431 = vmatpush1.msra.mxu0 0.0
      %432 = vmatprep.subr.mxu0 0.0
      %433 = vmatpush1.msra.mxu0 0.0
      %434 = vmatprep.subr.mxu0 0.0
      %435 = vmatpush1.msra.mxu0 0.0
      %436 = vmatprep.subr.mxu0 0.0
      %437 = vmatpush1.msra.mxu0 0.0
      %438 = vmatprep.subr.mxu0 0.0
      %439 = vmatpush1.msra.mxu0 0.0
      %440 = vmatprep.mubr.f32.mxu0 0.0
      %441 = vmatmul.mubr.f32.gmra.mrb[0].mxu0 %v329
      %v442 = vpop.f32.mrb[0].mxu0
      %v443 = vadd.f32 %v325, %v442
      %v444 = vpop.f32.mrb[0].mxu0
      %445 = vmatprep.mubr.f32.mxu0 0.0
      %446 = vmatmul.mubr.f32.gmra.mrb[0].mxu0 %v332
      %v447 = vpop.f32.mrb[0].mxu0
      %v448 = vadd.f32 %v325, %v447
      %v449 = vpop.f32.mrb[0].mxu0
      %450 = vmatprep.mubr.f32.mxu0 0.0
      %451 = vmatmul.mubr.f32.gmra.mrb[0].mxu0 %v335
      %v452 = vpop.f32.mrb[0].mxu0
      %v453 = vadd.f32 %v325, %v452
      %v454 = vpop.f32.mrb[0].mxu0
      %455 = vmatprep.mubr.f32.mxu0 0.0
      %456 = vmatmul.mubr.f32.gmra.mrb[0].mxu0 %v338
      %v457 = vpop.f32.mrb[0].mxu0
      %v458 = vadd.f32 %v325, %v457
      %v459 = vpop.f32.mrb[0].mxu0
      %460 = vmatprep.mubr.f32.mxu0 0.0
      %461 = vmatmul.mubr.f32.gmra.mrb[0].mxu0 %v341
      %v462 = vpop.f32.mrb[0].mxu0
      %v463 = vadd.f32 %v325, %v462
      %v464 = vpop.f32.mrb[0].mxu0
      %465 = vmatprep.mubr.f32.mxu0 0.0
      %466 = vmatmul.mubr.f32.gmra.mrb[0].mxu0 %v344
      %v467 = vpop.f32.mrb[0].mxu0
      %v468 = vadd.f32 %v325, %v467
      %v469 = vpop.f32.mrb[0].mxu0
      %470 = vmatprep.mubr.f32.mxu0 0.0
      %471 = vmatmul.mubr.f32.gmra.mrb[0].mxu0 %v347
      %v472 = vpop.f32.mrb[0].mxu0
      %v473 = vadd.f32 %v325, %v472
      %v474 = vpop.f32.mrb[0].mxu0
      %475 = vmatprep.mubr.f32.mxu0 0.0
      %476 = vmatmul.mubr.f32.gmra.mrb[0].mxu0 %v350
      %v477 = vpop.f32.mrb[0].mxu0
      %v478 = vadd.f32 %v325, %v477
      %v479 = vpop.f32.mrb[0].mxu0
      %480 = vmatprep.mubr.f32.mxu0 0.0
      %481 = vmatmul.mubr.f32.gmra.mrb[0].mxu0 %v353
      %v482 = vpop.f32.mrb[0].mxu0
      %v483 = vadd.f32 %v325, %v482
      %v484 = vpop.f32.mrb[0].mxu0
      %485 = vmatprep.mubr.f32.mxu0 0.0
      %486 = vmatmul.mubr.f32.gmra.mrb[0].mxu0 %v356
      %v487 = vpop.f32.mrb[0].mxu0
      %v488 = vadd.f32 %v325, %v487
      %v489 = vpop.f32.mrb[0].mxu0
      %490 = vmatprep.mubr.f32.mxu0 0.0
      %491 = vmatmul.mubr.f32.gmra.mrb[0].mxu0 %v359
      %v492 = vpop.f32.mrb[0].mxu0
      %v493 = vadd.f32 %v325, %v492
      %v494 = vpop.f32.mrb[0].mxu0
      %495 = vmatprep.mubr.f32.mxu0 0.0
      %496 = vmatmul.mubr.f32.gmra.mrb[0].mxu0 %v362
      %v497 = vpop.f32.mrb[0].mxu0
      %v498 = vadd.f32 %v325, %v497
      %v499 = vpop.f32.mrb[0].mxu0
      %500 = vmatprep.mubr.f32.mxu0 0.0
      %501 = vmatmul.mubr.f32.gmra.mrb[0].mxu0 %v365
      %v502 = vpop.f32.mrb[0].mxu0
      %v503 = vadd.f32 %v325, %v502
      %v504 = vpop.f32.mrb[0].mxu0
      %505 = vmatprep.mubr.f32.mxu0 0.0
      %506 = vmatmul.mubr.f32.gmra.mrb[0].mxu0 %v368
      %v507 = vpop.f32.mrb[0].mxu0
      %v508 = vadd.f32 %v325, %v507
      %v509 = vpop.f32.mrb[0].mxu0
      %510 = vmatprep.mubr.f32.mxu0 0.0
      %511 = vmatmul.mubr.f32.gmra.mrb[0].mxu0 %v371
      %v512 = vpop.f32.mrb[0].mxu0
      %v513 = vadd.f32 %v325, %v512
      %v514 = vpop.f32.mrb[0].mxu0
      %515 = vmatprep.mubr.f32.mxu0 0.0
      %516 = vmatmul.mubr.f32.gmra.mrb[0].mxu0 %v374
      %v517 = vpop.f32.mrb[0].mxu0
      %v518 = vadd.f32 %v325, %v517
      %v519 = vpop.f32.mrb[0].mxu0
      %520 = vdwg.mxu0
      %v521 = vmax.f32 %v443, 0.0
      %v522 = vmax.f32 %v448, 0.0
      %v523 = vmax.f32 %v453, 0.0
      %v524 = vmax.f32 %v458, 0.0
      %v525 = vmax.f32 %v463, 0.0
      %v526 = vmax.f32 %v468, 0.0
      %v527 = vmax.f32 %v473, 0.0
      %v528 = vmax.f32 %v478, 0.0
      %v529 = vmax.f32 %v483, 0.0
      %v530 = vmax.f32 %v488, 0.0
      %v531 = vmax.f32 %v493, 0.0
      %v532 = vmax.f32 %v498, 0.0
      %v533 = vmax.f32 %v503, 0.0
      %v534 = vmax.f32 %v508, 0.0
      %v535 = vmax.f32 %v513, 0.0
      %v536 = vmax.f32 %v518, 0.0
      %537 = vst.msk [vmem:[#allocation2] sm:$0xff] %vm327, %v521
      %538 = vst.msk [vmem:[#allocation2 + $0x8] sm:$0xff] %vm327, %v522
      %539 = vst.msk [vmem:[#allocation2 + $0x10] sm:$0xff] %vm327, %v523
      %540 = vst.msk [vmem:[#allocation2 + $0x18] sm:$0xff] %vm327, %v524
      %541 = vst.msk [vmem:[#allocation2 + $0x20] sm:$0xff] %vm327, %v525
      %542 = vst.msk [vmem:[#allocation2 + $0x28] sm:$0xff] %vm327, %v526
      %543 = vst.msk [vmem:[#allocation2 + $0x30] sm:$0xff] %vm327, %v527
      %544 = vst.msk [vmem:[#allocation2 + $0x38] sm:$0xff] %vm327, %v528
      %545 = vst.msk [vmem:[#allocation2 + $0x40] sm:$0xff] %vm327, %v529
      %546 = vst.msk [vmem:[#allocation2 + $0x48] sm:$0xff] %vm327, %v530
      %547 = vst.msk [vmem:[#allocation2 + $0x50] sm:$0xff] %vm327, %v531
      %548 = vst.msk [vmem:[#allocation2 + $0x58] sm:$0xff] %vm327, %v532
      %549 = vst.msk [vmem:[#allocation2 + $0x60] sm:$0xff] %vm327, %v533
      %550 = vst.msk [vmem:[#allocation2 + $0x68] sm:$0xff] %vm327, %v534
      %551 = vst.msk [vmem:[#allocation2 + $0x70] sm:$0xff] %vm327, %v535
      %552 = vst.msk [vmem:[#allocation2 + $0x78] sm:$0xff] %vm327, %v536
      %v553 = vld [vmem:[%s9] sm:$0xff]
      %v554 = vld [vmem:[%s9 + $0x8] sm:$0xff]
      %v555 = vld [vmem:[%s9 + $0x10] sm:$0xff]
      %v556 = vld [vmem:[%s9 + $0x18] sm:$0xff]
      %v557 = vld [vmem:[%s9 + $0x20] sm:$0xff]
      %v558 = vld [vmem:[%s9 + $0x28] sm:$0xff]
      %v559 = vld [vmem:[%s9 + $0x30] sm:$0xff]
      %v560 = vld [vmem:[%s9 + $0x38] sm:$0xff]
      %v561 = vld [vmem:[%s10] sm:$0x3]
      %v563 = vlaneseq
      %v564 = vshrl.u32 %v563, 7
      %v565 = vsub.s32 0, %v564
      %v566 = vrot.slane %v561, %v565
      %v567 = vlaneseq
      %v568 = vshrl.u32 %v567, 7
      %v569 = vsub.s32 1, %v568
      %v570 = vrot.slane %v561, %v569
      %573 = vmatprep.subr.mxu0 %v554
      %574 = vmatpush1.msra.mxu0 %v553
      %575 = vmatprep.subr.mxu0 %v556
      %576 = vmatpush1.msra.mxu0 %v555
      %577 = vmatprep.subr.mxu0 %v558
      %578 = vmatpush1.msra.mxu0 %v557
      %579 = vmatprep.subr.mxu0 %v560
      %580 = vmatpush1.msra.mxu0 %v559
      %581 = vmatprep.subr.mxu0 0.0
      %582 = vmatpush1.msra.mxu0 0.0
      %583 = vmatprep.subr.mxu0 0.0
      %584 = vmatpush1.msra.mxu0 0.0
      %585 = vmatprep.subr.mxu0 0.0
      %586 = vmatpush1.msra.mxu0 0.0
      %587 = vmatprep.subr.mxu0 0.0
      %588 = vmatpush1.msra.mxu0 0.0
      %589 = vmatprep.subr.mxu0 0.0
      %590 = vmatpush1.msra.mxu0 0.0
      %591 = vmatprep.subr.mxu0 0.0
      %592 = vmatpush1.msra.mxu0 0.0
      %593 = vmatprep.subr.mxu0 0.0
      %594 = vmatpush1.msra.mxu0 0.0
      %595 = vmatprep.subr.mxu0 0.0
      %596 = vmatpush1.msra.mxu0 0.0
      %597 = vmatprep.subr.mxu0 0.0
      %598 = vmatpush1.msra.mxu0 0.0
      %599 = vmatprep.subr.mxu0 0.0
      %600 = vmatpush1.msra.mxu0 0.0
      %601 = vmatprep.subr.mxu0 0.0
      %602 = vmatpush1.msra.mxu0 0.0
      %603 = vmatprep.subr.mxu0 0.0
      %604 = vmatpush1.msra.mxu0 0.0
      %605 = vmatprep.subr.mxu0 0.0
      %606 = vmatpush1.msra.mxu0 0.0
      %607 = vmatprep.subr.mxu0 0.0
      %608 = vmatpush1.msra.mxu0 0.0
      %609 = vmatprep.subr.mxu0 0.0
      %610 = vmatpush1.msra.mxu0 0.0
      %611 = vmatprep.subr.mxu0 0.0
      %612 = vmatpush1.msra.mxu0 0.0
      %613 = vmatprep.subr.mxu0 0.0
      %614 = vmatpush1.msra.mxu0 0.0
      %615 = vmatprep.subr.mxu0 0.0
      %616 = vmatpush1.msra.mxu0 0.0
      %617 = vmatprep.subr.mxu0 0.0
      %618 = vmatpush1.msra.mxu0 0.0
      %619 = vmatprep.subr.mxu0 0.0
      %620 = vmatpush1.msra.mxu0 0.0
      %621 = vmatprep.subr.mxu0 0.0
      %622 = vmatpush1.msra.mxu0 0.0
      %623 = vmatprep.subr.mxu0 0.0
      %624 = vmatpush1.msra.mxu0 0.0
      %625 = vmatprep.subr.mxu0 0.0
      %626 = vmatpush1.msra.mxu0 0.0
      %627 = vmatprep.subr.mxu0 0.0
      %628 = vmatpush1.msra.mxu0 0.0
      %629 = vmatprep.subr.mxu0 0.0
      %630 = vmatpush1.msra.mxu0 0.0
      %631 = vmatprep.subr.mxu0 0.0
      %632 = vmatpush1.msra.mxu0 0.0
      %633 = vmatprep.subr.mxu0 0.0
      %634 = vmatpush1.msra.mxu0 0.0
      %635 = vmatprep.subr.mxu0 0.0
      %636 = vmatpush1.msra.mxu0 0.0
      %637 = vmatprep.mubr.f32.mxu0 0.0
      %638 = vmatmul.mubr.f32.gmra.mrb[0].mxu0 %v329
      %v639 = vpop.f32.mrb[0].mxu0
      %v640 = vadd.f32 %v566, %v639
      %v641 = vpop.f32.mrb[0].mxu0
      %v642 = vadd.f32 %v570, %v641
      %643 = vmatprep.mubr.f32.mxu0 0.0
      %644 = vmatmul.mubr.f32.gmra.mrb[0].mxu0 %v332
      %v645 = vpop.f32.mrb[0].mxu0
      %v646 = vadd.f32 %v566, %v645
      %v647 = vpop.f32.mrb[0].mxu0
      %v648 = vadd.f32 %v570, %v647
      %649 = vmatprep.mubr.f32.mxu0 0.0
      %650 = vmatmul.mubr.f32.gmra.mrb[0].mxu0 %v335
      %v651 = vpop.f32.mrb[0].mxu0
      %v652 = vadd.f32 %v566, %v651
      %v653 = vpop.f32.mrb[0].mxu0
      %v654 = vadd.f32 %v570, %v653
      %655 = vmatprep.mubr.f32.mxu0 0.0
      %656 = vmatmul.mubr.f32.gmra.mrb[0].mxu0 %v338
      %v657 = vpop.f32.mrb[0].mxu0
      %v658 = vadd.f32 %v566, %v657
      %v659 = vpop.f32.mrb[0].mxu0
      %v660 = vadd.f32 %v570, %v659
      %661 = vmatprep.mubr.f32.mxu0 0.0
      %662 = vmatmul.mubr.f32.gmra.mrb[0].mxu0 %v341
      %v663 = vpop.f32.mrb[0].mxu0
      %v664 = vadd.f32 %v566, %v663
      %v665 = vpop.f32.mrb[0].mxu0
      %v666 = vadd.f32 %v570, %v665
      %667 = vmatprep.mubr.f32.mxu0 0.0
      %668 = vmatmul.mubr.f32.gmra.mrb[0].mxu0 %v344
      %v669 = vpop.f32.mrb[0].mxu0
      %v670 = vadd.f32 %v566, %v669
      %v671 = vpop.f32.mrb[0].mxu0
      %v672 = vadd.f32 %v570, %v671
      %673 = vmatprep.mubr.f32.mxu0 0.0
      %674 = vmatmul.mubr.f32.gmra.mrb[0].mxu0 %v347
      %v675 = vpop.f32.mrb[0].mxu0
      %v676 = vadd.f32 %v566, %v675
      %v677 = vpop.f32.mrb[0].mxu0
      %v678 = vadd.f32 %v570, %v677
      %679 = vmatprep.mubr.f32.mxu0 0.0
      %680 = vmatmul.mubr.f32.gmra.mrb[0].mxu0 %v350
      %v681 = vpop.f32.mrb[0].mxu0
      %v682 = vadd.f32 %v566, %v681
      %v683 = vpop.f32.mrb[0].mxu0
      %v684 = vadd.f32 %v570, %v683
      %685 = vmatprep.mubr.f32.mxu0 0.0
      %686 = vmatmul.mubr.f32.gmra.mrb[0].mxu0 %v353
      %v687 = vpop.f32.mrb[0].mxu0
      %v688 = vadd.f32 %v566, %v687
      %v689 = vpop.f32.mrb[0].mxu0
      %v690 = vadd.f32 %v570, %v689
      %691 = vmatprep.mubr.f32.mxu0 0.0
      %692 = vmatmul.mubr.f32.gmra.mrb[0].mxu0 %v356
      %v693 = vpop.f32.mrb[0].mxu0
      %v694 = vadd.f32 %v566, %v693
      %v695 = vpop.f32.mrb[0].mxu0
      %v696 = vadd.f32 %v570, %v695
      %697 = vmatprep.mubr.f32.mxu0 0.0
      %698 = vmatmul.mubr.f32.gmra.mrb[0].mxu0 %v359
      %v699 = vpop.f32.mrb[0].mxu0
      %v700 = vadd.f32 %v566, %v699
      %v701 = vpop.f32.mrb[0].mxu0
      %v702 = vadd.f32 %v570, %v701
      %703 = vmatprep.mubr.f32.mxu0 0.0
      %704 = vmatmul.mubr.f32.gmra.mrb[0].mxu0 %v362
      %v705 = vpop.f32.mrb[0].mxu0
      %v706 = vadd.f32 %v566, %v705
      %v707 = vpop.f32.mrb[0].mxu0
      %v708 = vadd.f32 %v570, %v707
      %709 = vmatprep.mubr.f32.mxu0 0.0
      %710 = vmatmul.mubr.f32.gmra.mrb[0].mxu0 %v365
      %v711 = vpop.f32.mrb[0].mxu0
      %v712 = vadd.f32 %v566, %v711
      %v713 = vpop.f32.mrb[0].mxu0
      %v714 = vadd.f32 %v570, %v713
      %715 = vmatprep.mubr.f32.mxu0 0.0
      %716 = vmatmul.mubr.f32.gmra.mrb[0].mxu0 %v368
      %v717 = vpop.f32.mrb[0].mxu0
      %v718 = vadd.f32 %v566, %v717
      %v719 = vpop.f32.mrb[0].mxu0
      %v720 = vadd.f32 %v570, %v719
      %721 = vmatprep.mubr.f32.mxu0 0.0
      %722 = vmatmul.mubr.f32.gmra.mrb[0].mxu0 %v371
      %v723 = vpop.f32.mrb[0].mxu0
      %v724 = vadd.f32 %v566, %v723
      %v725 = vpop.f32.mrb[0].mxu0
      %v726 = vadd.f32 %v570, %v725
      %727 = vmatprep.mubr.f32.mxu0 0.0
      %728 = vmatmul.mubr.f32.gmra.mrb[0].mxu0 %v374
      %v729 = vpop.f32.mrb[0].mxu0
      %v730 = vadd.f32 %v566, %v729
      %v731 = vpop.f32.mrb[0].mxu0
      %v732 = vadd.f32 %v570, %v731
      %733 = vdwg.mxu0
      %v734 = vmax.f32 %v640, 0.0
      %v735 = vmax.f32 %v642, 0.0
      %v736 = vmax.f32 %v646, 0.0
      %v737 = vmax.f32 %v648, 0.0
      %v738 = vmax.f32 %v652, 0.0
      %v739 = vmax.f32 %v654, 0.0
      %v740 = vmax.f32 %v658, 0.0
      %v741 = vmax.f32 %v660, 0.0
      %v742 = vmax.f32 %v664, 0.0
      %v743 = vmax.f32 %v666, 0.0
      %v744 = vmax.f32 %v670, 0.0
      %v745 = vmax.f32 %v672, 0.0
      %v746 = vmax.f32 %v676, 0.0
      %v747 = vmax.f32 %v678, 0.0
      %v748 = vmax.f32 %v682, 0.0
      %v749 = vmax.f32 %v684, 0.0
      %v750 = vmax.f32 %v688, 0.0
      %v751 = vmax.f32 %v690, 0.0
      %v752 = vmax.f32 %v694, 0.0
      %v753 = vmax.f32 %v696, 0.0
      %v754 = vmax.f32 %v700, 0.0
      %v755 = vmax.f32 %v702, 0.0
      %v756 = vmax.f32 %v706, 0.0
      %v757 = vmax.f32 %v708, 0.0
      %v758 = vmax.f32 %v712, 0.0
      %v759 = vmax.f32 %v714, 0.0
      %v760 = vmax.f32 %v718, 0.0
      %v761 = vmax.f32 %v720, 0.0
      %v762 = vmax.f32 %v724, 0.0
      %v763 = vmax.f32 %v726, 0.0
      %v764 = vmax.f32 %v730, 0.0
      %v765 = vmax.f32 %v732, 0.0
      %v766 = vmul.f32 %v734, %v222
      %v767 = vmul.f32 %v735, %v224
      %v768 = vmul.f32 %v736, %v228
      %v769 = vmul.f32 %v737, %v230
      %v770 = vmul.f32 %v738, %v234
      %v771 = vmul.f32 %v739, %v236
      %v772 = vmul.f32 %v740, %v240
      %v773 = vmul.f32 %v741, %v242
      %v774 = vmul.f32 %v742, %v246
      %v775 = vmul.f32 %v743, %v248
      %v776 = vmul.f32 %v744, %v252
      %v777 = vmul.f32 %v745, %v254
      %v778 = vmul.f32 %v746, %v258
      %v779 = vmul.f32 %v747, %v260
      %v780 = vmul.f32 %v748, %v264
      %v781 = vmul.f32 %v749, %v266
      %v782 = vmul.f32 %v750, %v270
      %v783 = vmul.f32 %v751, %v272
      %v784 = vmul.f32 %v752, %v276
      %v785 = vmul.f32 %v753, %v278
      %v786 = vmul.f32 %v754, %v282
      %v787 = vmul.f32 %v755, %v284
      %v788 = vmul.f32 %v756, %v288
      %v789 = vmul.f32 %v757, %v290
      %v790 = vmul.f32 %v758, %v294
      %v791 = vmul.f32 %v759, %v296
      %v792 = vmul.f32 %v760, %v300
      %v793 = vmul.f32 %v761, %v302
      %v794 = vmul.f32 %v762, %v306
      %v795 = vmul.f32 %v763, %v308
      %v796 = vmul.f32 %v764, %v312
      %v797 = vmul.f32 %v765, %v314
      %v798 = vpack.c.bf16 %v768, %v766
      %v799 = vpack.c.bf16 %v769, %v767
      %v800 = vpack.c.bf16 %v772, %v770
      %v801 = vpack.c.bf16 %v773, %v771
      %v802 = vpack.c.bf16 %v776, %v774
      %v803 = vpack.c.bf16 %v777, %v775
      %v804 = vpack.c.bf16 %v780, %v778
      %v805 = vpack.c.bf16 %v781, %v779
      %v806 = vpack.c.bf16 %v784, %v782
      %v807 = vpack.c.bf16 %v785, %v783
      %v808 = vpack.c.bf16 %v788, %v786
      %v809 = vpack.c.bf16 %v789, %v787
      %v810 = vpack.c.bf16 %v792, %v790
      %v811 = vpack.c.bf16 %v793, %v791
      %v812 = vpack.c.bf16 %v796, %v794
      %v813 = vpack.c.bf16 %v797, %v795
      %814 = vst [vmem:[#allocation3] sm:$0xff] %v798
      %815 = vst [vmem:[#allocation3 + $0x8] sm:$0xff] %v799
      %816 = vst [vmem:[#allocation3 + $0x10] sm:$0xff] %v800
      %817 = vst [vmem:[#allocation3 + $0x18] sm:$0xff] %v801
      %818 = vst [vmem:[#allocation3 + $0x20] sm:$0xff] %v802
      %819 = vst [vmem:[#allocation3 + $0x28] sm:$0xff] %v803
      %820 = vst [vmem:[#allocation3 + $0x30] sm:$0xff] %v804
      %821 = vst [vmem:[#allocation3 + $0x38] sm:$0xff] %v805
      %822 = vst [vmem:[#allocation3 + $0x40] sm:$0xff] %v806
      %823 = vst [vmem:[#allocation3 + $0x48] sm:$0xff] %v807
      %824 = vst [vmem:[#allocation3 + $0x50] sm:$0xff] %v808
      %825 = vst [vmem:[#allocation3 + $0x58] sm:$0xff] %v809
      %826 = vst [vmem:[#allocation3 + $0x60] sm:$0xff] %v810
      %827 = vst [vmem:[#allocation3 + $0x68] sm:$0xff] %v811
      %828 = vst [vmem:[#allocation3 + $0x70] sm:$0xff] %v812
      %829 = vst [vmem:[#allocation3 + $0x78] sm:$0xff] %v813
      %830 = vst.msk [vmem:[#allocation4] sm:$0xff] %vm327, 0.0
      %831 = vst.msk [vmem:[#allocation4 + $0x8] sm:$0xff] %vm327, 0.0
      %832 = vst.msk [vmem:[#allocation4 + $0x10] sm:$0xff] %vm327, 0.0
      %833 = vst.msk [vmem:[#allocation4 + $0x18] sm:$0xff] %vm327, 0.0
      %834 = vst.msk [vmem:[#allocation4 + $0x20] sm:$0xff] %vm327, 0.0
      %835 = vst.msk [vmem:[#allocation4 + $0x28] sm:$0xff] %vm327, 0.0
      %836 = vst.msk [vmem:[#allocation4 + $0x30] sm:$0xff] %vm327, 0.0
      %837 = vst.msk [vmem:[#allocation4 + $0x38] sm:$0xff] %vm327, 0.0
      %838 = vst.msk [vmem:[#allocation4 + $0x40] sm:$0xff] %vm327, 0.0
      %839 = vst.msk [vmem:[#allocation4 + $0x48] sm:$0xff] %vm327, 0.0
      %840 = vst.msk [vmem:[#allocation4 + $0x50] sm:$0xff] %vm327, 0.0
      %841 = vst.msk [vmem:[#allocation4 + $0x58] sm:$0xff] %vm327, 0.0
      %842 = vst.msk [vmem:[#allocation4 + $0x60] sm:$0xff] %vm327, 0.0
      %843 = vst.msk [vmem:[#allocation4 + $0x68] sm:$0xff] %vm327, 0.0
      %844 = vst.msk [vmem:[#allocation4 + $0x70] sm:$0xff] %vm327, 0.0
      %845 = vst.msk [vmem:[#allocation4 + $0x78] sm:$0xff] %vm327, 0.0
    $region77: #{tpu_custom_call.1} parent=1 // pred_fallthru
      _
    %v846 = vld [vmem:[%s2] sm:$0xf]
    %v847 = vld [vmem:[%s2 + $0x4] sm:$0xf]
    %v848 = vld [vmem:[%s2 + $0x8] sm:$0xf]
    %v849 = vld [vmem:[%s2 + $0xc] sm:$0xf]
    %v850 = vld [vmem:[%s2 + $0x10] sm:$0xf]
    %v851 = vld [vmem:[%s2 + $0x14] sm:$0xf]
    %v852 = vld [vmem:[%s2 + $0x18] sm:$0xf]
    %v853 = vld [vmem:[%s2 + $0x1c] sm:$0xf]
    %v854 = vld [vmem:[%s2 + $0x20] sm:$0xf]
    %v855 = vld [vmem:[%s2 + $0x24] sm:$0xf]
    %v856 = vld [vmem:[%s2 + $0x28] sm:$0xf]
    %v857 = vld [vmem:[%s2 + $0x2c] sm:$0xf]
    %v858 = vld [vmem:[%s2 + $0x30] sm:$0xf]
    %v859 = vld [vmem:[%s2 + $0x34] sm:$0xf]
    %v860 = vld [vmem:[%s2 + $0x38] sm:$0xf]
    %v861 = vld [vmem:[%s2 + $0x3c] sm:$0xf]
    %v862 = vld [vmem:[%s2 + $0x40] sm:$0xf]
    %v863 = vld [vmem:[%s2 + $0x44] sm:$0xf]
    %v864 = vld [vmem:[%s2 + $0x48] sm:$0xf]
    %v865 = vld [vmem:[%s2 + $0x4c] sm:$0xf]
    %v866 = vld [vmem:[%s2 + $0x50] sm:$0xf]
    %v867 = vld [vmem:[%s2 + $0x54] sm:$0xf]
    %v868 = vld [vmem:[%s2 + $0x58] sm:$0xf]
    %v869 = vld [vmem:[%s2 + $0x5c] sm:$0xf]
    %v870 = vld [vmem:[%s2 + $0x60] sm:$0xf]
    %v871 = vld [vmem:[%s2 + $0x64] sm:$0xf]
    %v872 = vld [vmem:[%s2 + $0x68] sm:$0xf]
    %v873 = vld [vmem:[%s2 + $0x6c] sm:$0xf]
    %v874 = vld [vmem:[%s2 + $0x70] sm:$0xf]
    %v875 = vld [vmem:[%s2 + $0x74] sm:$0xf]
    %v876 = vld [vmem:[%s2 + $0x78] sm:$0xf]
    %v877 = vld [vmem:[%s2 + $0x7c] sm:$0xf]
    %v878 = vld [vmem:[%s6] sm:$0xff]
    %v879 = vld [vmem:[%s6 + $0x8] sm:$0xff]
    %v880 = vld [vmem:[%s6 + $0x10] sm:$0xff]
    %v881 = vld [vmem:[%s6 + $0x18] sm:$0xff]
    %v882 = vld [vmem:[%s6 + $0x20] sm:$0xff]
    %v883 = vld [vmem:[%s6 + $0x28] sm:$0x11]
    %v916 = vunpack.c.l.b16 %v846
    %v917 = vunpack.c.l.b16 %v847
    %v918 = vunpack.c.l.b16 %v848
    %v919 = vunpack.c.l.b16 %v849
    %v920 = vunpack.c.l.b16 %v850
    %v921 = vunpack.c.l.b16 %v851
    %v922 = vunpack.c.l.b16 %v852
    %v923 = vunpack.c.l.b16 %v853
    %v924 = vunpack.c.l.b16 %v854
    %v925 = vunpack.c.l.b16 %v855
    %v926 = vunpack.c.l.b16 %v856
    %v927 = vunpack.c.l.b16 %v857
    %v928 = vunpack.c.l.b16 %v858
    %v929 = vunpack.c.l.b16 %v859
    %v930 = vunpack.c.l.b16 %v860
    %v931 = vunpack.c.l.b16 %v861
    %v932 = vunpack.c.l.b16 %v862
    %v933 = vunpack.c.l.b16 %v863
    %v934 = vunpack.c.l.b16 %v864
    %v935 = vunpack.c.l.b16 %v865
    %v936 = vunpack.c.l.b16 %v866
    %v937 = vunpack.c.l.b16 %v867
    %v938 = vunpack.c.l.b16 %v868
    %v939 = vunpack.c.l.b16 %v869
    %v940 = vunpack.c.l.b16 %v870
    %v941 = vunpack.c.l.b16 %v871
    %v942 = vunpack.c.l.b16 %v872
    %v943 = vunpack.c.l.b16 %v873
    %v944 = vunpack.c.l.b16 %v874
    %v945 = vunpack.c.l.b16 %v875
    %v946 = vunpack.c.l.b16 %v876
    %v947 = vunpack.c.l.b16 %v877
    %v948 = vpack.c.b16 %v917, %v916
    %v949 = vpack.c.b16 %v919, %v918
    %v950 = vpack.c.b16 %v921, %v920
    %v951 = vpack.c.b16 %v923, %v922
    %v952 = vpack.c.b16 %v925, %v924
    %v953 = vpack.c.b16 %v927, %v926
    %v954 = vpack.c.b16 %v929, %v928
    %v955 = vpack.c.b16 %v931, %v930
    %v956 = vpack.c.b16 %v933, %v932
    %v957 = vpack.c.b16 %v935, %v934
    %v958 = vpack.c.b16 %v937, %v936
    %v959 = vpack.c.b16 %v939, %v938
    %v960 = vpack.c.b16 %v941, %v940
    %v961 = vpack.c.b16 %v943, %v942
    %v962 = vpack.c.b16 %v945, %v944
    %v963 = vpack.c.b16 %v947, %v946
    %v970 = vunpack.c.l.b16 %v878
    %v971 = vunpack.c.h.b16 %v878
    %v972 = vunpack.c.l.b16 %v879
    %v973 = vunpack.c.h.b16 %v879
    %v974 = vunpack.c.l.b16 %v880
    %v975 = vunpack.c.h.b16 %v880
    %v976 = vunpack.c.l.b16 %v881
    %v977 = vunpack.c.h.b16 %v881
    %v978 = vunpack.c.l.b16 %v882
    %v979 = vunpack.c.h.b16 %v882
    %v980 = vunpack.c.l.b16 %v883
    %v981 = vunpack.c.h.b16 %v883
    %v982 = vpack.c.b16 %v972, %v970
    %v983 = vpack.c.b16 %v973, %v971
    %v984 = vpack.c.b16 %v976, %v974
    %v985 = vpack.c.b16 %v977, %v975
    %v986 = vpack.c.b16 %v980, %v978
    %v987 = vpack.c.b16 %v981, %v979
    %vm992 = vcmask 343040
    %v994 = vsel %vm992, %v948, 0
    %v997 = vsel %vm992, %v949, 0
    %v1000 = vsel %vm992, %v950, 0
    %v1003 = vsel %vm992, %v951, 0
    %v1006 = vsel %vm992, %v952, 0
    %v1009 = vsel %vm992, %v953, 0
    %v1012 = vsel %vm992, %v954, 0
    %v1015 = vsel %vm992, %v955, 0
    %v1018 = vsel %vm992, %v956, 0
    %v1021 = vsel %vm992, %v957, 0
    %v1024 = vsel %vm992, %v958, 0
    %v1027 = vsel %vm992, %v959, 0
    %v1030 = vsel %vm992, %v960, 0
    %v1033 = vsel %vm992, %v961, 0
    %v1036 = vsel %vm992, %v962, 0
    %v1039 = vsel %vm992, %v963, 0
    %vm1041 = vcmask 1044480
    %v1043 = vsel %vm1041, %v986, 0
    %v1046 = vsel %vm1041, %v987, 0
    %1048 = vmatprep.subr.bf16.mxu0 %v983
    %1049 = vmatpush1.bf16.msra.mxu0 %v982
    %1050 = vmatprep.subr.bf16.mxu0 %v985
    %1051 = vmatpush1.bf16.msra.mxu0 %v984
    %1052 = vmatprep.subr.bf16.mxu0 %v1046
    %1053 = vmatpush1.bf16.msra.mxu0 %v1043
    %1054 = vmatprep.subr.bf16.mxu0 0
    %1055 = vmatpush1.bf16.msra.mxu0 0
    %1056 = vmatprep.subr.bf16.mxu0 0
    %1057 = vmatpush1.bf16.msra.mxu0 0
    %1058 = vmatprep.subr.bf16.mxu0 0
    %1059 = vmatpush1.bf16.msra.mxu0 0
    %1060 = vmatprep.subr.bf16.mxu0 0
    %1061 = vmatpush1.bf16.msra.mxu0 0
    %1062 = vmatprep.subr.bf16.mxu0 0
    %1063 = vmatpush1.bf16.msra.mxu0 0
    %1064 = vmatprep.subr.bf16.mxu0 0
    %1065 = vmatpush1.bf16.msra.mxu0 0
    %1066 = vmatprep.subr.bf16.mxu0 0
    %1067 = vmatpush1.bf16.msra.mxu0 0
    %1068 = vmatprep.subr.bf16.mxu0 0
    %1069 = vmatpush1.bf16.msra.mxu0 0
    %1070 = vmatprep.subr.bf16.mxu0 0
    %1071 = vmatpush1.bf16.msra.mxu0 0
    %1072 = vmatprep.subr.bf16.mxu0 0
    %1073 = vmatpush1.bf16.msra.mxu0 0
    %1074 = vmatprep.subr.bf16.mxu0 0
    %1075 = vmatpush1.bf16.msra.mxu0 0
    %1076 = vmatprep.subr.bf16.mxu0 0
    %1077 = vmatpush1.bf16.msra.mxu0 0
    %1078 = vmatprep.subr.bf16.mxu0 0
    %1079 = vmatpush1.bf16.msra.mxu0 0
    %1080 = vmatprep.mubr.bf16.mxu0 0
    %1081 = vmatmul.mubr.bf16.gmra.mrb[0].mxu0 %v994
    %v1082 = vpop.f32.mrb[0].mxu0
    %v1083 = vadd.f32 0.0, %v1082
    %v1084 = vpop.f32.mrb[0].mxu0
    %v1085 = vadd.f32 0.0, %v1084
    %v1086 = vpop.f32.mrb[0].mxu0
    %v1087 = vadd.f32 0.0, %v1086
    %v1088 = vpop.f32.mrb[0].mxu0
    %v1089 = vadd.f32 0.0, %v1088
    %1090 = vmatprep.mubr.bf16.mxu0 0
    %1091 = vmatmul.mubr.bf16.gmra.mrb[0].mxu0 %v997
    %v1092 = vpop.f32.mrb[0].mxu0
    %v1093 = vadd.f32 0.0, %v1092
    %v1094 = vpop.f32.mrb[0].mxu0
    %v1095 = vadd.f32 0.0, %v1094
    %v1096 = vpop.f32.mrb[0].mxu0
    %v1097 = vadd.f32 0.0, %v1096
    %v1098 = vpop.f32.mrb[0].mxu0
    %v1099 = vadd.f32 0.0, %v1098
    %1100 = vmatprep.mubr.bf16.mxu0 0
    %1101 = vmatmul.mubr.bf16.gmra.mrb[0].mxu0 %v1000
    %v1102 = vpop.f32.mrb[0].mxu0
    %v1103 = vadd.f32 0.0, %v1102
    %v1104 = vpop.f32.mrb[0].mxu0
    %v1105 = vadd.f32 0.0, %v1104
    %v1106 = vpop.f32.mrb[0].mxu0
    %v1107 = vadd.f32 0.0, %v1106
    %v1108 = vpop.f32.mrb[0].mxu0
    %v1109 = vadd.f32 0.0, %v1108
    %1110 = vmatprep.mubr.bf16.mxu0 0
    %1111 = vmatmul.mubr.bf16.gmra.mrb[0].mxu0 %v1003
    %v1112 = vpop.f32.mrb[0].mxu0
    %v1113 = vadd.f32 0.0, %v1112
    %v1114 = vpop.f32.mrb[0].mxu0
    %v1115 = vadd.f32 0.0, %v1114
    %v1116 = vpop.f32.mrb[0].mxu0
    %v1117 = vadd.f32 0.0, %v1116
    %v1118 = vpop.f32.mrb[0].mxu0
    %v1119 = vadd.f32 0.0, %v1118
    %1120 = vmatprep.mubr.bf16.mxu0 0
    %1121 = vmatmul.mubr.bf16.gmra.mrb[0].mxu0 %v1006
    %v1122 = vpop.f32.mrb[0].mxu0
    %v1123 = vadd.f32 0.0, %v1122
    %v1124 = vpop.f32.mrb[0].mxu0
    %v1125 = vadd.f32 0.0, %v1124
    %v1126 = vpop.f32.mrb[0].mxu0
    %v1127 = vadd.f32 0.0, %v1126
    %v1128 = vpop.f32.mrb[0].mxu0
    %v1129 = vadd.f32 0.0, %v1128
    %1130 = vmatprep.mubr.bf16.mxu0 0
    %1131 = vmatmul.mubr.bf16.gmra.mrb[0].mxu0 %v1009
    %v1132 = vpop.f32.mrb[0].mxu0
    %v1133 = vadd.f32 0.0, %v1132
    %v1134 = vpop.f32.mrb[0].mxu0
    %v1135 = vadd.f32 0.0, %v1134
    %v1136 = vpop.f32.mrb[0].mxu0
    %v1137 = vadd.f32 0.0, %v1136
    %v1138 = vpop.f32.mrb[0].mxu0
    %v1139 = vadd.f32 0.0, %v1138
    %1140 = vmatprep.mubr.bf16.mxu0 0
    %1141 = vmatmul.mubr.bf16.gmra.mrb[0].mxu0 %v1012
    %v1142 = vpop.f32.mrb[0].mxu0
    %v1143 = vadd.f32 0.0, %v1142
    %v1144 = vpop.f32.mrb[0].mxu0
    %v1145 = vadd.f32 0.0, %v1144
    %v1146 = vpop.f32.mrb[0].mxu0
    %v1147 = vadd.f32 0.0, %v1146
    %v1148 = vpop.f32.mrb[0].mxu0
    %v1149 = vadd.f32 0.0, %v1148
    %1150 = vmatprep.mubr.bf16.mxu0 0
    %1151 = vmatmul.mubr.bf16.gmra.mrb[0].mxu0 %v1015
    %v1152 = vpop.f32.mrb[0].mxu0
    %v1153 = vadd.f32 0.0, %v1152
    %v1154 = vpop.f32.mrb[0].mxu0
    %v1155 = vadd.f32 0.0, %v1154
    %v1156 = vpop.f32.mrb[0].mxu0
    %v1157 = vadd.f32 0.0, %v1156
    %v1158 = vpop.f32.mrb[0].mxu0
    %v1159 = vadd.f32 0.0, %v1158
    %1160 = vmatprep.mubr.bf16.mxu0 0
    %1161 = vmatmul.mubr.bf16.gmra.mrb[0].mxu0 %v1018
    %v1162 = vpop.f32.mrb[0].mxu0
    %v1163 = vadd.f32 0.0, %v1162
    %v1164 = vpop.f32.mrb[0].mxu0
    %v1165 = vadd.f32 0.0, %v1164
    %v1166 = vpop.f32.mrb[0].mxu0
    %v1167 = vadd.f32 0.0, %v1166
    %v1168 = vpop.f32.mrb[0].mxu0
    %v1169 = vadd.f32 0.0, %v1168
    %1170 = vmatprep.mubr.bf16.mxu0 0
    %1171 = vmatmul.mubr.bf16.gmra.mrb[0].mxu0 %v1021
    %v1172 = vpop.f32.mrb[0].mxu0
    %v1173 = vadd.f32 0.0, %v1172
    %v1174 = vpop.f32.mrb[0].mxu0
    %v1175 = vadd.f32 0.0, %v1174
    %v1176 = vpop.f32.mrb[0].mxu0
    %v1177 = vadd.f32 0.0, %v1176
    %v1178 = vpop.f32.mrb[0].mxu0
    %v1179 = vadd.f32 0.0, %v1178
    %1180 = vmatprep.mubr.bf16.mxu0 0
    %1181 = vmatmul.mubr.bf16.gmra.mrb[0].mxu0 %v1024
    %v1182 = vpop.f32.mrb[0].mxu0
    %v1183 = vadd.f32 0.0, %v1182
    %v1184 = vpop.f32.mrb[0].mxu0
    %v1185 = vadd.f32 0.0, %v1184
    %v1186 = vpop.f32.mrb[0].mxu0
    %v1187 = vadd.f32 0.0, %v1186
    %v1188 = vpop.f32.mrb[0].mxu0
    %v1189 = vadd.f32 0.0, %v1188
    %1190 = vmatprep.mubr.bf16.mxu0 0
    %1191 = vmatmul.mubr.bf16.gmra.mrb[0].mxu0 %v1027
    %v1192 = vpop.f32.mrb[0].mxu0
    %v1193 = vadd.f32 0.0, %v1192
    %v1194 = vpop.f32.mrb[0].mxu0
    %v1195 = vadd.f32 0.0, %v1194
    %v1196 = vpop.f32.mrb[0].mxu0
    %v1197 = vadd.f32 0.0, %v1196
    %v1198 = vpop.f32.mrb[0].mxu0
    %v1199 = vadd.f32 0.0, %v1198
    %1200 = vmatprep.mubr.bf16.mxu0 0
    %1201 = vmatmul.mubr.bf16.gmra.mrb[0].mxu0 %v1030
    %v1202 = vpop.f32.mrb[0].mxu0
    %v1203 = vadd.f32 0.0, %v1202
    %v1204 = vpop.f32.mrb[0].mxu0
    %v1205 = vadd.f32 0.0, %v1204
    %v1206 = vpop.f32.mrb[0].mxu0
    %v1207 = vadd.f32 0.0, %v1206
    %v1208 = vpop.f32.mrb[0].mxu0
    %v1209 = vadd.f32 0.0, %v1208
    %1210 = vmatprep.mubr.bf16.mxu0 0
    %1211 = vmatmul.mubr.bf16.gmra.mrb[0].mxu0 %v1033
    %v1212 = vpop.f32.mrb[0].mxu0
    %v1213 = vadd.f32 0.0, %v1212
    %v1214 = vpop.f32.mrb[0].mxu0
    %v1215 = vadd.f32 0.0, %v1214
    %v1216 = vpop.f32.mrb[0].mxu0
    %v1217 = vadd.f32 0.0, %v1216
    %v1218 = vpop.f32.mrb[0].mxu0
    %v1219 = vadd.f32 0.0, %v1218
    %1220 = vmatprep.mubr.bf16.mxu0 0
    %1221 = vmatmul.mubr.bf16.gmra.mrb[0].mxu0 %v1036
    %v1222 = vpop.f32.mrb[0].mxu0
    %v1223 = vadd.f32 0.0, %v1222
    %v1224 = vpop.f32.mrb[0].mxu0
    %v1225 = vadd.f32 0.0, %v1224
    %v1226 = vpop.f32.mrb[0].mxu0
    %v1227 = vadd.f32 0.0, %v1226
    %v1228 = vpop.f32.mrb[0].mxu0
    %v1229 = vadd.f32 0.0, %v1228
    %1230 = vmatprep.mubr.bf16.mxu0 0
    %1231 = vmatmul.mubr.bf16.gmra.mrb[0].mxu0 %v1039
    %v1232 = vpop.f32.mrb[0].mxu0
    %v1233 = vadd.f32 0.0, %v1232
    %v1234 = vpop.f32.mrb[0].mxu0
    %v1235 = vadd.f32 0.0, %v1234
    %v1236 = vpop.f32.mrb[0].mxu0
    %v1237 = vadd.f32 0.0, %v1236
    %v1238 = vpop.f32.mrb[0].mxu0
    %v1239 = vadd.f32 0.0, %v1238
    %1240 = vdwg.mxu0
    %v1241 = vlaneseq
    %v1242 = vand.u32 %v1241, 127
    %v1243 = vld [vmem:[%s3] sm:$0xff]
    %v1244 = vld [vmem:[%s3 + $0x8] sm:$0xff]
    %v1245 = vld [vmem:[%s3 + $0x10] sm:$0xff]
    %v1246 = vld [vmem:[%s3 + $0x18] sm:$0xff]
    %v1247 = vld [vmem:[%s3 + $0x20] sm:$0xff]
    %v1248 = vld [vmem:[%s3 + $0x28] sm:$0xff]
    %v1249 = vld [vmem:[%s3 + $0x30] sm:$0xff]
    %v1250 = vld [vmem:[%s3 + $0x38] sm:$0xff]
    %v1251 = vld [vmem:[%s3 + $0x40] sm:$0xff]
    %v1252 = vld [vmem:[%s3 + $0x48] sm:$0xff]
    %v1253 = vld [vmem:[%s3 + $0x50] sm:$0xff]
    %v1254 = vld [vmem:[%s3 + $0x58] sm:$0xff]
    %v1255 = vld [vmem:[%s3 + $0x60] sm:$0xff]
    %v1256 = vld [vmem:[%s3 + $0x68] sm:$0xff]
    %v1257 = vld [vmem:[%s3 + $0x70] sm:$0xff]
    %v1258 = vld [vmem:[%s3 + $0x78] sm:$0xff]
    %v1259 = vld [vmem:[%s3 + $0x80] sm:$0xff]
    %v1260 = vld [vmem:[%s3 + $0x88] sm:$0xff]
    %v1261 = vld [vmem:[%s3 + $0x90] sm:$0xff]
    %v1262 = vld [vmem:[%s3 + $0x98] sm:$0xff]
    %v1263 = vld [vmem:[%s3 + $0xa0] sm:$0xff]
    %v1264 = vld [vmem:[%s3 + $0xa8] sm:$0xff]
    %v1265 = vld [vmem:[%s3 + $0xb0] sm:$0xff]
    %v1266 = vld [vmem:[%s3 + $0xb8] sm:$0xff]
    %v1267 = vld [vmem:[%s3 + $0xc0] sm:$0xff]
    %v1268 = vld [vmem:[%s3 + $0xc8] sm:$0xff]
    %v1269 = vld [vmem:[%s3 + $0xd0] sm:$0xff]
    %v1270 = vld [vmem:[%s3 + $0xd8] sm:$0xff]
    %v1271 = vld [vmem:[%s3 + $0xe0] sm:$0xff]
    %v1272 = vld [vmem:[%s3 + $0xe8] sm:$0xff]
    %v1273 = vld [vmem:[%s3 + $0xf0] sm:$0xff]
    %v1274 = vld [vmem:[%s3 + $0xf8] sm:$0xff]
    %1275 = vset.pattern.permute.xlu0 0
    %1276 = vperm.xlu0 %1275, %v1243
    %v1277 = vpop.permute.xlu0 %1276
    %1278 = vset.pattern.permute.xlu0 0
    %1279 = vperm.xlu0 %1278, %v1244
    %v1280 = vpop.permute.xlu0 %1279
    %1281 = vset.pattern.permute.xlu0 0
    %1282 = vperm.xlu0 %1281, %v1245
    %v1283 = vpop.permute.xlu0 %1282
    %1284 = vset.pattern.permute.xlu0 0
    %1285 = vperm.xlu0 %1284, %v1246
    %v1286 = vpop.permute.xlu0 %1285
    %1287 = vset.pattern.permute.xlu0 0
    %1288 = vperm.xlu0 %1287, %v1247
    %v1289 = vpop.permute.xlu0 %1288
    %1290 = vset.pattern.permute.xlu0 0
    %1291 = vperm.xlu0 %1290, %v1248
    %v1292 = vpop.permute.xlu0 %1291
    %1293 = vset.pattern.permute.xlu0 0
    %1294 = vperm.xlu0 %1293, %v1249
    %v1295 = vpop.permute.xlu0 %1294
    %1296 = vset.pattern.permute.xlu0 0
    %1297 = vperm.xlu0 %1296, %v1250
    %v1298 = vpop.permute.xlu0 %1297
    %1299 = vset.pattern.permute.xlu0 0
    %1300 = vperm.xlu0 %1299, %v1251
    %v1301 = vpop.permute.xlu0 %1300
    %1302 = vset.pattern.permute.xlu0 0
    %1303 = vperm.xlu0 %1302, %v1252
    %v1304 = vpop.permute.xlu0 %1303
    %1305 = vset.pattern.permute.xlu0 0
    %1306 = vperm.xlu0 %1305, %v1253
    %v1307 = vpop.permute.xlu0 %1306
    %1308 = vset.pattern.permute.xlu0 0
    %1309 = vperm.xlu0 %1308, %v1254
    %v1310 = vpop.permute.xlu0 %1309
    %1311 = vset.pattern.permute.xlu0 0
    %1312 = vperm.xlu0 %1311, %v1255
    %v1313 = vpop.permute.xlu0 %1312
    %1314 = vset.pattern.permute.xlu0 0
    %1315 = vperm.xlu0 %1314, %v1256
    %v1316 = vpop.permute.xlu0 %1315
    %1317 = vset.pattern.permute.xlu0 0
    %1318 = vperm.xlu0 %1317, %v1257
    %v1319 = vpop.permute.xlu0 %1318
    %1320 = vset.pattern.permute.xlu0 0
    %1321 = vperm.xlu0 %1320, %v1258
    %v1322 = vpop.permute.xlu0 %1321
    %1323 = vset.pattern.permute.xlu0 0
    %1324 = vperm.xlu0 %1323, %v1259
    %v1325 = vpop.permute.xlu0 %1324
    %1326 = vset.pattern.permute.xlu0 0
    %1327 = vperm.xlu0 %1326, %v1260
    %v1328 = vpop.permute.xlu0 %1327
    %1329 = vset.pattern.permute.xlu0 0
    %1330 = vperm.xlu0 %1329, %v1261
    %v1331 = vpop.permute.xlu0 %1330
    %1332 = vset.pattern.permute.xlu0 0
    %1333 = vperm.xlu0 %1332, %v1262
    %v1334 = vpop.permute.xlu0 %1333
    %1335 = vset.pattern.permute.xlu0 0
    %1336 = vperm.xlu0 %1335, %v1263
    %v1337 = vpop.permute.xlu0 %1336
    %1338 = vset.pattern.permute.xlu0 0
    %1339 = vperm.xlu0 %1338, %v1264
    %v1340 = vpop.permute.xlu0 %1339
    %1341 = vset.pattern.permute.xlu0 0
    %1342 = vperm.xlu0 %1341, %v1265
    %v1343 = vpop.permute.xlu0 %1342
    %1344 = vset.pattern.permute.xlu0 0
    %1345 = vperm.xlu0 %1344, %v1266
    %v1346 = vpop.permute.xlu0 %1345
    %1347 = vset.pattern.permute.xlu0 0
    %1348 = vperm.xlu0 %1347, %v1267
    %v1349 = vpop.permute.xlu0 %1348
    %1350 = vset.pattern.permute.xlu0 0
    %1351 = vperm.xlu0 %1350, %v1268
    %v1352 = vpop.permute.xlu0 %1351
    %1353 = vset.pattern.permute.xlu0 0
    %1354 = vperm.xlu0 %1353, %v1269
    %v1355 = vpop.permute.xlu0 %1354
    %1356 = vset.pattern.permute.xlu0 0
    %1357 = vperm.xlu0 %1356, %v1270
    %v1358 = vpop.permute.xlu0 %1357
    %1359 = vset.pattern.permute.xlu0 0
    %1360 = vperm.xlu0 %1359, %v1271
    %v1361 = vpop.permute.xlu0 %1360
    %1362 = vset.pattern.permute.xlu0 0
    %1363 = vperm.xlu0 %1362, %v1272
    %v1364 = vpop.permute.xlu0 %1363
    %1365 = vset.pattern.permute.xlu0 0
    %1366 = vperm.xlu0 %1365, %v1273
    %v1367 = vpop.permute.xlu0 %1366
    %1368 = vset.pattern.permute.xlu0 0
    %1369 = vperm.xlu0 %1368, %v1274
    %v1370 = vpop.permute.xlu0 %1369
    %vm1371 = vcmp.eq.s32.totalorder %v1277, %v1242
    %vm1372 = vcmp.eq.s32.totalorder %v1280, %v1242
    %vm1373 = vcmp.eq.s32.totalorder %v1283, %v1242
    %vm1374 = vcmp.eq.s32.totalorder %v1286, %v1242
    %vm1375 = vcmp.eq.s32.totalorder %v1289, %v1242
    %vm1376 = vcmp.eq.s32.totalorder %v1292, %v1242
    %vm1377 = vcmp.eq.s32.totalorder %v1295, %v1242
    %vm1378 = vcmp.eq.s32.totalorder %v1298, %v1242
    %vm1379 = vcmp.eq.s32.totalorder %v1301, %v1242
    %vm1380 = vcmp.eq.s32.totalorder %v1304, %v1242
    %vm1381 = vcmp.eq.s32.totalorder %v1307, %v1242
    %vm1382 = vcmp.eq.s32.totalorder %v1310, %v1242
    %vm1383 = vcmp.eq.s32.totalorder %v1313, %v1242
    %vm1384 = vcmp.eq.s32.totalorder %v1316, %v1242
    %vm1385 = vcmp.eq.s32.totalorder %v1319, %v1242
    %vm1386 = vcmp.eq.s32.totalorder %v1322, %v1242
    %vm1387 = vcmp.eq.s32.totalorder %v1325, %v1242
    %vm1388 = vcmp.eq.s32.totalorder %v1328, %v1242
    %vm1389 = vcmp.eq.s32.totalorder %v1331, %v1242
    %vm1390 = vcmp.eq.s32.totalorder %v1334, %v1242
    %vm1391 = vcmp.eq.s32.totalorder %v1337, %v1242
    %vm1392 = vcmp.eq.s32.totalorder %v1340, %v1242
    %vm1393 = vcmp.eq.s32.totalorder %v1343, %v1242
    %vm1394 = vcmp.eq.s32.totalorder %v1346, %v1242
    %vm1395 = vcmp.eq.s32.totalorder %v1349, %v1242
    %vm1396 = vcmp.eq.s32.totalorder %v1352, %v1242
    %vm1397 = vcmp.eq.s32.totalorder %v1355, %v1242
    %vm1398 = vcmp.eq.s32.totalorder %v1358, %v1242
    %vm1399 = vcmp.eq.s32.totalorder %v1361, %v1242
    %vm1400 = vcmp.eq.s32.totalorder %v1364, %v1242
    %vm1401 = vcmp.eq.s32.totalorder %v1367, %v1242
    %vm1402 = vcmp.eq.s32.totalorder %v1370, %v1242
    %v1403 = vsel %vm1371, 1, 0
    %v1404 = vsel %vm1372, 1, 0
    %v1405 = vsel %vm1373, 1, 0
    %v1406 = vsel %vm1374, 1, 0
    %v1407 = vsel %vm1375, 1, 0
    %v1408 = vsel %vm1376, 1, 0
    %v1409 = vsel %vm1377, 1, 0
    %v1410 = vsel %vm1378, 1, 0
    %v1411 = vsel %vm1379, 1, 0
    %v1412 = vsel %vm1380, 1, 0
    %v1413 = vsel %vm1381, 1, 0
    %v1414 = vsel %vm1382, 1, 0
    %v1415 = vsel %vm1383, 1, 0
    %v1416 = vsel %vm1384, 1, 0
    %v1417 = vsel %vm1385, 1, 0
    %v1418 = vsel %vm1386, 1, 0
    %v1419 = vsel %vm1387, 1, 0
    %v1420 = vsel %vm1388, 1, 0
    %v1421 = vsel %vm1389, 1, 0
    %v1422 = vsel %vm1390, 1, 0
    %v1423 = vsel %vm1391, 1, 0
    %v1424 = vsel %vm1392, 1, 0
    %v1425 = vsel %vm1393, 1, 0
    %v1426 = vsel %vm1394, 1, 0
    %v1427 = vsel %vm1395, 1, 0
    %v1428 = vsel %vm1396, 1, 0
    %v1429 = vsel %vm1397, 1, 0
    %v1430 = vsel %vm1398, 1, 0
    %v1431 = vsel %vm1399, 1, 0
    %v1432 = vsel %vm1400, 1, 0
    %v1433 = vsel %vm1401, 1, 0
    %v1434 = vsel %vm1402, 1, 0
    %v1435 = vcvt.s32.f32 %v1403
    %v1436 = vcvt.s32.f32 %v1404
    %v1437 = vcvt.s32.f32 %v1405
    %v1438 = vcvt.s32.f32 %v1406
    %v1439 = vcvt.s32.f32 %v1407
    %v1440 = vcvt.s32.f32 %v1408
    %v1441 = vcvt.s32.f32 %v1409
    %v1442 = vcvt.s32.f32 %v1410
    %v1443 = vcvt.s32.f32 %v1411
    %v1444 = vcvt.s32.f32 %v1412
    %v1445 = vcvt.s32.f32 %v1413
    %v1446 = vcvt.s32.f32 %v1414
    %v1447 = vcvt.s32.f32 %v1415
    %v1448 = vcvt.s32.f32 %v1416
    %v1449 = vcvt.s32.f32 %v1417
    %v1450 = vcvt.s32.f32 %v1418
    %v1451 = vcvt.s32.f32 %v1419
    %v1452 = vcvt.s32.f32 %v1420
    %v1453 = vcvt.s32.f32 %v1421
    %v1454 = vcvt.s32.f32 %v1422
    %v1455 = vcvt.s32.f32 %v1423
    %v1456 = vcvt.s32.f32 %v1424
    %v1457 = vcvt.s32.f32 %v1425
    %v1458 = vcvt.s32.f32 %v1426
    %v1459 = vcvt.s32.f32 %v1427
    %v1460 = vcvt.s32.f32 %v1428
    %v1461 = vcvt.s32.f32 %v1429
    %v1462 = vcvt.s32.f32 %v1430
    %v1463 = vcvt.s32.f32 %v1431
    %v1464 = vcvt.s32.f32 %v1432
    %v1465 = vcvt.s32.f32 %v1433
    %v1466 = vcvt.s32.f32 %v1434
    %v1467 = vpack.c.bf16 %v1436, %v1435
    %v1468 = vpack.c.bf16 %v1438, %v1437
    %v1469 = vpack.c.bf16 %v1440, %v1439
    %v1470 = vpack.c.bf16 %v1442, %v1441
    %v1471 = vpack.c.bf16 %v1444, %v1443
    %v1472 = vpack.c.bf16 %v1446, %v1445
    %v1473 = vpack.c.bf16 %v1448, %v1447
    %v1474 = vpack.c.bf16 %v1450, %v1449
    %v1475 = vpack.c.bf16 %v1452, %v1451
    %v1476 = vpack.c.bf16 %v1454, %v1453
    %v1477 = vpack.c.bf16 %v1456, %v1455
    %v1478 = vpack.c.bf16 %v1458, %v1457
    %v1479 = vpack.c.bf16 %v1460, %v1459
    %v1480 = vpack.c.bf16 %v1462, %v1461
    %v1481 = vpack.c.bf16 %v1464, %v1463
    %v1482 = vpack.c.bf16 %v1466, %v1465
    %v1483 = vld [vmem:[#allocation3] sm:$0xff]
    %v1484 = vld [vmem:[#allocation3 + $0x8] sm:$0xff]
    %v1485 = vld [vmem:[#allocation3 + $0x10] sm:$0xff]
    %v1486 = vld [vmem:[#allocation3 + $0x18] sm:$0xff]
    %v1487 = vld [vmem:[#allocation3 + $0x20] sm:$0xff]
    %v1488 = vld [vmem:[#allocation3 + $0x28] sm:$0xff]
    %v1489 = vld [vmem:[#allocation3 + $0x30] sm:$0xff]
    %v1490 = vld [vmem:[#allocation3 + $0x38] sm:$0xff]
    %v1491 = vld [vmem:[#allocation3 + $0x40] sm:$0xff]
    %v1492 = vld [vmem:[#allocation3 + $0x48] sm:$0xff]
    %v1493 = vld [vmem:[#allocation3 + $0x50] sm:$0xff]
    %v1494 = vld [vmem:[#allocation3 + $0x58] sm:$0xff]
    %v1495 = vld [vmem:[#allocation3 + $0x60] sm:$0xff]
    %v1496 = vld [vmem:[#allocation3 + $0x68] sm:$0xff]
    %v1497 = vld [vmem:[#allocation3 + $0x70] sm:$0xff]
    %v1498 = vld [vmem:[#allocation3 + $0x78] sm:$0xff]
    %1499 = vmatprep.subr.bf16.mxu0 %v1484
    %1500 = vmatpush1.bf16.msra.mxu0 %v1483
    %1501 = vmatprep.subr.bf16.mxu0 %v1486
    %1502 = vmatpush1.bf16.msra.mxu0 %v1485
    %1503 = vmatprep.subr.bf16.mxu0 %v1488
    %1504 = vmatpush1.bf16.msra.mxu0 %v1487
    %1505 = vmatprep.subr.bf16.mxu0 %v1490
    %1506 = vmatpush1.bf16.msra.mxu0 %v1489
    %1507 = vmatprep.subr.bf16.mxu0 %v1492
    %1508 = vmatpush1.bf16.msra.mxu0 %v1491
    %1509 = vmatprep.subr.bf16.mxu0 %v1494
    %1510 = vmatpush1.bf16.msra.mxu0 %v1493
    %1511 = vmatprep.subr.bf16.mxu0 %v1496
    %1512 = vmatpush1.bf16.msra.mxu0 %v1495
    %1513 = vmatprep.subr.bf16.mxu0 %v1498
    %1514 = vmatpush1.bf16.msra.mxu0 %v1497
    %1515 = vmatprep.subr.bf16.mxu0 0
    %1516 = vmatpush1.bf16.msra.mxu0 0
    %1517 = vmatprep.subr.bf16.mxu0 0
    %1518 = vmatpush1.bf16.msra.mxu0 0
    %1519 = vmatprep.subr.bf16.mxu0 0
    %1520 = vmatpush1.bf16.msra.mxu0 0
    %1521 = vmatprep.subr.bf16.mxu0 0
    %1522 = vmatpush1.bf16.msra.mxu0 0
    %1523 = vmatprep.subr.bf16.mxu0 0
    %1524 = vmatpush1.bf16.msra.mxu0 0
    %1525 = vmatprep.subr.bf16.mxu0 0
    %1526 = vmatpush1.bf16.msra.mxu0 0
    %1527 = vmatprep.subr.bf16.mxu0 0
    %1528 = vmatpush1.bf16.msra.mxu0 0
    %1529 = vmatprep.subr.bf16.mxu0 0
    %1530 = vmatpush1.bf16.msra.mxu0 0
    %1531 = vmatprep.mubr.bf16.mxu0 0
    %1532 = vmatmul.mubr.bf16.gmra.mrb[0].mxu0 %v1467
    %v1533 = vpop.f32.mrb[0].mxu0
    %v1534 = vadd.f32 0.0, %v1533
    %v1535 = vpop.f32.mrb[0].mxu0
    %v1536 = vadd.f32 0.0, %v1535
    %v1537 = vpop.f32.mrb[0].mxu0
    %v1538 = vadd.f32 0.0, %v1537
    %v1539 = vpop.f32.mrb[0].mxu0
    %v1540 = vadd.f32 0.0, %v1539
    %1541 = vmatprep.mubr.bf16.mxu0 0
    %1542 = vmatmul.mubr.bf16.gmra.mrb[0].mxu0 %v1468
    %v1543 = vpop.f32.mrb[0].mxu0
    %v1544 = vadd.f32 0.0, %v1543
    %v1545 = vpop.f32.mrb[0].mxu0
    %v1546 = vadd.f32 0.0, %v1545
    %v1547 = vpop.f32.mrb[0].mxu0
    %v1548 = vadd.f32 0.0, %v1547
    %v1549 = vpop.f32.mrb[0].mxu0
    %v1550 = vadd.f32 0.0, %v1549
    %1551 = vmatprep.mubr.bf16.mxu0 0
    %1552 = vmatmul.mubr.bf16.gmra.mrb[0].mxu0 %v1469
    %v1553 = vpop.f32.mrb[0].mxu0
    %v1554 = vadd.f32 0.0, %v1553
    %v1555 = vpop.f32.mrb[0].mxu0
    %v1556 = vadd.f32 0.0, %v1555
    %v1557 = vpop.f32.mrb[0].mxu0
    %v1558 = vadd.f32 0.0, %v1557
    %v1559 = vpop.f32.mrb[0].mxu0
    %v1560 = vadd.f32 0.0, %v1559
    %1561 = vmatprep.mubr.bf16.mxu0 0
    %1562 = vmatmul.mubr.bf16.gmra.mrb[0].mxu0 %v1470
    %v1563 = vpop.f32.mrb[0].mxu0
    %v1564 = vadd.f32 0.0, %v1563
    %v1565 = vpop.f32.mrb[0].mxu0
    %v1566 = vadd.f32 0.0, %v1565
    %v1567 = vpop.f32.mrb[0].mxu0
    %v1568 = vadd.f32 0.0, %v1567
    %v1569 = vpop.f32.mrb[0].mxu0
    %v1570 = vadd.f32 0.0, %v1569
    %1571 = vmatprep.mubr.bf16.mxu0 0
    %1572 = vmatmul.mubr.bf16.gmra.mrb[0].mxu0 %v1471
    %v1573 = vpop.f32.mrb[0].mxu0
    %v1574 = vadd.f32 0.0, %v1573
    %v1575 = vpop.f32.mrb[0].mxu0
    %v1576 = vadd.f32 0.0, %v1575
    %v1577 = vpop.f32.mrb[0].mxu0
    %v1578 = vadd.f32 0.0, %v1577
    %v1579 = vpop.f32.mrb[0].mxu0
    %v1580 = vadd.f32 0.0, %v1579
    %1581 = vmatprep.mubr.bf16.mxu0 0
    %1582 = vmatmul.mubr.bf16.gmra.mrb[0].mxu0 %v1472
    %v1583 = vpop.f32.mrb[0].mxu0
    %v1584 = vadd.f32 0.0, %v1583
    %v1585 = vpop.f32.mrb[0].mxu0
    %v1586 = vadd.f32 0.0, %v1585
    %v1587 = vpop.f32.mrb[0].mxu0
    %v1588 = vadd.f32 0.0, %v1587
    %v1589 = vpop.f32.mrb[0].mxu0
    %v1590 = vadd.f32 0.0, %v1589
    %1591 = vmatprep.mubr.bf16.mxu0 0
    %1592 = vmatmul.mubr.bf16.gmra.mrb[0].mxu0 %v1473
    %v1593 = vpop.f32.mrb[0].mxu0
    %v1594 = vadd.f32 0.0, %v1593
    %v1595 = vpop.f32.mrb[0].mxu0
    %v1596 = vadd.f32 0.0, %v1595
    %v1597 = vpop.f32.mrb[0].mxu0
    %v1598 = vadd.f32 0.0, %v1597
    %v1599 = vpop.f32.mrb[0].mxu0
    %v1600 = vadd.f32 0.0, %v1599
    %1601 = vmatprep.mubr.bf16.mxu0 0
    %1602 = vmatmul.mubr.bf16.gmra.mrb[0].mxu0 %v1474
    %v1603 = vpop.f32.mrb[0].mxu0
    %v1604 = vadd.f32 0.0, %v1603
    %v1605 = vpop.f32.mrb[0].mxu0
    %v1606 = vadd.f32 0.0, %v1605
    %v1607 = vpop.f32.mrb[0].mxu0
    %v1608 = vadd.f32 0.0, %v1607
    %v1609 = vpop.f32.mrb[0].mxu0
    %v1610 = vadd.f32 0.0, %v1609
    %1611 = vmatprep.mubr.bf16.mxu0 0
    %1612 = vmatmul.mubr.bf16.gmra.mrb[0].mxu0 %v1475
    %v1613 = vpop.f32.mrb[0].mxu0
    %v1614 = vadd.f32 0.0, %v1613
    %v1615 = vpop.f32.mrb[0].mxu0
    %v1616 = vadd.f32 0.0, %v1615
    %v1617 = vpop.f32.mrb[0].mxu0
    %v1618 = vadd.f32 0.0, %v1617
    %v1619 = vpop.f32.mrb[0].mxu0
    %v1620 = vadd.f32 0.0, %v1619
    %1621 = vmatprep.mubr.bf16.mxu0 0
    %1622 = vmatmul.mubr.bf16.gmra.mrb[0].mxu0 %v1476
    %v1623 = vpop.f32.mrb[0].mxu0
    %v1624 = vadd.f32 0.0, %v1623
    %v1625 = vpop.f32.mrb[0].mxu0
    %v1626 = vadd.f32 0.0, %v1625
    %v1627 = vpop.f32.mrb[0].mxu0
    %v1628 = vadd.f32 0.0, %v1627
    %v1629 = vpop.f32.mrb[0].mxu0
    %v1630 = vadd.f32 0.0, %v1629
    %1631 = vmatprep.mubr.bf16.mxu0 0
    %1632 = vmatmul.mubr.bf16.gmra.mrb[0].mxu0 %v1477
    %v1633 = vpop.f32.mrb[0].mxu0
    %v1634 = vadd.f32 0.0, %v1633
    %v1635 = vpop.f32.mrb[0].mxu0
    %v1636 = vadd.f32 0.0, %v1635
    %v1637 = vpop.f32.mrb[0].mxu0
    %v1638 = vadd.f32 0.0, %v1637
    %v1639 = vpop.f32.mrb[0].mxu0
    %v1640 = vadd.f32 0.0, %v1639
    %1641 = vmatprep.mubr.bf16.mxu0 0
    %1642 = vmatmul.mubr.bf16.gmra.mrb[0].mxu0 %v1478
    %v1643 = vpop.f32.mrb[0].mxu0
    %v1644 = vadd.f32 0.0, %v1643
    %v1645 = vpop.f32.mrb[0].mxu0
    %v1646 = vadd.f32 0.0, %v1645
    %v1647 = vpop.f32.mrb[0].mxu0
    %v1648 = vadd.f32 0.0, %v1647
    %v1649 = vpop.f32.mrb[0].mxu0
    %v1650 = vadd.f32 0.0, %v1649
    %1651 = vmatprep.mubr.bf16.mxu0 0
    %1652 = vmatmul.mubr.bf16.gmra.mrb[0].mxu0 %v1479
    %v1653 = vpop.f32.mrb[0].mxu0
    %v1654 = vadd.f32 0.0, %v1653
    %v1655 = vpop.f32.mrb[0].mxu0
    %v1656 = vadd.f32 0.0, %v1655
    %v1657 = vpop.f32.mrb[0].mxu0
    %v1658 = vadd.f32 0.0, %v1657
    %v1659 = vpop.f32.mrb[0].mxu0
    %v1660 = vadd.f32 0.0, %v1659
    %1661 = vmatprep.mubr.bf16.mxu0 0
    %1662 = vmatmul.mubr.bf16.gmra.mrb[0].mxu0 %v1480
    %v1663 = vpop.f32.mrb[0].mxu0
    %v1664 = vadd.f32 0.0, %v1663
    %v1665 = vpop.f32.mrb[0].mxu0
    %v1666 = vadd.f32 0.0, %v1665
    %v1667 = vpop.f32.mrb[0].mxu0
    %v1668 = vadd.f32 0.0, %v1667
    %v1669 = vpop.f32.mrb[0].mxu0
    %v1670 = vadd.f32 0.0, %v1669
    %1671 = vmatprep.mubr.bf16.mxu0 0
    %1672 = vmatmul.mubr.bf16.gmra.mrb[0].mxu0 %v1481
    %v1673 = vpop.f32.mrb[0].mxu0
    %v1674 = vadd.f32 0.0, %v1673
    %v1675 = vpop.f32.mrb[0].mxu0
    %v1676 = vadd.f32 0.0, %v1675
    %v1677 = vpop.f32.mrb[0].mxu0
    %v1678 = vadd.f32 0.0, %v1677
    %v1679 = vpop.f32.mrb[0].mxu0
    %v1680 = vadd.f32 0.0, %v1679
    %1681 = vmatprep.mubr.bf16.mxu0 0
    %1682 = vmatmul.mubr.bf16.gmra.mrb[0].mxu0 %v1482
    %v1683 = vpop.f32.mrb[0].mxu0
    %v1684 = vadd.f32 0.0, %v1683
    %v1685 = vpop.f32.mrb[0].mxu0
    %v1686 = vadd.f32 0.0, %v1685
    %v1687 = vpop.f32.mrb[0].mxu0
    %v1688 = vadd.f32 0.0, %v1687
    %v1689 = vpop.f32.mrb[0].mxu0
    %v1690 = vadd.f32 0.0, %v1689
    %1691 = vdwg.mxu0
    %v1692 = vmul.f32 %v1083, %v1534
    %v1693 = vmul.f32 %v1085, %v1536
    %v1694 = vmul.f32 %v1087, %v1538
    %v1695 = vmul.f32 %v1089, %v1540
    %v1696 = vmul.f32 %v1093, %v1544
    %v1697 = vmul.f32 %v1095, %v1546
    %v1698 = vmul.f32 %v1097, %v1548
    %v1699 = vmul.f32 %v1099, %v1550
    %v1700 = vmul.f32 %v1103, %v1554
    %v1701 = vmul.f32 %v1105, %v1556
    %v1702 = vmul.f32 %v1107, %v1558
    %v1703 = vmul.f32 %v1109, %v1560
    %v1704 = vmul.f32 %v1113, %v1564
    %v1705 = vmul.f32 %v1115, %v1566
    %v1706 = vmul.f32 %v1117, %v1568
    %v1707 = vmul.f32 %v1119, %v1570
    %v1708 = vmul.f32 %v1123, %v1574
    %v1709 = vmul.f32 %v1125, %v1576
    %v1710 = vmul.f32 %v1127, %v1578
    %v1711 = vmul.f32 %v1129, %v1580
    %v1712 = vmul.f32 %v1133, %v1584
    %v1713 = vmul.f32 %v1135, %v1586
    %v1714 = vmul.f32 %v1137, %v1588
    %v1715 = vmul.f32 %v1139, %v1590
    %v1716 = vmul.f32 %v1143, %v1594
    %v1717 = vmul.f32 %v1145, %v1596
    %v1718 = vmul.f32 %v1147, %v1598
    %v1719 = vmul.f32 %v1149, %v1600
    %v1720 = vmul.f32 %v1153, %v1604
    %v1721 = vmul.f32 %v1155, %v1606
    %v1722 = vmul.f32 %v1157, %v1608
    %v1723 = vmul.f32 %v1159, %v1610
    %v1724 = vmul.f32 %v1163, %v1614
    %v1725 = vmul.f32 %v1165, %v1616
    %v1726 = vmul.f32 %v1167, %v1618
    %v1727 = vmul.f32 %v1169, %v1620
    %v1728 = vmul.f32 %v1173, %v1624
    %v1729 = vmul.f32 %v1175, %v1626
    %v1730 = vmul.f32 %v1177, %v1628
    %v1731 = vmul.f32 %v1179, %v1630
    %v1732 = vmul.f32 %v1183, %v1634
    %v1733 = vmul.f32 %v1185, %v1636
    %v1734 = vmul.f32 %v1187, %v1638
    %v1735 = vmul.f32 %v1189, %v1640
    %v1736 = vmul.f32 %v1193, %v1644
    %v1737 = vmul.f32 %v1195, %v1646
    %v1738 = vmul.f32 %v1197, %v1648
    %v1739 = vmul.f32 %v1199, %v1650
    %v1740 = vmul.f32 %v1203, %v1654
    %v1741 = vmul.f32 %v1205, %v1656
    %v1742 = vmul.f32 %v1207, %v1658
    %v1743 = vmul.f32 %v1209, %v1660
    %v1744 = vmul.f32 %v1213, %v1664
    %v1745 = vmul.f32 %v1215, %v1666
    %v1746 = vmul.f32 %v1217, %v1668
    %v1747 = vmul.f32 %v1219, %v1670
    %v1748 = vmul.f32 %v1223, %v1674
    %v1749 = vmul.f32 %v1225, %v1676
    %v1750 = vmul.f32 %v1227, %v1678
    %v1751 = vmul.f32 %v1229, %v1680
    %v1752 = vmul.f32 %v1233, %v1684
    %v1753 = vmul.f32 %v1235, %v1686
    %v1754 = vmul.f32 %v1237, %v1688
    %v1755 = vmul.f32 %v1239, %v1690
    %v1756 = vpack.c.bf16 %v1694, %v1692
    %v1757 = vpack.c.bf16 %v1695, %v1693
    %v1758 = vpack.c.bf16 %v1698, %v1696
    %v1759 = vpack.c.bf16 %v1699, %v1697
    %v1760 = vpack.c.bf16 %v1702, %v1700
    %v1761 = vpack.c.bf16 %v1703, %v1701
    %v1762 = vpack.c.bf16 %v1706, %v1704
    %v1763 = vpack.c.bf16 %v1707, %v1705
    %v1764 = vpack.c.bf16 %v1710, %v1708
    %v1765 = vpack.c.bf16 %v1711, %v1709
    %v1766 = vpack.c.bf16 %v1714, %v1712
    %v1767 = vpack.c.bf16 %v1715, %v1713
    %v1768 = vpack.c.bf16 %v1718, %v1716
    %v1769 = vpack.c.bf16 %v1719, %v1717
    %v1770 = vpack.c.bf16 %v1722, %v1720
    %v1771 = vpack.c.bf16 %v1723, %v1721
    %v1772 = vpack.c.bf16 %v1726, %v1724
    %v1773 = vpack.c.bf16 %v1727, %v1725
    %v1774 = vpack.c.bf16 %v1730, %v1728
    %v1775 = vpack.c.bf16 %v1731, %v1729
    %v1776 = vpack.c.bf16 %v1734, %v1732
    %v1777 = vpack.c.bf16 %v1735, %v1733
    %v1778 = vpack.c.bf16 %v1738, %v1736
    %v1779 = vpack.c.bf16 %v1739, %v1737
    %v1780 = vpack.c.bf16 %v1742, %v1740
    %v1781 = vpack.c.bf16 %v1743, %v1741
    %v1782 = vpack.c.bf16 %v1746, %v1744
    %v1783 = vpack.c.bf16 %v1747, %v1745
    %v1784 = vpack.c.bf16 %v1750, %v1748
    %v1785 = vpack.c.bf16 %v1751, %v1749
    %v1786 = vpack.c.bf16 %v1754, %v1752
    %v1787 = vpack.c.bf16 %v1755, %v1753
    %v1788 = vld [vmem:[%s11] sm:$0xf]
    %v1789 = vld [vmem:[%s11 + $0x4] sm:$0xf]
    %v1790 = vld [vmem:[%s11 + $0x8] sm:$0xf]
    %v1791 = vld [vmem:[%s11 + $0xc] sm:$0xf]
    %v1792 = vld [vmem:[%s11 + $0x10] sm:$0xf]
    %v1793 = vld [vmem:[%s11 + $0x14] sm:$0xf]
    %v1794 = vld [vmem:[%s11 + $0x18] sm:$0xf]
    %v1795 = vld [vmem:[%s11 + $0x1c] sm:$0xf]
    %v1796 = vld [vmem:[%s11 + $0x20] sm:$0xf]
    %v1797 = vld [vmem:[%s11 + $0x24] sm:$0xf]
    %v1798 = vld [vmem:[%s11 + $0x28] sm:$0xf]
    %v1799 = vld [vmem:[%s11 + $0x2c] sm:$0xf]
    %v1800 = vld [vmem:[%s11 + $0x30] sm:$0xf]
    %v1801 = vld [vmem:[%s11 + $0x34] sm:$0xf]
    %v1802 = vld [vmem:[%s11 + $0x38] sm:$0xf]
    %v1803 = vld [vmem:[%s11 + $0x3c] sm:$0xf]
    %v1804 = vld [vmem:[%s11 + $0x40] sm:$0xf]
    %v1805 = vld [vmem:[%s11 + $0x44] sm:$0xf]
    %v1806 = vld [vmem:[%s11 + $0x48] sm:$0xf]
    %v1807 = vld [vmem:[%s11 + $0x4c] sm:$0xf]
    %v1808 = vld [vmem:[%s11 + $0x50] sm:$0xf]
    %v1809 = vld [vmem:[%s11 + $0x54] sm:$0xf]
    %v1810 = vld [vmem:[%s11 + $0x58] sm:$0xf]
    %v1811 = vld [vmem:[%s11 + $0x5c] sm:$0xf]
    %v1812 = vld [vmem:[%s11 + $0x60] sm:$0xf]
    %v1813 = vld [vmem:[%s11 + $0x64] sm:$0xf]
    %v1814 = vld [vmem:[%s11 + $0x68] sm:$0xf]
    %v1815 = vld [vmem:[%s11 + $0x6c] sm:$0xf]
    %v1816 = vld [vmem:[%s11 + $0x70] sm:$0xf]
    %v1817 = vld [vmem:[%s11 + $0x74] sm:$0xf]
    %v1818 = vld [vmem:[%s11 + $0x78] sm:$0xf]
    %v1819 = vld [vmem:[%s11 + $0x7c] sm:$0xf]
    %v1852 = vunpack.c.l.b16 %v1788
    %v1853 = vunpack.c.l.b16 %v1789
    %v1854 = vunpack.c.l.b16 %v1790
    %v1855 = vunpack.c.l.b16 %v1791
    %v1856 = vunpack.c.l.b16 %v1792
    %v1857 = vunpack.c.l.b16 %v1793
    %v1858 = vunpack.c.l.b16 %v1794
    %v1859 = vunpack.c.l.b16 %v1795
    %v1860 = vunpack.c.l.b16 %v1796
    %v1861 = vunpack.c.l.b16 %v1797
    %v1862 = vunpack.c.l.b16 %v1798
    %v1863 = vunpack.c.l.b16 %v1799
    %v1864 = vunpack.c.l.b16 %v1800
    %v1865 = vunpack.c.l.b16 %v1801
    %v1866 = vunpack.c.l.b16 %v1802
    %v1867 = vunpack.c.l.b16 %v1803
    %v1868 = vunpack.c.l.b16 %v1804
    %v1869 = vunpack.c.l.b16 %v1805
    %v1870 = vunpack.c.l.b16 %v1806
    %v1871 = vunpack.c.l.b16 %v1807
    %v1872 = vunpack.c.l.b16 %v1808
    %v1873 = vunpack.c.l.b16 %v1809
    %v1874 = vunpack.c.l.b16 %v1810
    %v1875 = vunpack.c.l.b16 %v1811
    %v1876 = vunpack.c.l.b16 %v1812
    %v1877 = vunpack.c.l.b16 %v1813
    %v1878 = vunpack.c.l.b16 %v1814
    %v1879 = vunpack.c.l.b16 %v1815
    %v1880 = vunpack.c.l.b16 %v1816
    %v1881 = vunpack.c.l.b16 %v1817
    %v1882 = vunpack.c.l.b16 %v1818
    %v1883 = vunpack.c.l.b16 %v1819
    %v1884 = vpack.c.b16 %v1853, %v1852
    %v1885 = vpack.c.b16 %v1855, %v1854
    %v1886 = vpack.c.b16 %v1857, %v1856
    %v1887 = vpack.c.b16 %v1859, %v1858
    %v1888 = vpack.c.b16 %v1861, %v1860
    %v1889 = vpack.c.b16 %v1863, %v1862
    %v1890 = vpack.c.b16 %v1865, %v1864
    %v1891 = vpack.c.b16 %v1867, %v1866
    %v1892 = vpack.c.b16 %v1869, %v1868
    %v1893 = vpack.c.b16 %v1871, %v1870
    %v1894 = vpack.c.b16 %v1873, %v1872
    %v1895 = vpack.c.b16 %v1875, %v1874
    %v1896 = vpack.c.b16 %v1877, %v1876
    %v1897 = vpack.c.b16 %v1879, %v1878
    %v1898 = vpack.c.b16 %v1881, %v1880
    %v1899 = vpack.c.b16 %v1883, %v1882
    %1916 = vmatprep.subr.bf16.mxu0 0
    %1917 = vmatpush1.bf16.msra.mxu0 %v1884
    %1918 = vmatprep.subr.bf16.mxu0 0
    %1919 = vmatpush1.bf16.msra.mxu0 %v1885
    %1920 = vmatprep.subr.bf16.mxu0 0
    %1921 = vmatpush1.bf16.msra.mxu0 %v1886
    %1922 = vmatprep.subr.bf16.mxu0 0
    %1923 = vmatpush1.bf16.msra.mxu0 %v1887
    %1924 = vmatprep.subr.bf16.mxu0 0
    %1925 = vmatpush1.bf16.msra.mxu0 %v1888
    %1926 = vmatprep.subr.bf16.mxu0 0
    %1927 = vmatpush1.bf16.msra.mxu0 %v1889
    %1928 = vmatprep.subr.bf16.mxu0 0
    %1929 = vmatpush1.bf16.msra.mxu0 %v1890
    %1930 = vmatprep.subr.bf16.mxu0 0
    %1931 = vmatpush1.bf16.msra.mxu0 %v1891
    %1932 = vmatprep.subr.bf16.mxu0 0
    %1933 = vmatpush1.bf16.msra.mxu0 %v1892
    %1934 = vmatprep.subr.bf16.mxu0 0
    %1935 = vmatpush1.bf16.msra.mxu0 %v1893
    %1936 = vmatprep.subr.bf16.mxu0 0
    %1937 = vmatpush1.bf16.msra.mxu0 %v1894
    %1938 = vmatprep.subr.bf16.mxu0 0
    %1939 = vmatpush1.bf16.msra.mxu0 %v1895
    %1940 = vmatprep.subr.bf16.mxu0 0
    %1941 = vmatpush1.bf16.msra.mxu0 %v1896
    %1942 = vmatprep.subr.bf16.mxu0 0
    %1943 = vmatpush1.bf16.msra.mxu0 %v1897
    %1944 = vmatprep.subr.bf16.mxu0 0
    %1945 = vmatpush1.bf16.msra.mxu0 %v1898
    %1946 = vmatprep.subr.bf16.mxu0 0
    %1947 = vmatpush1.bf16.msra.mxu0 %v1899
    %1948 = vmatprep.mubr.bf16.mxu0 %v1757
    %1949 = vmatmul.mubr.bf16.gmra.mrb[0].mxu0 %v1756
    %v1950 = vpop.f32.mrb[0].mxu0
    %v1951 = vadd.f32 0.0, %v1950
    %v1952 = vpop.f32.mrb[0].mxu0
    %v1953 = vpop.f32.mrb[0].mxu0
    %v1954 = vadd.f32 0.0, %v1953
    %v1955 = vpop.f32.mrb[0].mxu0
    %1956 = vmatprep.mubr.bf16.mxu0 %v1759
    %1957 = vmatmul.mubr.bf16.gmra.mrb[0].mxu0 %v1758
    %v1958 = vpop.f32.mrb[0].mxu0
    %v1959 = vadd.f32 0.0, %v1958
    %v1960 = vpop.f32.mrb[0].mxu0
    %v1961 = vpop.f32.mrb[0].mxu0
    %v1962 = vadd.f32 0.0, %v1961
    %v1963 = vpop.f32.mrb[0].mxu0
    %1964 = vmatprep.mubr.bf16.mxu0 %v1761
    %1965 = vmatmul.mubr.bf16.gmra.mrb[0].mxu0 %v1760
    %v1966 = vpop.f32.mrb[0].mxu0
    %v1967 = vadd.f32 0.0, %v1966
    %v1968 = vpop.f32.mrb[0].mxu0
    %v1969 = vpop.f32.mrb[0].mxu0
    %v1970 = vadd.f32 0.0, %v1969
    %v1971 = vpop.f32.mrb[0].mxu0
    %1972 = vmatprep.mubr.bf16.mxu0 %v1763
    %1973 = vmatmul.mubr.bf16.gmra.mrb[0].mxu0 %v1762
    %v1974 = vpop.f32.mrb[0].mxu0
    %v1975 = vadd.f32 0.0, %v1974
    %v1976 = vpop.f32.mrb[0].mxu0
    %v1977 = vpop.f32.mrb[0].mxu0
    %v1978 = vadd.f32 0.0, %v1977
    %v1979 = vpop.f32.mrb[0].mxu0
    %1980 = vmatprep.mubr.bf16.mxu0 %v1765
    %1981 = vmatmul.mubr.bf16.gmra.mrb[0].mxu0 %v1764
    %v1982 = vpop.f32.mrb[0].mxu0
    %v1983 = vadd.f32 0.0, %v1982
    %v1984 = vpop.f32.mrb[0].mxu0
    %v1985 = vpop.f32.mrb[0].mxu0
    %v1986 = vadd.f32 0.0, %v1985
    %v1987 = vpop.f32.mrb[0].mxu0
    %1988 = vmatprep.mubr.bf16.mxu0 %v1767
    %1989 = vmatmul.mubr.bf16.gmra.mrb[0].mxu0 %v1766
    %v1990 = vpop.f32.mrb[0].mxu0
    %v1991 = vadd.f32 0.0, %v1990
    %v1992 = vpop.f32.mrb[0].mxu0
    %v1993 = vpop.f32.mrb[0].mxu0
    %v1994 = vadd.f32 0.0, %v1993
    %v1995 = vpop.f32.mrb[0].mxu0
    %1996 = vmatprep.mubr.bf16.mxu0 %v1769
    %1997 = vmatmul.mubr.bf16.gmra.mrb[0].mxu0 %v1768
    %v1998 = vpop.f32.mrb[0].mxu0
    %v1999 = vadd.f32 0.0, %v1998
    %v2000 = vpop.f32.mrb[0].mxu0
    %v2001 = vpop.f32.mrb[0].mxu0
    %v2002 = vadd.f32 0.0, %v2001
    %v2003 = vpop.f32.mrb[0].mxu0
    %2004 = vmatprep.mubr.bf16.mxu0 %v1771
    %2005 = vmatmul.mubr.bf16.gmra.mrb[0].mxu0 %v1770
    %v2006 = vpop.f32.mrb[0].mxu0
    %v2007 = vadd.f32 0.0, %v2006
    %v2008 = vpop.f32.mrb[0].mxu0
    %v2009 = vpop.f32.mrb[0].mxu0
    %v2010 = vadd.f32 0.0, %v2009
    %v2011 = vpop.f32.mrb[0].mxu0
    %2012 = vmatprep.mubr.bf16.mxu0 %v1773
    %2013 = vmatmul.mubr.bf16.gmra.mrb[0].mxu0 %v1772
    %v2014 = vpop.f32.mrb[0].mxu0
    %v2015 = vadd.f32 0.0, %v2014
    %v2016 = vpop.f32.mrb[0].mxu0
    %v2017 = vpop.f32.mrb[0].mxu0
    %v2018 = vadd.f32 0.0, %v2017
    %v2019 = vpop.f32.mrb[0].mxu0
    %2020 = vmatprep.mubr.bf16.mxu0 %v1775
    %2021 = vmatmul.mubr.bf16.gmra.mrb[0].mxu0 %v1774
    %v2022 = vpop.f32.mrb[0].mxu0
    %v2023 = vadd.f32 0.0, %v2022
    %v2024 = vpop.f32.mrb[0].mxu0
    %v2025 = vpop.f32.mrb[0].mxu0
    %v2026 = vadd.f32 0.0, %v2025
    %v2027 = vpop.f32.mrb[0].mxu0
    %2028 = vmatprep.mubr.bf16.mxu0 %v1777
    %2029 = vmatmul.mubr.bf16.gmra.mrb[0].mxu0 %v1776
    %v2030 = vpop.f32.mrb[0].mxu0
    %v2031 = vadd.f32 0.0, %v2030
    %v2032 = vpop.f32.mrb[0].mxu0
    %v2033 = vpop.f32.mrb[0].mxu0
    %v2034 = vadd.f32 0.0, %v2033
    %v2035 = vpop.f32.mrb[0].mxu0
    %2036 = vmatprep.mubr.bf16.mxu0 %v1779
    %2037 = vmatmul.mubr.bf16.gmra.mrb[0].mxu0 %v1778
    %v2038 = vpop.f32.mrb[0].mxu0
    %v2039 = vadd.f32 0.0, %v2038
    %v2040 = vpop.f32.mrb[0].mxu0
    %v2041 = vpop.f32.mrb[0].mxu0
    %v2042 = vadd.f32 0.0, %v2041
    %v2043 = vpop.f32.mrb[0].mxu0
    %2044 = vmatprep.mubr.bf16.mxu0 %v1781
    %2045 = vmatmul.mubr.bf16.gmra.mrb[0].mxu0 %v1780
    %v2046 = vpop.f32.mrb[0].mxu0
    %v2047 = vadd.f32 0.0, %v2046
    %v2048 = vpop.f32.mrb[0].mxu0
    %v2049 = vpop.f32.mrb[0].mxu0
    %v2050 = vadd.f32 0.0, %v2049
    %v2051 = vpop.f32.mrb[0].mxu0
    %2052 = vmatprep.mubr.bf16.mxu0 %v1783
    %2053 = vmatmul.mubr.bf16.gmra.mrb[0].mxu0 %v1782
    %v2054 = vpop.f32.mrb[0].mxu0
    %v2055 = vadd.f32 0.0, %v2054
    %v2056 = vpop.f32.mrb[0].mxu0
    %v2057 = vpop.f32.mrb[0].mxu0
    %v2058 = vadd.f32 0.0, %v2057
    %v2059 = vpop.f32.mrb[0].mxu0
    %2060 = vmatprep.mubr.bf16.mxu0 %v1785
    %2061 = vmatmul.mubr.bf16.gmra.mrb[0].mxu0 %v1784
    %v2062 = vpop.f32.mrb[0].mxu0
    %v2063 = vadd.f32 0.0, %v2062
    %v2064 = vpop.f32.mrb[0].mxu0
    %v2065 = vpop.f32.mrb[0].mxu0
    %v2066 = vadd.f32 0.0, %v2065
    %v2067 = vpop.f32.mrb[0].mxu0
    %2068 = vmatprep.mubr.bf16.mxu0 %v1787
    %2069 = vmatmul.mubr.bf16.gmra.mrb[0].mxu0 %v1786
    %v2070 = vpop.f32.mrb[0].mxu0
    %v2071 = vadd.f32 0.0, %v2070
    %v2072 = vpop.f32.mrb[0].mxu0
    %v2073 = vpop.f32.mrb[0].mxu0
    %v2074 = vadd.f32 0.0, %v2073
    %v2075 = vpop.f32.mrb[0].mxu0
    %2076 = vdwg.mxu0
    %v2077 = vlaneseq
    %v2078 = vshrl.u32 %v2077, 7
    %v2079 = vadd.s32 %v2078, 8
    %v2080 = vadd.s32 %v2078, 16
    %v2081 = vadd.s32 %v2078, 24
    %v2082 = vadd.s32 %v2078, 32
    %v2083 = vadd.s32 %v2078, 40
    %v2084 = vadd.s32 %v2078, 48
    %v2085 = vadd.s32 %v2078, 56
    %v2086 = vadd.s32 %v2078, 64
    %v2087 = vadd.s32 %v2078, 72
    %v2088 = vadd.s32 %v2078, 80
    %v2089 = vadd.s32 %v2078, 88
    %v2090 = vadd.s32 %v2078, 96
    %v2091 = vadd.s32 %v2078, 104
    %v2092 = vadd.s32 %v2078, 112
    %v2093 = vadd.s32 %v2078, 120
    %v2094 = vld [vmem:[%s4] sm:$0x3]
    %v2095 = vlaneseq
    %v2096 = vshrl.u32 %v2095, 7
    %v2097 = vsub.s32 0, %v2096
    %v2098 = vrot.slane %v2094, %v2097
    %v2099 = vlaneseq
    %v2100 = vshrl.u32 %v2099, 7
    %v2101 = vsub.s32 1, %v2100
    %v2102 = vrot.slane %v2094, %v2101
    %vm2103 = vcmp.eq.s32.totalorder %v2098, %v2078
    %vm2104 = vcmp.eq.s32.totalorder %v2102, %v2078
    %vm2105 = vcmp.eq.s32.totalorder %v2098, %v2079
    %vm2106 = vcmp.eq.s32.totalorder %v2102, %v2079
    %vm2107 = vcmp.eq.s32.totalorder %v2098, %v2080
    %vm2108 = vcmp.eq.s32.totalorder %v2102, %v2080
    %vm2109 = vcmp.eq.s32.totalorder %v2098, %v2081
    %vm2110 = vcmp.eq.s32.totalorder %v2102, %v2081
    %vm2111 = vcmp.eq.s32.totalorder %v2098, %v2082
    %vm2112 = vcmp.eq.s32.totalorder %v2102, %v2082
    %vm2113 = vcmp.eq.s32.totalorder %v2098, %v2083
    %vm2114 = vcmp.eq.s32.totalorder %v2102, %v2083
    %vm2115 = vcmp.eq.s32.totalorder %v2098, %v2084
    %vm2116 = vcmp.eq.s32.totalorder %v2102, %v2084
    %vm2117 = vcmp.eq.s32.totalorder %v2098, %v2085
    %vm2118 = vcmp.eq.s32.totalorder %v2102, %v2085
    %vm2119 = vcmp.eq.s32.totalorder %v2098, %v2086
    %vm2120 = vcmp.eq.s32.totalorder %v2102, %v2086
    %vm2121 = vcmp.eq.s32.totalorder %v2098, %v2087
    %vm2122 = vcmp.eq.s32.totalorder %v2102, %v2087
    %vm2123 = vcmp.eq.s32.totalorder %v2098, %v2088
    %vm2124 = vcmp.eq.s32.totalorder %v2102, %v2088
    %vm2125 = vcmp.eq.s32.totalorder %v2098, %v2089
    %vm2126 = vcmp.eq.s32.totalorder %v2102, %v2089
    %vm2127 = vcmp.eq.s32.totalorder %v2098, %v2090
    %vm2128 = vcmp.eq.s32.totalorder %v2102, %v2090
    %vm2129 = vcmp.eq.s32.totalorder %v2098, %v2091
    %vm2130 = vcmp.eq.s32.totalorder %v2102, %v2091
    %vm2131 = vcmp.eq.s32.totalorder %v2098, %v2092
    %vm2132 = vcmp.eq.s32.totalorder %v2102, %v2092
    %vm2133 = vcmp.eq.s32.totalorder %v2098, %v2093
    %vm2134 = vcmp.eq.s32.totalorder %v2102, %v2093
    %v2135 = vsel %vm2103, 1, 0
    %v2136 = vsel %vm2104, 1, 0
    %v2137 = vsel %vm2105, 1, 0
    %v2138 = vsel %vm2106, 1, 0
    %v2139 = vsel %vm2107, 1, 0
    %v2140 = vsel %vm2108, 1, 0
    %v2141 = vsel %vm2109, 1, 0
    %v2142 = vsel %vm2110, 1, 0
    %v2143 = vsel %vm2111, 1, 0
    %v2144 = vsel %vm2112, 1, 0
    %v2145 = vsel %vm2113, 1, 0
    %v2146 = vsel %vm2114, 1, 0
    %v2147 = vsel %vm2115, 1, 0
    %v2148 = vsel %vm2116, 1, 0
    %v2149 = vsel %vm2117, 1, 0
    %v2150 = vsel %vm2118, 1, 0
    %v2151 = vsel %vm2119, 1, 0
    %v2152 = vsel %vm2120, 1, 0
    %v2153 = vsel %vm2121, 1, 0
    %v2154 = vsel %vm2122, 1, 0
    %v2155 = vsel %vm2123, 1, 0
    %v2156 = vsel %vm2124, 1, 0
    %v2157 = vsel %vm2125, 1, 0
    %v2158 = vsel %vm2126, 1, 0
    %v2159 = vsel %vm2127, 1, 0
    %v2160 = vsel %vm2128, 1, 0
    %v2161 = vsel %vm2129, 1, 0
    %v2162 = vsel %vm2130, 1, 0
    %v2163 = vsel %vm2131, 1, 0
    %v2164 = vsel %vm2132, 1, 0
    %v2165 = vsel %vm2133, 1, 0
    %v2166 = vsel %vm2134, 1, 0
    %v2167 = vcvt.s32.f32 %v2135
    %v2168 = vcvt.s32.f32 %v2136
    %v2169 = vcvt.s32.f32 %v2137
    %v2170 = vcvt.s32.f32 %v2138
    %v2171 = vcvt.s32.f32 %v2139
    %v2172 = vcvt.s32.f32 %v2140
    %v2173 = vcvt.s32.f32 %v2141
    %v2174 = vcvt.s32.f32 %v2142
    %v2175 = vcvt.s32.f32 %v2143
    %v2176 = vcvt.s32.f32 %v2144
    %v2177 = vcvt.s32.f32 %v2145
    %v2178 = vcvt.s32.f32 %v2146
    %v2179 = vcvt.s32.f32 %v2147
    %v2180 = vcvt.s32.f32 %v2148
    %v2181 = vcvt.s32.f32 %v2149
    %v2182 = vcvt.s32.f32 %v2150
    %v2183 = vcvt.s32.f32 %v2151
    %v2184 = vcvt.s32.f32 %v2152
    %v2185 = vcvt.s32.f32 %v2153
    %v2186 = vcvt.s32.f32 %v2154
    %v2187 = vcvt.s32.f32 %v2155
    %v2188 = vcvt.s32.f32 %v2156
    %v2189 = vcvt.s32.f32 %v2157
    %v2190 = vcvt.s32.f32 %v2158
    %v2191 = vcvt.s32.f32 %v2159
    %v2192 = vcvt.s32.f32 %v2160
    %v2193 = vcvt.s32.f32 %v2161
    %v2194 = vcvt.s32.f32 %v2162
    %v2195 = vcvt.s32.f32 %v2163
    %v2196 = vcvt.s32.f32 %v2164
    %v2197 = vcvt.s32.f32 %v2165
    %v2198 = vcvt.s32.f32 %v2166
    %v2199 = vld [vmem:[#allocation4] sm:$0xff]
    %v2200 = vld [vmem:[#allocation4 + $0x8] sm:$0xff]
    %v2201 = vld [vmem:[#allocation4 + $0x10] sm:$0xff]
    %v2202 = vld [vmem:[#allocation4 + $0x18] sm:$0xff]
    %v2203 = vld [vmem:[#allocation4 + $0x20] sm:$0xff]
    %v2204 = vld [vmem:[#allocation4 + $0x28] sm:$0xff]
    %v2205 = vld [vmem:[#allocation4 + $0x30] sm:$0xff]
    %v2206 = vld [vmem:[#allocation4 + $0x38] sm:$0xff]
    %v2207 = vld [vmem:[#allocation4 + $0x40] sm:$0xff]
    %v2208 = vld [vmem:[#allocation4 + $0x48] sm:$0xff]
    %v2209 = vld [vmem:[#allocation4 + $0x50] sm:$0xff]
    %v2210 = vld [vmem:[#allocation4 + $0x58] sm:$0xff]
    %v2211 = vld [vmem:[#allocation4 + $0x60] sm:$0xff]
    %v2212 = vld [vmem:[#allocation4 + $0x68] sm:$0xff]
    %v2213 = vld [vmem:[#allocation4 + $0x70] sm:$0xff]
    %v2214 = vld [vmem:[#allocation4 + $0x78] sm:$0xff]
    %2215 = vmatprep.subr.mxu0 0.0
    %2216 = vmatpush1.msra.mxu0 %v1951
    %2217 = vmatprep.subr.mxu0 0.0
    %2218 = vmatpush1.msra.mxu0 %v1954
    %2219 = vmatprep.subr.mxu0 0.0
    %2220 = vmatpush1.msra.mxu0 %v1959
    %2221 = vmatprep.subr.mxu0 0.0
    %2222 = vmatpush1.msra.mxu0 %v1962
    %2223 = vmatprep.subr.mxu0 0.0
    %2224 = vmatpush1.msra.mxu0 %v1967
    %2225 = vmatprep.subr.mxu0 0.0
    %2226 = vmatpush1.msra.mxu0 %v1970
    %2227 = vmatprep.subr.mxu0 0.0
    %2228 = vmatpush1.msra.mxu0 %v1975
    %2229 = vmatprep.subr.mxu0 0.0
    %2230 = vmatpush1.msra.mxu0 %v1978
    %2231 = vmatprep.subr.mxu0 0.0
    %2232 = vmatpush1.msra.mxu0 %v1983
    %2233 = vmatprep.subr.mxu0 0.0
    %2234 = vmatpush1.msra.mxu0 %v1986
    %2235 = vmatprep.subr.mxu0 0.0
    %2236 = vmatpush1.msra.mxu0 %v1991
    %2237 = vmatprep.subr.mxu0 0.0
    %2238 = vmatpush1.msra.mxu0 %v1994
    %2239 = vmatprep.subr.mxu0 0.0
    %2240 = vmatpush1.msra.mxu0 %v1999
    %2241 = vmatprep.subr.mxu0 0.0
    %2242 = vmatpush1.msra.mxu0 %v2002
    %2243 = vmatprep.subr.mxu0 0.0
    %2244 = vmatpush1.msra.mxu0 %v2007
    %2245 = vmatprep.subr.mxu0 0.0
    %2246 = vmatpush1.msra.mxu0 %v2010
    %2247 = vmatprep.subr.mxu0 0.0
    %2248 = vmatpush1.msra.mxu0 %v2015
    %2249 = vmatprep.subr.mxu0 0.0
    %2250 = vmatpush1.msra.mxu0 %v2018
    %2251 = vmatprep.subr.mxu0 0.0
    %2252 = vmatpush1.msra.mxu0 %v2023
    %2253 = vmatprep.subr.mxu0 0.0
    %2254 = vmatpush1.msra.mxu0 %v2026
    %2255 = vmatprep.subr.mxu0 0.0
    %2256 = vmatpush1.msra.mxu0 %v2031
    %2257 = vmatprep.subr.mxu0 0.0
    %2258 = vmatpush1.msra.mxu0 %v2034
    %2259 = vmatprep.subr.mxu0 0.0
    %2260 = vmatpush1.msra.mxu0 %v2039
    %2261 = vmatprep.subr.mxu0 0.0
    %2262 = vmatpush1.msra.mxu0 %v2042
    %2263 = vmatprep.subr.mxu0 0.0
    %2264 = vmatpush1.msra.mxu0 %v2047
    %2265 = vmatprep.subr.mxu0 0.0
    %2266 = vmatpush1.msra.mxu0 %v2050
    %2267 = vmatprep.subr.mxu0 0.0
    %2268 = vmatpush1.msra.mxu0 %v2055
    %2269 = vmatprep.subr.mxu0 0.0
    %2270 = vmatpush1.msra.mxu0 %v2058
    %2271 = vmatprep.subr.mxu0 0.0
    %2272 = vmatpush1.msra.mxu0 %v2063
    %2273 = vmatprep.subr.mxu0 0.0
    %2274 = vmatpush1.msra.mxu0 %v2066
    %2275 = vmatprep.subr.mxu0 0.0
    %2276 = vmatpush1.msra.mxu0 %v2071
    %2277 = vmatprep.subr.mxu0 0.0
    %2278 = vmatpush1.msra.mxu0 %v2074
    %2279 = vmatprep.mubr.f32.mxu0 %v2168
    %2280 = vmatmul.mubr.f32.gmra.mrb[0].mxu0 %v2167
    %v2281 = vpop.f32.mrb[0].mxu0
    %v2282 = vadd.f32 0.0, %v2281
    %v2283 = vpop.f32.mrb[0].mxu0
    %2284 = vmatprep.mubr.f32.mxu0 %v2170
    %2285 = vmatmul.mubr.f32.gmra.mrb[0].mxu0 %v2169
    %v2286 = vpop.f32.mrb[0].mxu0
    %v2287 = vadd.f32 0.0, %v2286
    %v2288 = vpop.f32.mrb[0].mxu0
    %2289 = vmatprep.mubr.f32.mxu0 %v2172
    %2290 = vmatmul.mubr.f32.gmra.mrb[0].mxu0 %v2171
    %v2291 = vpop.f32.mrb[0].mxu0
    %v2292 = vadd.f32 0.0, %v2291
    %v2293 = vpop.f32.mrb[0].mxu0
    %2294 = vmatprep.mubr.f32.mxu0 %v2174
    %2295 = vmatmul.mubr.f32.gmra.mrb[0].mxu0 %v2173
    %v2296 = vpop.f32.mrb[0].mxu0
    %v2297 = vadd.f32 0.0, %v2296
    %v2298 = vpop.f32.mrb[0].mxu0
    %2299 = vmatprep.mubr.f32.mxu0 %v2176
    %2300 = vmatmul.mubr.f32.gmra.mrb[0].mxu0 %v2175
    %v2301 = vpop.f32.mrb[0].mxu0
    %v2302 = vadd.f32 0.0, %v2301
    %v2303 = vpop.f32.mrb[0].mxu0
    %2304 = vmatprep.mubr.f32.mxu0 %v2178
    %2305 = vmatmul.mubr.f32.gmra.mrb[0].mxu0 %v2177
    %v2306 = vpop.f32.mrb[0].mxu0
    %v2307 = vadd.f32 0.0, %v2306
    %v2308 = vpop.f32.mrb[0].mxu0
    %2309 = vmatprep.mubr.f32.mxu0 %v2180
    %2310 = vmatmul.mubr.f32.gmra.mrb[0].mxu0 %v2179
    %v2311 = vpop.f32.mrb[0].mxu0
    %v2312 = vadd.f32 0.0, %v2311
    %v2313 = vpop.f32.mrb[0].mxu0
    %2314 = vmatprep.mubr.f32.mxu0 %v2182
    %2315 = vmatmul.mubr.f32.gmra.mrb[0].mxu0 %v2181
    %v2316 = vpop.f32.mrb[0].mxu0
    %v2317 = vadd.f32 0.0, %v2316
    %v2318 = vpop.f32.mrb[0].mxu0
    %2319 = vmatprep.mubr.f32.mxu0 %v2184
    %2320 = vmatmul.mubr.f32.gmra.mrb[0].mxu0 %v2183
    %v2321 = vpop.f32.mrb[0].mxu0
    %v2322 = vadd.f32 0.0, %v2321
    %v2323 = vpop.f32.mrb[0].mxu0
    %2324 = vmatprep.mubr.f32.mxu0 %v2186
    %2325 = vmatmul.mubr.f32.gmra.mrb[0].mxu0 %v2185
    %v2326 = vpop.f32.mrb[0].mxu0
    %v2327 = vadd.f32 0.0, %v2326
    %v2328 = vpop.f32.mrb[0].mxu0
    %2329 = vmatprep.mubr.f32.mxu0 %v2188
    %2330 = vmatmul.mubr.f32.gmra.mrb[0].mxu0 %v2187
    %v2331 = vpop.f32.mrb[0].mxu0
    %v2332 = vadd.f32 0.0, %v2331
    %v2333 = vpop.f32.mrb[0].mxu0
    %2334 = vmatprep.mubr.f32.mxu0 %v2190
    %2335 = vmatmul.mubr.f32.gmra.mrb[0].mxu0 %v2189
    %v2336 = vpop.f32.mrb[0].mxu0
    %v2337 = vadd.f32 0.0, %v2336
    %v2338 = vpop.f32.mrb[0].mxu0
    %2339 = vmatprep.mubr.f32.mxu0 %v2192
    %2340 = vmatmul.mubr.f32.gmra.mrb[0].mxu0 %v2191
    %v2341 = vpop.f32.mrb[0].mxu0
    %v2342 = vadd.f32 0.0, %v2341
    %v2343 = vpop.f32.mrb[0].mxu0
    %2344 = vmatprep.mubr.f32.mxu0 %v2194
    %2345 = vmatmul.mubr.f32.gmra.mrb[0].mxu0 %v2193
    %v2346 = vpop.f32.mrb[0].mxu0
    %v2347 = vadd.f32 0.0, %v2346
    %v2348 = vpop.f32.mrb[0].mxu0
    %2349 = vmatprep.mubr.f32.mxu0 %v2196
    %2350 = vmatmul.mubr.f32.gmra.mrb[0].mxu0 %v2195
    %v2351 = vpop.f32.mrb[0].mxu0
    %v2352 = vadd.f32 0.0, %v2351
    %v2353 = vpop.f32.mrb[0].mxu0
    %2354 = vmatprep.mubr.f32.mxu0 %v2198
    %2355 = vmatmul.mubr.f32.gmra.mrb[0].mxu0 %v2197
    %v2356 = vpop.f32.mrb[0].mxu0
    %v2357 = vadd.f32 0.0, %v2356
    %v2358 = vpop.f32.mrb[0].mxu0
    %2359 = vdwg.mxu0
    %v2360 = vadd.f32 %v2199, %v2282
    %v2361 = vadd.f32 %v2200, %v2287
    %v2362 = vadd.f32 %v2201, %v2292
    %v2363 = vadd.f32 %v2202, %v2297
    %v2364 = vadd.f32 %v2203, %v2302
    %v2365 = vadd.f32 %v2204, %v2307
    %v2366 = vadd.f32 %v2205, %v2312
    %v2367 = vadd.f32 %v2206, %v2317
    %v2368 = vadd.f32 %v2207, %v2322
    %v2369 = vadd.f32 %v2208, %v2327
    %v2370 = vadd.f32 %v2209, %v2332
    %v2371 = vadd.f32 %v2210, %v2337
    %v2372 = vadd.f32 %v2211, %v2342
    %v2373 = vadd.f32 %v2212, %v2347
    %v2374 = vadd.f32 %v2213, %v2352
    %v2375 = vadd.f32 %v2214, %v2357
    %vm2376 = vcmask 261120
    %2377 = vst.msk [vmem:[#allocation4] sm:$0xff] %vm2376, %v2360
    %2378 = vst.msk [vmem:[#allocation4 + $0x8] sm:$0xff] %vm2376, %v2361
    %2379 = vst.msk [vmem:[#allocation4 + $0x10] sm:$0xff] %vm2376, %v2362
    %2380 = vst.msk [vmem:[#allocation4 + $0x18] sm:$0xff] %vm2376, %v2363
    %2381 = vst.msk [vmem:[#allocation4 + $0x20] sm:$0xff] %vm2376, %v2364
    %2382 = vst.msk [vmem:[#allocation4 + $0x28] sm:$0xff] %vm2376, %v2365
    %2383 = vst.msk [vmem:[#allocation4 + $0x30] sm:$0xff] %vm2376, %v2366
    %2384 = vst.msk [vmem:[#allocation4 + $0x38] sm:$0xff] %vm2376, %v2367
    %2385 = vst.msk [vmem:[#allocation4 + $0x40] sm:$0xff] %vm2376, %v2368
    %2386 = vst.msk [vmem:[#allocation4 + $0x48] sm:$0xff] %vm2376, %v2369
    %2387 = vst.msk [vmem:[#allocation4 + $0x50] sm:$0xff] %vm2376, %v2370
    %2388 = vst.msk [vmem:[#allocation4 + $0x58] sm:$0xff] %vm2376, %v2371
    %2389 = vst.msk [vmem:[#allocation4 + $0x60] sm:$0xff] %vm2376, %v2372
    %2390 = vst.msk [vmem:[#allocation4 + $0x68] sm:$0xff] %vm2376, %v2373
    %2391 = vst.msk [vmem:[#allocation4 + $0x70] sm:$0xff] %vm2376, %v2374
    %2392 = vst.msk [vmem:[#allocation4 + $0x78] sm:$0xff] %vm2376, %v2375
    // Predicated region
    $region78: #{tpu_custom_call.1} parent=1 // pred_check
      %p2393 = pneg %p61
    $region79: #{tpu_custom_call.1} parent=1 // pred_check_branch
      %2395 = sbr.rel (%p2393) target = $region81
    $region80: #{tpu_custom_call.1} parent=1 // pred_region
      %v2396 = vld [vmem:[#allocation2] sm:$0xff]
      %v2397 = vld [vmem:[#allocation2 + $0x8] sm:$0xff]
      %v2398 = vld [vmem:[#allocation2 + $0x10] sm:$0xff]
      %v2399 = vld [vmem:[#allocation2 + $0x18] sm:$0xff]
      %v2400 = vld [vmem:[#allocation2 + $0x20] sm:$0xff]
      %v2401 = vld [vmem:[#allocation2 + $0x28] sm:$0xff]
      %v2402 = vld [vmem:[#allocation2 + $0x30] sm:$0xff]
      %v2403 = vld [vmem:[#allocation2 + $0x38] sm:$0xff]
      %v2404 = vld [vmem:[#allocation2 + $0x40] sm:$0xff]
      %v2405 = vld [vmem:[#allocation2 + $0x48] sm:$0xff]
      %v2406 = vld [vmem:[#allocation2 + $0x50] sm:$0xff]
      %v2407 = vld [vmem:[#allocation2 + $0x58] sm:$0xff]
      %v2408 = vld [vmem:[#allocation2 + $0x60] sm:$0xff]
      %v2409 = vld [vmem:[#allocation2 + $0x68] sm:$0xff]
      %v2410 = vld [vmem:[#allocation2 + $0x70] sm:$0xff]
      %v2411 = vld [vmem:[#allocation2 + $0x78] sm:$0xff]
      %v2412 = vld [vmem:[#allocation4] sm:$0xff]
      %v2413 = vld [vmem:[#allocation4 + $0x8] sm:$0xff]
      %v2414 = vld [vmem:[#allocation4 + $0x10] sm:$0xff]
      %v2415 = vld [vmem:[#allocation4 + $0x18] sm:$0xff]
      %v2416 = vld [vmem:[#allocation4 + $0x20] sm:$0xff]
      %v2417 = vld [vmem:[#allocation4 + $0x28] sm:$0xff]
      %v2418 = vld [vmem:[#allocation4 + $0x30] sm:$0xff]
      %v2419 = vld [vmem:[#allocation4 + $0x38] sm:$0xff]
      %v2420 = vld [vmem:[#allocation4 + $0x40] sm:$0xff]
      %v2421 = vld [vmem:[#allocation4 + $0x48] sm:$0xff]
      %v2422 = vld [vmem:[#allocation4 + $0x50] sm:$0xff]
      %v2423 = vld [vmem:[#allocation4 + $0x58] sm:$0xff]
      %v2424 = vld [vmem:[#allocation4 + $0x60] sm:$0xff]
      %v2425 = vld [vmem:[#allocation4 + $0x68] sm:$0xff]
      %v2426 = vld [vmem:[#allocation4 + $0x70] sm:$0xff]
      %v2427 = vld [vmem:[#allocation4 + $0x78] sm:$0xff]
      %v2428 = vadd.f32 %v2396, %v2412
      %v2429 = vadd.f32 %v2397, %v2413
      %v2430 = vadd.f32 %v2398, %v2414
      %v2431 = vadd.f32 %v2399, %v2415
      %v2432 = vadd.f32 %v2400, %v2416
      %v2433 = vadd.f32 %v2401, %v2417
      %v2434 = vadd.f32 %v2402, %v2418
      %v2435 = vadd.f32 %v2403, %v2419
      %v2436 = vadd.f32 %v2404, %v2420
      %v2437 = vadd.f32 %v2405, %v2421
      %v2438 = vadd.f32 %v2406, %v2422
      %v2439 = vadd.f32 %v2407, %v2423
      %v2440 = vadd.f32 %v2408, %v2424
      %v2441 = vadd.f32 %v2409, %v2425
      %v2442 = vadd.f32 %v2410, %v2426
      %v2443 = vadd.f32 %v2411, %v2427
      %v2444 = vld [vmem:[%s12] sm:$0xff]
      %v2445 = vld [vmem:[%s12 + $0x8] sm:$0xff]
      %v2446 = vld [vmem:[%s12 + $0x10] sm:$0xff]
      %v2447 = vld [vmem:[%s12 + $0x18] sm:$0xff]
      %v2448 = vld [vmem:[%s13] sm:$0x1]
      %v2450 = vlaneseq
      %v2451 = vshrl.u32 %v2450, 7
      %v2452 = vsub.s32 0, %v2451
      %v2453 = vrot.slane %v2448, %v2452
      %v2456 = vsel %vm2376, %v2428, 0
      %v2459 = vsel %vm2376, %v2429, 0
      %v2462 = vsel %vm2376, %v2430, 0
      %v2465 = vsel %vm2376, %v2431, 0
      %v2468 = vsel %vm2376, %v2432, 0
      %v2471 = vsel %vm2376, %v2433, 0
      %v2474 = vsel %vm2376, %v2434, 0
      %v2477 = vsel %vm2376, %v2435, 0
      %v2480 = vsel %vm2376, %v2436, 0
      %v2483 = vsel %vm2376, %v2437, 0
      %v2486 = vsel %vm2376, %v2438, 0
      %v2489 = vsel %vm2376, %v2439, 0
      %v2492 = vsel %vm2376, %v2440, 0
      %v2495 = vsel %vm2376, %v2441, 0
      %v2498 = vsel %vm2376, %v2442, 0
      %v2501 = vsel %vm2376, %v2443, 0
      %2503 = vmatprep.subr.mxu0 0.0
      %2504 = vmatpush1.msra.mxu0 %v2444
      %2505 = vmatprep.subr.mxu0 0.0
      %2506 = vmatpush1.msra.mxu0 %v2445
      %2507 = vmatprep.subr.mxu0 0.0
      %2508 = vmatpush1.msra.mxu0 %v2446
      %2509 = vmatprep.subr.mxu0 0.0
      %2510 = vmatpush1.msra.mxu0 %v2447
      %2511 = vmatprep.subr.mxu0 0.0
      %2512 = vmatpush1.msra.mxu0 0.0
      %2513 = vmatprep.subr.mxu0 0.0
      %2514 = vmatpush1.msra.mxu0 0.0
      %2515 = vmatprep.subr.mxu0 0.0
      %2516 = vmatpush1.msra.mxu0 0.0
      %2517 = vmatprep.subr.mxu0 0.0
      %2518 = vmatpush1.msra.mxu0 0.0
      %2519 = vmatprep.subr.mxu0 0.0
      %2520 = vmatpush1.msra.mxu0 0.0
      %2521 = vmatprep.subr.mxu0 0.0
      %2522 = vmatpush1.msra.mxu0 0.0
      %2523 = vmatprep.subr.mxu0 0.0
      %2524 = vmatpush1.msra.mxu0 0.0
      %2525 = vmatprep.subr.mxu0 0.0
      %2526 = vmatpush1.msra.mxu0 0.0
      %2527 = vmatprep.subr.mxu0 0.0
      %2528 = vmatpush1.msra.mxu0 0.0
      %2529 = vmatprep.subr.mxu0 0.0
      %2530 = vmatpush1.msra.mxu0 0.0
      %2531 = vmatprep.subr.mxu0 0.0
      %2532 = vmatpush1.msra.mxu0 0.0
      %2533 = vmatprep.subr.mxu0 0.0
      %2534 = vmatpush1.msra.mxu0 0.0
      %2535 = vmatprep.subr.mxu0 0.0
      %2536 = vmatpush1.msra.mxu0 0.0
      %2537 = vmatprep.subr.mxu0 0.0
      %2538 = vmatpush1.msra.mxu0 0.0
      %2539 = vmatprep.subr.mxu0 0.0
      %2540 = vmatpush1.msra.mxu0 0.0
      %2541 = vmatprep.subr.mxu0 0.0
      %2542 = vmatpush1.msra.mxu0 0.0
      %2543 = vmatprep.subr.mxu0 0.0
      %2544 = vmatpush1.msra.mxu0 0.0
      %2545 = vmatprep.subr.mxu0 0.0
      %2546 = vmatpush1.msra.mxu0 0.0
      %2547 = vmatprep.subr.mxu0 0.0
      %2548 = vmatpush1.msra.mxu0 0.0
      %2549 = vmatprep.subr.mxu0 0.0
      %2550 = vmatpush1.msra.mxu0 0.0
      %2551 = vmatprep.subr.mxu0 0.0
      %2552 = vmatpush1.msra.mxu0 0.0
      %2553 = vmatprep.subr.mxu0 0.0
      %2554 = vmatpush1.msra.mxu0 0.0
      %2555 = vmatprep.subr.mxu0 0.0
      %2556 = vmatpush1.msra.mxu0 0.0
      %2557 = vmatprep.subr.mxu0 0.0
      %2558 = vmatpush1.msra.mxu0 0.0
      %2559 = vmatprep.subr.mxu0 0.0
      %2560 = vmatpush1.msra.mxu0 0.0
      %2561 = vmatprep.subr.mxu0 0.0
      %2562 = vmatpush1.msra.mxu0 0.0
      %2563 = vmatprep.subr.mxu0 0.0
      %2564 = vmatpush1.msra.mxu0 0.0
      %2565 = vmatprep.subr.mxu0 0.0
      %2566 = vmatpush1.msra.mxu0 0.0
      %2567 = vmatprep.mubr.f32.mxu0 0.0
      %2568 = vmatmul.mubr.f32.gmra.mrb[0].mxu0 %v2456
      %v2569 = vpop.f32.mrb[0].mxu0
      %v2570 = vadd.f32 %v2453, %v2569
      %v2571 = vpop.f32.mrb[0].mxu0
      %2572 = vmatprep.mubr.f32.mxu0 0.0
      %2573 = vmatmul.mubr.f32.gmra.mrb[0].mxu0 %v2459
      %v2574 = vpop.f32.mrb[0].mxu0
      %v2575 = vadd.f32 %v2453, %v2574
      %v2576 = vpop.f32.mrb[0].mxu0
      %2577 = vmatprep.mubr.f32.mxu0 0.0
      %2578 = vmatmul.mubr.f32.gmra.mrb[0].mxu0 %v2462
      %v2579 = vpop.f32.mrb[0].mxu0
      %v2580 = vadd.f32 %v2453, %v2579
      %v2581 = vpop.f32.mrb[0].mxu0
      %2582 = vmatprep.mubr.f32.mxu0 0.0
      %2583 = vmatmul.mubr.f32.gmra.mrb[0].mxu0 %v2465
      %v2584 = vpop.f32.mrb[0].mxu0
      %v2585 = vadd.f32 %v2453, %v2584
      %v2586 = vpop.f32.mrb[0].mxu0
      %2587 = vmatprep.mubr.f32.mxu0 0.0
      %2588 = vmatmul.mubr.f32.gmra.mrb[0].mxu0 %v2468
      %v2589 = vpop.f32.mrb[0].mxu0
      %v2590 = vadd.f32 %v2453, %v2589
      %v2591 = vpop.f32.mrb[0].mxu0
      %2592 = vmatprep.mubr.f32.mxu0 0.0
      %2593 = vmatmul.mubr.f32.gmra.mrb[0].mxu0 %v2471
      %v2594 = vpop.f32.mrb[0].mxu0
      %v2595 = vadd.f32 %v2453, %v2594
      %v2596 = vpop.f32.mrb[0].mxu0
      %2597 = vmatprep.mubr.f32.mxu0 0.0
      %2598 = vmatmul.mubr.f32.gmra.mrb[0].mxu0 %v2474
      %v2599 = vpop.f32.mrb[0].mxu0
      %v2600 = vadd.f32 %v2453, %v2599
      %v2601 = vpop.f32.mrb[0].mxu0
      %2602 = vmatprep.mubr.f32.mxu0 0.0
      %2603 = vmatmul.mubr.f32.gmra.mrb[0].mxu0 %v2477
      %v2604 = vpop.f32.mrb[0].mxu0
      %v2605 = vadd.f32 %v2453, %v2604
      %v2606 = vpop.f32.mrb[0].mxu0
      %2607 = vmatprep.mubr.f32.mxu0 0.0
      %2608 = vmatmul.mubr.f32.gmra.mrb[0].mxu0 %v2480
      %v2609 = vpop.f32.mrb[0].mxu0
      %v2610 = vadd.f32 %v2453, %v2609
      %v2611 = vpop.f32.mrb[0].mxu0
      %2612 = vmatprep.mubr.f32.mxu0 0.0
      %2613 = vmatmul.mubr.f32.gmra.mrb[0].mxu0 %v2483
      %v2614 = vpop.f32.mrb[0].mxu0
      %v2615 = vadd.f32 %v2453, %v2614
      %v2616 = vpop.f32.mrb[0].mxu0
      %2617 = vmatprep.mubr.f32.mxu0 0.0
      %2618 = vmatmul.mubr.f32.gmra.mrb[0].mxu0 %v2486
      %v2619 = vpop.f32.mrb[0].mxu0
      %v2620 = vadd.f32 %v2453, %v2619
      %v2621 = vpop.f32.mrb[0].mxu0
      %2622 = vmatprep.mubr.f32.mxu0 0.0
      %2623 = vmatmul.mubr.f32.gmra.mrb[0].mxu0 %v2489
      %v2624 = vpop.f32.mrb[0].mxu0
      %v2625 = vadd.f32 %v2453, %v2624
      %v2626 = vpop.f32.mrb[0].mxu0
      %2627 = vmatprep.mubr.f32.mxu0 0.0
      %2628 = vmatmul.mubr.f32.gmra.mrb[0].mxu0 %v2492
      %v2629 = vpop.f32.mrb[0].mxu0
      %v2630 = vadd.f32 %v2453, %v2629
      %v2631 = vpop.f32.mrb[0].mxu0
      %2632 = vmatprep.mubr.f32.mxu0 0.0
      %2633 = vmatmul.mubr.f32.gmra.mrb[0].mxu0 %v2495
      %v2634 = vpop.f32.mrb[0].mxu0
      %v2635 = vadd.f32 %v2453, %v2634
      %v2636 = vpop.f32.mrb[0].mxu0
      %2637 = vmatprep.mubr.f32.mxu0 0.0
      %2638 = vmatmul.mubr.f32.gmra.mrb[0].mxu0 %v2498
      %v2639 = vpop.f32.mrb[0].mxu0
      %v2640 = vadd.f32 %v2453, %v2639
      %v2641 = vpop.f32.mrb[0].mxu0
      %2642 = vmatprep.mubr.f32.mxu0 0.0
      %2643 = vmatmul.mubr.f32.gmra.mrb[0].mxu0 %v2501
      %v2644 = vpop.f32.mrb[0].mxu0
      %v2645 = vadd.f32 %v2453, %v2644
      %v2646 = vpop.f32.mrb[0].mxu0
      %2647 = vdwg.mxu0
      %v2648 = vmax.f32 %v2570, 0.0
      %v2649 = vmax.f32 %v2575, 0.0
      %v2650 = vmax.f32 %v2580, 0.0
      %v2651 = vmax.f32 %v2585, 0.0
      %v2652 = vmax.f32 %v2590, 0.0
      %v2653 = vmax.f32 %v2595, 0.0
      %v2654 = vmax.f32 %v2600, 0.0
      %v2655 = vmax.f32 %v2605, 0.0
      %v2656 = vmax.f32 %v2610, 0.0
      %v2657 = vmax.f32 %v2615, 0.0
      %v2658 = vmax.f32 %v2620, 0.0
      %v2659 = vmax.f32 %v2625, 0.0
      %v2660 = vmax.f32 %v2630, 0.0
      %v2661 = vmax.f32 %v2635, 0.0
      %v2662 = vmax.f32 %v2640, 0.0
      %v2663 = vmax.f32 %v2645, 0.0
      %s2664 = scalar_lea.vmem %s12, 32
      %v2665 = vld [vmem:[%s2664] sm:$0xff]
      %v2666 = vld [vmem:[%s2664 + $0x8] sm:$0xff]
      %v2667 = vld [vmem:[%s2664 + $0x10] sm:$0xff]
      %v2668 = vld [vmem:[%s2664 + $0x18] sm:$0xff]
      %s2669 = scalar_lea.vmem %s13, 1
      %v2670 = vld [vmem:[%s2669] sm:$0x1]
      %v2672 = vlaneseq
      %v2673 = vshrl.u32 %v2672, 7
      %v2674 = vsub.s32 0, %v2673
      %v2675 = vrot.slane %v2670, %v2674
      %v2678 = vsel %vm2376, %v2648, 0
      %v2681 = vsel %vm2376, %v2649, 0
      %v2684 = vsel %vm2376, %v2650, 0
      %v2687 = vsel %vm2376, %v2651, 0
      %v2690 = vsel %vm2376, %v2652, 0
      %v2693 = vsel %vm2376, %v2653, 0
      %v2696 = vsel %vm2376, %v2654, 0
      %v2699 = vsel %vm2376, %v2655, 0
      %v2702 = vsel %vm2376, %v2656, 0
      %v2705 = vsel %vm2376, %v2657, 0
      %v2708 = vsel %vm2376, %v2658, 0
      %v2711 = vsel %vm2376, %v2659, 0
      %v2714 = vsel %vm2376, %v2660, 0
      %v2717 = vsel %vm2376, %v2661, 0
      %v2720 = vsel %vm2376, %v2662, 0
      %v2723 = vsel %vm2376, %v2663, 0
      %2725 = vmatprep.subr.mxu0 0.0
      %2726 = vmatpush1.msra.mxu0 %v2665
      %2727 = vmatprep.subr.mxu0 0.0
      %2728 = vmatpush1.msra.mxu0 %v2666
      %2729 = vmatprep.subr.mxu0 0.0
      %2730 = vmatpush1.msra.mxu0 %v2667
      %2731 = vmatprep.subr.mxu0 0.0
      %2732 = vmatpush1.msra.mxu0 %v2668
      %2733 = vmatprep.subr.mxu0 0.0
      %2734 = vmatpush1.msra.mxu0 0.0
      %2735 = vmatprep.subr.mxu0 0.0
      %2736 = vmatpush1.msra.mxu0 0.0
      %2737 = vmatprep.subr.mxu0 0.0
      %2738 = vmatpush1.msra.mxu0 0.0
      %2739 = vmatprep.subr.mxu0 0.0
      %2740 = vmatpush1.msra.mxu0 0.0
      %2741 = vmatprep.subr.mxu0 0.0
      %2742 = vmatpush1.msra.mxu0 0.0
      %2743 = vmatprep.subr.mxu0 0.0
      %2744 = vmatpush1.msra.mxu0 0.0
      %2745 = vmatprep.subr.mxu0 0.0
      %2746 = vmatpush1.msra.mxu0 0.0
      %2747 = vmatprep.subr.mxu0 0.0
      %2748 = vmatpush1.msra.mxu0 0.0
      %2749 = vmatprep.subr.mxu0 0.0
      %2750 = vmatpush1.msra.mxu0 0.0
      %2751 = vmatprep.subr.mxu0 0.0
      %2752 = vmatpush1.msra.mxu0 0.0
      %2753 = vmatprep.subr.mxu0 0.0
      %2754 = vmatpush1.msra.mxu0 0.0
      %2755 = vmatprep.subr.mxu0 0.0
      %2756 = vmatpush1.msra.mxu0 0.0
      %2757 = vmatprep.subr.mxu0 0.0
      %2758 = vmatpush1.msra.mxu0 0.0
      %2759 = vmatprep.subr.mxu0 0.0
      %2760 = vmatpush1.msra.mxu0 0.0
      %2761 = vmatprep.subr.mxu0 0.0
      %2762 = vmatpush1.msra.mxu0 0.0
      %2763 = vmatprep.subr.mxu0 0.0
      %2764 = vmatpush1.msra.mxu0 0.0
      %2765 = vmatprep.subr.mxu0 0.0
      %2766 = vmatpush1.msra.mxu0 0.0
      %2767 = vmatprep.subr.mxu0 0.0
      %2768 = vmatpush1.msra.mxu0 0.0
      %2769 = vmatprep.subr.mxu0 0.0
      %2770 = vmatpush1.msra.mxu0 0.0
      %2771 = vmatprep.subr.mxu0 0.0
      %2772 = vmatpush1.msra.mxu0 0.0
      %2773 = vmatprep.subr.mxu0 0.0
      %2774 = vmatpush1.msra.mxu0 0.0
      %2775 = vmatprep.subr.mxu0 0.0
      %2776 = vmatpush1.msra.mxu0 0.0
      %2777 = vmatprep.subr.mxu0 0.0
      %2778 = vmatpush1.msra.mxu0 0.0
      %2779 = vmatprep.subr.mxu0 0.0
      %2780 = vmatpush1.msra.mxu0 0.0
      %2781 = vmatprep.subr.mxu0 0.0
      %2782 = vmatpush1.msra.mxu0 0.0
      %2783 = vmatprep.subr.mxu0 0.0
      %2784 = vmatpush1.msra.mxu0 0.0
      %2785 = vmatprep.subr.mxu0 0.0
      %2786 = vmatpush1.msra.mxu0 0.0
      %2787 = vmatprep.subr.mxu0 0.0
      %2788 = vmatpush1.msra.mxu0 0.0
      %2789 = vmatprep.mubr.f32.mxu0 0.0
      %2790 = vmatmul.mubr.f32.gmra.mrb[0].mxu0 %v2678
      %v2791 = vpop.f32.mrb[0].mxu0
      %v2792 = vadd.f32 %v2675, %v2791
      %v2793 = vpop.f32.mrb[0].mxu0
      %2794 = vmatprep.mubr.f32.mxu0 0.0
      %2795 = vmatmul.mubr.f32.gmra.mrb[0].mxu0 %v2681
      %v2796 = vpop.f32.mrb[0].mxu0
      %v2797 = vadd.f32 %v2675, %v2796
      %v2798 = vpop.f32.mrb[0].mxu0
      %2799 = vmatprep.mubr.f32.mxu0 0.0
      %2800 = vmatmul.mubr.f32.gmra.mrb[0].mxu0 %v2684
      %v2801 = vpop.f32.mrb[0].mxu0
      %v2802 = vadd.f32 %v2675, %v2801
      %v2803 = vpop.f32.mrb[0].mxu0
      %2804 = vmatprep.mubr.f32.mxu0 0.0
      %2805 = vmatmul.mubr.f32.gmra.mrb[0].mxu0 %v2687
      %v2806 = vpop.f32.mrb[0].mxu0
      %v2807 = vadd.f32 %v2675, %v2806
      %v2808 = vpop.f32.mrb[0].mxu0
      %2809 = vmatprep.mubr.f32.mxu0 0.0
      %2810 = vmatmul.mubr.f32.gmra.mrb[0].mxu0 %v2690
      %v2811 = vpop.f32.mrb[0].mxu0
      %v2812 = vadd.f32 %v2675, %v2811
      %v2813 = vpop.f32.mrb[0].mxu0
      %2814 = vmatprep.mubr.f32.mxu0 0.0
      %2815 = vmatmul.mubr.f32.gmra.mrb[0].mxu0 %v2693
      %v2816 = vpop.f32.mrb[0].mxu0
      %v2817 = vadd.f32 %v2675, %v2816
      %v2818 = vpop.f32.mrb[0].mxu0
      %2819 = vmatprep.mubr.f32.mxu0 0.0
      %2820 = vmatmul.mubr.f32.gmra.mrb[0].mxu0 %v2696
      %v2821 = vpop.f32.mrb[0].mxu0
      %v2822 = vadd.f32 %v2675, %v2821
      %v2823 = vpop.f32.mrb[0].mxu0
      %2824 = vmatprep.mubr.f32.mxu0 0.0
      %2825 = vmatmul.mubr.f32.gmra.mrb[0].mxu0 %v2699
      %v2826 = vpop.f32.mrb[0].mxu0
      %v2827 = vadd.f32 %v2675, %v2826
      %v2828 = vpop.f32.mrb[0].mxu0
      %2829 = vmatprep.mubr.f32.mxu0 0.0
      %2830 = vmatmul.mubr.f32.gmra.mrb[0].mxu0 %v2702
      %v2831 = vpop.f32.mrb[0].mxu0
      %v2832 = vadd.f32 %v2675, %v2831
      %v2833 = vpop.f32.mrb[0].mxu0
      %2834 = vmatprep.mubr.f32.mxu0 0.0
      %2835 = vmatmul.mubr.f32.gmra.mrb[0].mxu0 %v2705
      %v2836 = vpop.f32.mrb[0].mxu0
      %v2837 = vadd.f32 %v2675, %v2836
      %v2838 = vpop.f32.mrb[0].mxu0
      %2839 = vmatprep.mubr.f32.mxu0 0.0
      %2840 = vmatmul.mubr.f32.gmra.mrb[0].mxu0 %v2708
      %v2841 = vpop.f32.mrb[0].mxu0
      %v2842 = vadd.f32 %v2675, %v2841
      %v2843 = vpop.f32.mrb[0].mxu0
      %2844 = vmatprep.mubr.f32.mxu0 0.0
      %2845 = vmatmul.mubr.f32.gmra.mrb[0].mxu0 %v2711
      %v2846 = vpop.f32.mrb[0].mxu0
      %v2847 = vadd.f32 %v2675, %v2846
      %v2848 = vpop.f32.mrb[0].mxu0
      %2849 = vmatprep.mubr.f32.mxu0 0.0
      %2850 = vmatmul.mubr.f32.gmra.mrb[0].mxu0 %v2714
      %v2851 = vpop.f32.mrb[0].mxu0
      %v2852 = vadd.f32 %v2675, %v2851
      %v2853 = vpop.f32.mrb[0].mxu0
      %2854 = vmatprep.mubr.f32.mxu0 0.0
      %2855 = vmatmul.mubr.f32.gmra.mrb[0].mxu0 %v2717
      %v2856 = vpop.f32.mrb[0].mxu0
      %v2857 = vadd.f32 %v2675, %v2856
      %v2858 = vpop.f32.mrb[0].mxu0
      %2859 = vmatprep.mubr.f32.mxu0 0.0
      %2860 = vmatmul.mubr.f32.gmra.mrb[0].mxu0 %v2720
      %v2861 = vpop.f32.mrb[0].mxu0
      %v2862 = vadd.f32 %v2675, %v2861
      %v2863 = vpop.f32.mrb[0].mxu0
      %2864 = vmatprep.mubr.f32.mxu0 0.0
      %2865 = vmatmul.mubr.f32.gmra.mrb[0].mxu0 %v2723
      %v2866 = vpop.f32.mrb[0].mxu0
      %v2867 = vadd.f32 %v2675, %v2866
      %v2868 = vpop.f32.mrb[0].mxu0
      %2869 = vdwg.mxu0
      %v2870 = vmax.f32 %v2792, 0.0
      %v2871 = vmax.f32 %v2797, 0.0
      %v2872 = vmax.f32 %v2802, 0.0
      %v2873 = vmax.f32 %v2807, 0.0
      %v2874 = vmax.f32 %v2812, 0.0
      %v2875 = vmax.f32 %v2817, 0.0
      %v2876 = vmax.f32 %v2822, 0.0
      %v2877 = vmax.f32 %v2827, 0.0
      %v2878 = vmax.f32 %v2832, 0.0
      %v2879 = vmax.f32 %v2837, 0.0
      %v2880 = vmax.f32 %v2842, 0.0
      %v2881 = vmax.f32 %v2847, 0.0
      %v2882 = vmax.f32 %v2852, 0.0
      %v2883 = vmax.f32 %v2857, 0.0
      %v2884 = vmax.f32 %v2862, 0.0
      %v2885 = vmax.f32 %v2867, 0.0
      %v2886 = vadd.f32 %v2428, %v2870
      %v2887 = vadd.f32 %v2429, %v2871
      %v2888 = vadd.f32 %v2430, %v2872
      %v2889 = vadd.f32 %v2431, %v2873
      %v2890 = vadd.f32 %v2432, %v2874
      %v2891 = vadd.f32 %v2433, %v2875
      %v2892 = vadd.f32 %v2434, %v2876
      %v2893 = vadd.f32 %v2435, %v2877
      %v2894 = vadd.f32 %v2436, %v2878
      %v2895 = vadd.f32 %v2437, %v2879
      %v2896 = vadd.f32 %v2438, %v2880
      %v2897 = vadd.f32 %v2439, %v2881
      %v2898 = vadd.f32 %v2440, %v2882
      %v2899 = vadd.f32 %v2441, %v2883
      %v2900 = vadd.f32 %v2442, %v2884
      %v2901 = vadd.f32 %v2443, %v2885
      %v2902 = vld [vmem:[%s14] sm:$0xff]
      %v2903 = vld [vmem:[%s14 + $0x8] sm:$0xff]
      %v2904 = vld [vmem:[%s14 + $0x10] sm:$0xff]
      %v2905 = vld [vmem:[%s14 + $0x18] sm:$0xff]
      %v2906 = vld [vmem:[%s15] sm:$0x1]
      %v2908 = vlaneseq
      %v2909 = vshrl.u32 %v2908, 7
      %v2910 = vsub.s32 0, %v2909
      %v2911 = vrot.slane %v2906, %v2910
      %v2914 = vsel %vm2376, %v2886, 0
      %v2917 = vsel %vm2376, %v2887, 0
      %v2920 = vsel %vm2376, %v2888, 0
      %v2923 = vsel %vm2376, %v2889, 0
      %v2926 = vsel %vm2376, %v2890, 0
      %v2929 = vsel %vm2376, %v2891, 0
      %v2932 = vsel %vm2376, %v2892, 0
      %v2935 = vsel %vm2376, %v2893, 0
      %v2938 = vsel %vm2376, %v2894, 0
      %v2941 = vsel %vm2376, %v2895, 0
      %v2944 = vsel %vm2376, %v2896, 0
      %v2947 = vsel %vm2376, %v2897, 0
      %v2950 = vsel %vm2376, %v2898, 0
      %v2953 = vsel %vm2376, %v2899, 0
      %v2956 = vsel %vm2376, %v2900, 0
      %v2959 = vsel %vm2376, %v2901, 0
      %2961 = vmatprep.subr.mxu0 0.0
      %2962 = vmatpush1.msra.mxu0 %v2902
      %2963 = vmatprep.subr.mxu0 0.0
      %2964 = vmatpush1.msra.mxu0 %v2903
      %2965 = vmatprep.subr.mxu0 0.0
      %2966 = vmatpush1.msra.mxu0 %v2904
      %2967 = vmatprep.subr.mxu0 0.0
      %2968 = vmatpush1.msra.mxu0 %v2905
      %2969 = vmatprep.subr.mxu0 0.0
      %2970 = vmatpush1.msra.mxu0 0.0
      %2971 = vmatprep.subr.mxu0 0.0
      %2972 = vmatpush1.msra.mxu0 0.0
      %2973 = vmatprep.subr.mxu0 0.0
      %2974 = vmatpush1.msra.mxu0 0.0
      %2975 = vmatprep.subr.mxu0 0.0
      %2976 = vmatpush1.msra.mxu0 0.0
      %2977 = vmatprep.subr.mxu0 0.0
      %2978 = vmatpush1.msra.mxu0 0.0
      %2979 = vmatprep.subr.mxu0 0.0
      %2980 = vmatpush1.msra.mxu0 0.0
      %2981 = vmatprep.subr.mxu0 0.0
      %2982 = vmatpush1.msra.mxu0 0.0
      %2983 = vmatprep.subr.mxu0 0.0
      %2984 = vmatpush1.msra.mxu0 0.0
      %2985 = vmatprep.subr.mxu0 0.0
      %2986 = vmatpush1.msra.mxu0 0.0
      %2987 = vmatprep.subr.mxu0 0.0
      %2988 = vmatpush1.msra.mxu0 0.0
      %2989 = vmatprep.subr.mxu0 0.0
      %2990 = vmatpush1.msra.mxu0 0.0
      %2991 = vmatprep.subr.mxu0 0.0
      %2992 = vmatpush1.msra.mxu0 0.0
      %2993 = vmatprep.subr.mxu0 0.0
      %2994 = vmatpush1.msra.mxu0 0.0
      %2995 = vmatprep.subr.mxu0 0.0
      %2996 = vmatpush1.msra.mxu0 0.0
      %2997 = vmatprep.subr.mxu0 0.0
      %2998 = vmatpush1.msra.mxu0 0.0
      %2999 = vmatprep.subr.mxu0 0.0
      %3000 = vmatpush1.msra.mxu0 0.0
      %3001 = vmatprep.subr.mxu0 0.0
      %3002 = vmatpush1.msra.mxu0 0.0
      %3003 = vmatprep.subr.mxu0 0.0
      %3004 = vmatpush1.msra.mxu0 0.0
      %3005 = vmatprep.subr.mxu0 0.0
      %3006 = vmatpush1.msra.mxu0 0.0
      %3007 = vmatprep.subr.mxu0 0.0
      %3008 = vmatpush1.msra.mxu0 0.0
      %3009 = vmatprep.subr.mxu0 0.0
      %3010 = vmatpush1.msra.mxu0 0.0
      %3011 = vmatprep.subr.mxu0 0.0
      %3012 = vmatpush1.msra.mxu0 0.0
      %3013 = vmatprep.subr.mxu0 0.0
      %3014 = vmatpush1.msra.mxu0 0.0
      %3015 = vmatprep.subr.mxu0 0.0
      %3016 = vmatpush1.msra.mxu0 0.0
      %3017 = vmatprep.subr.mxu0 0.0
      %3018 = vmatpush1.msra.mxu0 0.0
      %3019 = vmatprep.subr.mxu0 0.0
      %3020 = vmatpush1.msra.mxu0 0.0
      %3021 = vmatprep.subr.mxu0 0.0
      %3022 = vmatpush1.msra.mxu0 0.0
      %3023 = vmatprep.subr.mxu0 0.0
      %3024 = vmatpush1.msra.mxu0 0.0
      %3025 = vmatprep.mubr.f32.mxu0 0.0
      %3026 = vmatmul.mubr.f32.gmra.mrb[0].mxu0 %v2914
      %v3027 = vpop.f32.mrb[0].mxu0
      %v3028 = vadd.f32 %v2911, %v3027
      %v3029 = vpop.f32.mrb[0].mxu0
      %3030 = vmatprep.mubr.f32.mxu0 0.0
      %3031 = vmatmul.mubr.f32.gmra.mrb[0].mxu0 %v2917
      %v3032 = vpop.f32.mrb[0].mxu0
      %v3033 = vadd.f32 %v2911, %v3032
      %v3034 = vpop.f32.mrb[0].mxu0
      %3035 = vmatprep.mubr.f32.mxu0 0.0
      %3036 = vmatmul.mubr.f32.gmra.mrb[0].mxu0 %v2920
      %v3037 = vpop.f32.mrb[0].mxu0
      %v3038 = vadd.f32 %v2911, %v3037
      %v3039 = vpop.f32.mrb[0].mxu0
      %3040 = vmatprep.mubr.f32.mxu0 0.0
      %3041 = vmatmul.mubr.f32.gmra.mrb[0].mxu0 %v2923
      %v3042 = vpop.f32.mrb[0].mxu0
      %v3043 = vadd.f32 %v2911, %v3042
      %v3044 = vpop.f32.mrb[0].mxu0
      %3045 = vmatprep.mubr.f32.mxu0 0.0
      %3046 = vmatmul.mubr.f32.gmra.mrb[0].mxu0 %v2926
      %v3047 = vpop.f32.mrb[0].mxu0
      %v3048 = vadd.f32 %v2911, %v3047
      %v3049 = vpop.f32.mrb[0].mxu0
      %3050 = vmatprep.mubr.f32.mxu0 0.0
      %3051 = vmatmul.mubr.f32.gmra.mrb[0].mxu0 %v2929
      %v3052 = vpop.f32.mrb[0].mxu0
      %v3053 = vadd.f32 %v2911, %v3052
      %v3054 = vpop.f32.mrb[0].mxu0
      %3055 = vmatprep.mubr.f32.mxu0 0.0
      %3056 = vmatmul.mubr.f32.gmra.mrb[0].mxu0 %v2932
      %v3057 = vpop.f32.mrb[0].mxu0
      %v3058 = vadd.f32 %v2911, %v3057
      %v3059 = vpop.f32.mrb[0].mxu0
      %3060 = vmatprep.mubr.f32.mxu0 0.0
      %3061 = vmatmul.mubr.f32.gmra.mrb[0].mxu0 %v2935
      %v3062 = vpop.f32.mrb[0].mxu0
      %v3063 = vadd.f32 %v2911, %v3062
      %v3064 = vpop.f32.mrb[0].mxu0
      %3065 = vmatprep.mubr.f32.mxu0 0.0
      %3066 = vmatmul.mubr.f32.gmra.mrb[0].mxu0 %v2938
      %v3067 = vpop.f32.mrb[0].mxu0
      %v3068 = vadd.f32 %v2911, %v3067
      %v3069 = vpop.f32.mrb[0].mxu0
      %3070 = vmatprep.mubr.f32.mxu0 0.0
      %3071 = vmatmul.mubr.f32.gmra.mrb[0].mxu0 %v2941
      %v3072 = vpop.f32.mrb[0].mxu0
      %v3073 = vadd.f32 %v2911, %v3072
      %v3074 = vpop.f32.mrb[0].mxu0
      %3075 = vmatprep.mubr.f32.mxu0 0.0
      %3076 = vmatmul.mubr.f32.gmra.mrb[0].mxu0 %v2944
      %v3077 = vpop.f32.mrb[0].mxu0
      %v3078 = vadd.f32 %v2911, %v3077
      %v3079 = vpop.f32.mrb[0].mxu0
      %3080 = vmatprep.mubr.f32.mxu0 0.0
      %3081 = vmatmul.mubr.f32.gmra.mrb[0].mxu0 %v2947
      %v3082 = vpop.f32.mrb[0].mxu0
      %v3083 = vadd.f32 %v2911, %v3082
      %v3084 = vpop.f32.mrb[0].mxu0
      %3085 = vmatprep.mubr.f32.mxu0 0.0
      %3086 = vmatmul.mubr.f32.gmra.mrb[0].mxu0 %v2950
      %v3087 = vpop.f32.mrb[0].mxu0
      %v3088 = vadd.f32 %v2911, %v3087
      %v3089 = vpop.f32.mrb[0].mxu0
      %3090 = vmatprep.mubr.f32.mxu0 0.0
      %3091 = vmatmul.mubr.f32.gmra.mrb[0].mxu0 %v2953
      %v3092 = vpop.f32.mrb[0].mxu0
      %v3093 = vadd.f32 %v2911, %v3092
      %v3094 = vpop.f32.mrb[0].mxu0
      %3095 = vmatprep.mubr.f32.mxu0 0.0
      %3096 = vmatmul.mubr.f32.gmra.mrb[0].mxu0 %v2956
      %v3097 = vpop.f32.mrb[0].mxu0
      %v3098 = vadd.f32 %v2911, %v3097
      %v3099 = vpop.f32.mrb[0].mxu0
      %3100 = vmatprep.mubr.f32.mxu0 0.0
      %3101 = vmatmul.mubr.f32.gmra.mrb[0].mxu0 %v2959
      %v3102 = vpop.f32.mrb[0].mxu0
      %v3103 = vadd.f32 %v2911, %v3102
      %v3104 = vpop.f32.mrb[0].mxu0
      %3105 = vdwg.mxu0
      %v3106 = vmax.f32 %v3028, 0.0
      %v3107 = vmax.f32 %v3033, 0.0
      %v3108 = vmax.f32 %v3038, 0.0
      %v3109 = vmax.f32 %v3043, 0.0
      %v3110 = vmax.f32 %v3048, 0.0
      %v3111 = vmax.f32 %v3053, 0.0
      %v3112 = vmax.f32 %v3058, 0.0
      %v3113 = vmax.f32 %v3063, 0.0
      %v3114 = vmax.f32 %v3068, 0.0
      %v3115 = vmax.f32 %v3073, 0.0
      %v3116 = vmax.f32 %v3078, 0.0
      %v3117 = vmax.f32 %v3083, 0.0
      %v3118 = vmax.f32 %v3088, 0.0
      %v3119 = vmax.f32 %v3093, 0.0
      %v3120 = vmax.f32 %v3098, 0.0
      %v3121 = vmax.f32 %v3103, 0.0
      %v3122 = vld [vmem:[%s0] sm:$0xff]
      %v3123 = vld [vmem:[%s0 + $0x8] sm:$0xff]
      %v3124 = vld [vmem:[%s0 + $0x10] sm:$0xff]
      %v3125 = vld [vmem:[%s0 + $0x18] sm:$0xff]
      %v3126 = vld [vmem:[%s0 + $0x20] sm:$0xff]
      %v3127 = vld [vmem:[%s0 + $0x28] sm:$0xff]
      %v3128 = vld [vmem:[%s0 + $0x30] sm:$0xff]
      %v3129 = vld [vmem:[%s0 + $0x38] sm:$0xff]
      %v3130 = vld [vmem:[%s0 + $0x40] sm:$0xff]
      %v3131 = vld [vmem:[%s0 + $0x48] sm:$0xff]
      %v3132 = vld [vmem:[%s0 + $0x50] sm:$0xff]
      %v3133 = vld [vmem:[%s0 + $0x58] sm:$0xff]
      %v3134 = vld [vmem:[%s0 + $0x60] sm:$0xff]
      %v3135 = vld [vmem:[%s0 + $0x68] sm:$0xff]
      %v3136 = vld [vmem:[%s0 + $0x70] sm:$0xff]
      %v3137 = vld [vmem:[%s0 + $0x78] sm:$0xff]
      %v3138 = vadd.f32 %v3106, %v3122
      %v3139 = vadd.f32 %v3107, %v3123
      %v3140 = vadd.f32 %v3108, %v3124
      %v3141 = vadd.f32 %v3109, %v3125
      %v3142 = vadd.f32 %v3110, %v3126
      %v3143 = vadd.f32 %v3111, %v3127
      %v3144 = vadd.f32 %v3112, %v3128
      %v3145 = vadd.f32 %v3113, %v3129
      %v3146 = vadd.f32 %v3114, %v3130
      %v3147 = vadd.f32 %v3115, %v3131
      %v3148 = vadd.f32 %v3116, %v3132
      %v3149 = vadd.f32 %v3117, %v3133
      %v3150 = vadd.f32 %v3118, %v3134
      %v3151 = vadd.f32 %v3119, %v3135
      %v3152 = vadd.f32 %v3120, %v3136
      %v3153 = vadd.f32 %v3121, %v3137
      %s3154 = scalar_lea.vmem %s12, 64
      %v3155 = vld [vmem:[%s3154] sm:$0xff]
      %v3156 = vld [vmem:[%s3154 + $0x8] sm:$0xff]
      %v3157 = vld [vmem:[%s3154 + $0x10] sm:$0xff]
      %v3158 = vld [vmem:[%s3154 + $0x18] sm:$0xff]
      %s3159 = scalar_lea.vmem %s13, 2
      %v3160 = vld [vmem:[%s3159] sm:$0x1]
      %v3162 = vlaneseq
      %v3163 = vshrl.u32 %v3162, 7
      %v3164 = vsub.s32 0, %v3163
      %v3165 = vrot.slane %v3160, %v3164
      %v3168 = vsel %vm2376, %v3138, 0
      %v3171 = vsel %vm2376, %v3139, 0
      %v3174 = vsel %vm2376, %v3140, 0
      %v3177 = vsel %vm2376, %v3141, 0
      %v3180 = vsel %vm2376, %v3142, 0
      %v3183 = vsel %vm2376, %v3143, 0
      %v3186 = vsel %vm2376, %v3144, 0
      %v3189 = vsel %vm2376, %v3145, 0
      %v3192 = vsel %vm2376, %v3146, 0
      %v3195 = vsel %vm2376, %v3147, 0
      %v3198 = vsel %vm2376, %v3148, 0
      %v3201 = vsel %vm2376, %v3149, 0
      %v3204 = vsel %vm2376, %v3150, 0
      %v3207 = vsel %vm2376, %v3151, 0
      %v3210 = vsel %vm2376, %v3152, 0
      %v3213 = vsel %vm2376, %v3153, 0
      %3215 = vmatprep.subr.mxu0 0.0
      %3216 = vmatpush1.msra.mxu0 %v3155
      %3217 = vmatprep.subr.mxu0 0.0
      %3218 = vmatpush1.msra.mxu0 %v3156
      %3219 = vmatprep.subr.mxu0 0.0
      %3220 = vmatpush1.msra.mxu0 %v3157
      %3221 = vmatprep.subr.mxu0 0.0
      %3222 = vmatpush1.msra.mxu0 %v3158
      %3223 = vmatprep.subr.mxu0 0.0
      %3224 = vmatpush1.msra.mxu0 0.0
      %3225 = vmatprep.subr.mxu0 0.0
      %3226 = vmatpush1.msra.mxu0 0.0
      %3227 = vmatprep.subr.mxu0 0.0
      %3228 = vmatpush1.msra.mxu0 0.0
      %3229 = vmatprep.subr.mxu0 0.0
      %3230 = vmatpush1.msra.mxu0 0.0
      %3231 = vmatprep.subr.mxu0 0.0
      %3232 = vmatpush1.msra.mxu0 0.0
      %3233 = vmatprep.subr.mxu0 0.0
      %3234 = vmatpush1.msra.mxu0 0.0
      %3235 = vmatprep.subr.mxu0 0.0
      %3236 = vmatpush1.msra.mxu0 0.0
      %3237 = vmatprep.subr.mxu0 0.0
      %3238 = vmatpush1.msra.mxu0 0.0
      %3239 = vmatprep.subr.mxu0 0.0
      %3240 = vmatpush1.msra.mxu0 0.0
      %3241 = vmatprep.subr.mxu0 0.0
      %3242 = vmatpush1.msra.mxu0 0.0
      %3243 = vmatprep.subr.mxu0 0.0
      %3244 = vmatpush1.msra.mxu0 0.0
      %3245 = vmatprep.subr.mxu0 0.0
      %3246 = vmatpush1.msra.mxu0 0.0
      %3247 = vmatprep.subr.mxu0 0.0
      %3248 = vmatpush1.msra.mxu0 0.0
      %3249 = vmatprep.subr.mxu0 0.0
      %3250 = vmatpush1.msra.mxu0 0.0
      %3251 = vmatprep.subr.mxu0 0.0
      %3252 = vmatpush1.msra.mxu0 0.0
      %3253 = vmatprep.subr.mxu0 0.0
      %3254 = vmatpush1.msra.mxu0 0.0
      %3255 = vmatprep.subr.mxu0 0.0
      %3256 = vmatpush1.msra.mxu0 0.0
      %3257 = vmatprep.subr.mxu0 0.0
      %3258 = vmatpush1.msra.mxu0 0.0
      %3259 = vmatprep.subr.mxu0 0.0
      %3260 = vmatpush1.msra.mxu0 0.0
      %3261 = vmatprep.subr.mxu0 0.0
      %3262 = vmatpush1.msra.mxu0 0.0
      %3263 = vmatprep.subr.mxu0 0.0
      %3264 = vmatpush1.msra.mxu0 0.0
      %3265 = vmatprep.subr.mxu0 0.0
      %3266 = vmatpush1.msra.mxu0 0.0
      %3267 = vmatprep.subr.mxu0 0.0
      %3268 = vmatpush1.msra.mxu0 0.0
      %3269 = vmatprep.subr.mxu0 0.0
      %3270 = vmatpush1.msra.mxu0 0.0
      %3271 = vmatprep.subr.mxu0 0.0
      %3272 = vmatpush1.msra.mxu0 0.0
      %3273 = vmatprep.subr.mxu0 0.0
      %3274 = vmatpush1.msra.mxu0 0.0
      %3275 = vmatprep.subr.mxu0 0.0
      %3276 = vmatpush1.msra.mxu0 0.0
      %3277 = vmatprep.subr.mxu0 0.0
      %3278 = vmatpush1.msra.mxu0 0.0
      %3279 = vmatprep.mubr.f32.mxu0 0.0
      %3280 = vmatmul.mubr.f32.gmra.mrb[0].mxu0 %v3168
      %v3281 = vpop.f32.mrb[0].mxu0
      %v3282 = vadd.f32 %v3165, %v3281
      %v3283 = vpop.f32.mrb[0].mxu0
      %3284 = vmatprep.mubr.f32.mxu0 0.0
      %3285 = vmatmul.mubr.f32.gmra.mrb[0].mxu0 %v3171
      %v3286 = vpop.f32.mrb[0].mxu0
      %v3287 = vadd.f32 %v3165, %v3286
      %v3288 = vpop.f32.mrb[0].mxu0
      %3289 = vmatprep.mubr.f32.mxu0 0.0
      %3290 = vmatmul.mubr.f32.gmra.mrb[0].mxu0 %v3174
      %v3291 = vpop.f32.mrb[0].mxu0
      %v3292 = vadd.f32 %v3165, %v3291
      %v3293 = vpop.f32.mrb[0].mxu0
      %3294 = vmatprep.mubr.f32.mxu0 0.0
      %3295 = vmatmul.mubr.f32.gmra.mrb[0].mxu0 %v3177
      %v3296 = vpop.f32.mrb[0].mxu0
      %v3297 = vadd.f32 %v3165, %v3296
      %v3298 = vpop.f32.mrb[0].mxu0
      %3299 = vmatprep.mubr.f32.mxu0 0.0
      %3300 = vmatmul.mubr.f32.gmra.mrb[0].mxu0 %v3180
      %v3301 = vpop.f32.mrb[0].mxu0
      %v3302 = vadd.f32 %v3165, %v3301
      %v3303 = vpop.f32.mrb[0].mxu0
      %3304 = vmatprep.mubr.f32.mxu0 0.0
      %3305 = vmatmul.mubr.f32.gmra.mrb[0].mxu0 %v3183
      %v3306 = vpop.f32.mrb[0].mxu0
      %v3307 = vadd.f32 %v3165, %v3306
      %v3308 = vpop.f32.mrb[0].mxu0
      %3309 = vmatprep.mubr.f32.mxu0 0.0
      %3310 = vmatmul.mubr.f32.gmra.mrb[0].mxu0 %v3186
      %v3311 = vpop.f32.mrb[0].mxu0
      %v3312 = vadd.f32 %v3165, %v3311
      %v3313 = vpop.f32.mrb[0].mxu0
      %3314 = vmatprep.mubr.f32.mxu0 0.0
      %3315 = vmatmul.mubr.f32.gmra.mrb[0].mxu0 %v3189
      %v3316 = vpop.f32.mrb[0].mxu0
      %v3317 = vadd.f32 %v3165, %v3316
      %v3318 = vpop.f32.mrb[0].mxu0
      %3319 = vmatprep.mubr.f32.mxu0 0.0
      %3320 = vmatmul.mubr.f32.gmra.mrb[0].mxu0 %v3192
      %v3321 = vpop.f32.mrb[0].mxu0
      %v3322 = vadd.f32 %v3165, %v3321
      %v3323 = vpop.f32.mrb[0].mxu0
      %3324 = vmatprep.mubr.f32.mxu0 0.0
      %3325 = vmatmul.mubr.f32.gmra.mrb[0].mxu0 %v3195
      %v3326 = vpop.f32.mrb[0].mxu0
      %v3327 = vadd.f32 %v3165, %v3326
      %v3328 = vpop.f32.mrb[0].mxu0
      %3329 = vmatprep.mubr.f32.mxu0 0.0
      %3330 = vmatmul.mubr.f32.gmra.mrb[0].mxu0 %v3198
      %v3331 = vpop.f32.mrb[0].mxu0
      %v3332 = vadd.f32 %v3165, %v3331
      %v3333 = vpop.f32.mrb[0].mxu0
      %3334 = vmatprep.mubr.f32.mxu0 0.0
      %3335 = vmatmul.mubr.f32.gmra.mrb[0].mxu0 %v3201
      %v3336 = vpop.f32.mrb[0].mxu0
      %v3337 = vadd.f32 %v3165, %v3336
      %v3338 = vpop.f32.mrb[0].mxu0
      %3339 = vmatprep.mubr.f32.mxu0 0.0
      %3340 = vmatmul.mubr.f32.gmra.mrb[0].mxu0 %v3204
      %v3341 = vpop.f32.mrb[0].mxu0
      %v3342 = vadd.f32 %v3165, %v3341
      %v3343 = vpop.f32.mrb[0].mxu0
      %3344 = vmatprep.mubr.f32.mxu0 0.0
      %3345 = vmatmul.mubr.f32.gmra.mrb[0].mxu0 %v3207
      %v3346 = vpop.f32.mrb[0].mxu0
      %v3347 = vadd.f32 %v3165, %v3346
      %v3348 = vpop.f32.mrb[0].mxu0
      %3349 = vmatprep.mubr.f32.mxu0 0.0
      %3350 = vmatmul.mubr.f32.gmra.mrb[0].mxu0 %v3210
      %v3351 = vpop.f32.mrb[0].mxu0
      %v3352 = vadd.f32 %v3165, %v3351
      %v3353 = vpop.f32.mrb[0].mxu0
      %3354 = vmatprep.mubr.f32.mxu0 0.0
      %3355 = vmatmul.mubr.f32.gmra.mrb[0].mxu0 %v3213
      %v3356 = vpop.f32.mrb[0].mxu0
      %v3357 = vadd.f32 %v3165, %v3356
      %v3358 = vpop.f32.mrb[0].mxu0
      %3359 = vdwg.mxu0
      %v3360 = vmax.f32 %v3282, 0.0
      %v3361 = vmax.f32 %v3287, 0.0
      %v3362 = vmax.f32 %v3292, 0.0
      %v3363 = vmax.f32 %v3297, 0.0
      %v3364 = vmax.f32 %v3302, 0.0
      %v3365 = vmax.f32 %v3307, 0.0
      %v3366 = vmax.f32 %v3312, 0.0
      %v3367 = vmax.f32 %v3317, 0.0
      %v3368 = vmax.f32 %v3322, 0.0
      %v3369 = vmax.f32 %v3327, 0.0
      %v3370 = vmax.f32 %v3332, 0.0
      %v3371 = vmax.f32 %v3337, 0.0
      %v3372 = vmax.f32 %v3342, 0.0
      %v3373 = vmax.f32 %v3347, 0.0
      %v3374 = vmax.f32 %v3352, 0.0
      %v3375 = vmax.f32 %v3357, 0.0
      %s3376 = scalar_lea.vmem %s12, 96
      %v3377 = vld [vmem:[%s3376] sm:$0xff]
      %v3378 = vld [vmem:[%s3376 + $0x8] sm:$0xff]
      %v3379 = vld [vmem:[%s3376 + $0x10] sm:$0xff]
      %v3380 = vld [vmem:[%s3376 + $0x18] sm:$0xff]
      %s3381 = scalar_lea.vmem %s13, 3
      %v3382 = vld [vmem:[%s3381] sm:$0x1]
      %v3384 = vlaneseq
      %v3385 = vshrl.u32 %v3384, 7
      %v3386 = vsub.s32 0, %v3385
      %v3387 = vrot.slane %v3382, %v3386
      %v3390 = vsel %vm2376, %v3360, 0
      %v3393 = vsel %vm2376, %v3361, 0
      %v3396 = vsel %vm2376, %v3362, 0
      %v3399 = vsel %vm2376, %v3363, 0
      %v3402 = vsel %vm2376, %v3364, 0
      %v3405 = vsel %vm2376, %v3365, 0
      %v3408 = vsel %vm2376, %v3366, 0
      %v3411 = vsel %vm2376, %v3367, 0
      %v3414 = vsel %vm2376, %v3368, 0
      %v3417 = vsel %vm2376, %v3369, 0
      %v3420 = vsel %vm2376, %v3370, 0
      %v3423 = vsel %vm2376, %v3371, 0
      %v3426 = vsel %vm2376, %v3372, 0
      %v3429 = vsel %vm2376, %v3373, 0
      %v3432 = vsel %vm2376, %v3374, 0
      %v3435 = vsel %vm2376, %v3375, 0
      %3437 = vmatprep.subr.mxu0 0.0
      %3438 = vmatpush1.msra.mxu0 %v3377
      %3439 = vmatprep.subr.mxu0 0.0
      %3440 = vmatpush1.msra.mxu0 %v3378
      %3441 = vmatprep.subr.mxu0 0.0
      %3442 = vmatpush1.msra.mxu0 %v3379
      %3443 = vmatprep.subr.mxu0 0.0
      %3444 = vmatpush1.msra.mxu0 %v3380
      %3445 = vmatprep.subr.mxu0 0.0
      %3446 = vmatpush1.msra.mxu0 0.0
      %3447 = vmatprep.subr.mxu0 0.0
      %3448 = vmatpush1.msra.mxu0 0.0
      %3449 = vmatprep.subr.mxu0 0.0
      %3450 = vmatpush1.msra.mxu0 0.0
      %3451 = vmatprep.subr.mxu0 0.0
      %3452 = vmatpush1.msra.mxu0 0.0
      %3453 = vmatprep.subr.mxu0 0.0
      %3454 = vmatpush1.msra.mxu0 0.0
      %3455 = vmatprep.subr.mxu0 0.0
      %3456 = vmatpush1.msra.mxu0 0.0
      %3457 = vmatprep.subr.mxu0 0.0
      %3458 = vmatpush1.msra.mxu0 0.0
      %3459 = vmatprep.subr.mxu0 0.0
      %3460 = vmatpush1.msra.mxu0 0.0
      %3461 = vmatprep.subr.mxu0 0.0
      %3462 = vmatpush1.msra.mxu0 0.0
      %3463 = vmatprep.subr.mxu0 0.0
      %3464 = vmatpush1.msra.mxu0 0.0
      %3465 = vmatprep.subr.mxu0 0.0
      %3466 = vmatpush1.msra.mxu0 0.0
      %3467 = vmatprep.subr.mxu0 0.0
      %3468 = vmatpush1.msra.mxu0 0.0
      %3469 = vmatprep.subr.mxu0 0.0
      %3470 = vmatpush1.msra.mxu0 0.0
      %3471 = vmatprep.subr.mxu0 0.0
      %3472 = vmatpush1.msra.mxu0 0.0
      %3473 = vmatprep.subr.mxu0 0.0
      %3474 = vmatpush1.msra.mxu0 0.0
      %3475 = vmatprep.subr.mxu0 0.0
      %3476 = vmatpush1.msra.mxu0 0.0
      %3477 = vmatprep.subr.mxu0 0.0
      %3478 = vmatpush1.msra.mxu0 0.0
      %3479 = vmatprep.subr.mxu0 0.0
      %3480 = vmatpush1.msra.mxu0 0.0
      %3481 = vmatprep.subr.mxu0 0.0
      %3482 = vmatpush1.msra.mxu0 0.0
      %3483 = vmatprep.subr.mxu0 0.0
      %3484 = vmatpush1.msra.mxu0 0.0
      %3485 = vmatprep.subr.mxu0 0.0
      %3486 = vmatpush1.msra.mxu0 0.0
      %3487 = vmatprep.subr.mxu0 0.0
      %3488 = vmatpush1.msra.mxu0 0.0
      %3489 = vmatprep.subr.mxu0 0.0
      %3490 = vmatpush1.msra.mxu0 0.0
      %3491 = vmatprep.subr.mxu0 0.0
      %3492 = vmatpush1.msra.mxu0 0.0
      %3493 = vmatprep.subr.mxu0 0.0
      %3494 = vmatpush1.msra.mxu0 0.0
      %3495 = vmatprep.subr.mxu0 0.0
      %3496 = vmatpush1.msra.mxu0 0.0
      %3497 = vmatprep.subr.mxu0 0.0
      %3498 = vmatpush1.msra.mxu0 0.0
      %3499 = vmatprep.subr.mxu0 0.0
      %3500 = vmatpush1.msra.mxu0 0.0
      %3501 = vmatprep.mubr.f32.mxu0 0.0
      %3502 = vmatmul.mubr.f32.gmra.mrb[0].mxu0 %v3390
      %v3503 = vpop.f32.mrb[0].mxu0
      %v3504 = vadd.f32 %v3387, %v3503
      %v3505 = vpop.f32.mrb[0].mxu0
      %3506 = vmatprep.mubr.f32.mxu0 0.0
      %3507 = vmatmul.mubr.f32.gmra.mrb[0].mxu0 %v3393
      %v3508 = vpop.f32.mrb[0].mxu0
      %v3509 = vadd.f32 %v3387, %v3508
      %v3510 = vpop.f32.mrb[0].mxu0
      %3511 = vmatprep.mubr.f32.mxu0 0.0
      %3512 = vmatmul.mubr.f32.gmra.mrb[0].mxu0 %v3396
      %v3513 = vpop.f32.mrb[0].mxu0
      %v3514 = vadd.f32 %v3387, %v3513
      %v3515 = vpop.f32.mrb[0].mxu0
      %3516 = vmatprep.mubr.f32.mxu0 0.0
      %3517 = vmatmul.mubr.f32.gmra.mrb[0].mxu0 %v3399
      %v3518 = vpop.f32.mrb[0].mxu0
      %v3519 = vadd.f32 %v3387, %v3518
      %v3520 = vpop.f32.mrb[0].mxu0
      %3521 = vmatprep.mubr.f32.mxu0 0.0
      %3522 = vmatmul.mubr.f32.gmra.mrb[0].mxu0 %v3402
      %v3523 = vpop.f32.mrb[0].mxu0
      %v3524 = vadd.f32 %v3387, %v3523
      %v3525 = vpop.f32.mrb[0].mxu0
      %3526 = vmatprep.mubr.f32.mxu0 0.0
      %3527 = vmatmul.mubr.f32.gmra.mrb[0].mxu0 %v3405
      %v3528 = vpop.f32.mrb[0].mxu0
      %v3529 = vadd.f32 %v3387, %v3528
      %v3530 = vpop.f32.mrb[0].mxu0
      %3531 = vmatprep.mubr.f32.mxu0 0.0
      %3532 = vmatmul.mubr.f32.gmra.mrb[0].mxu0 %v3408
      %v3533 = vpop.f32.mrb[0].mxu0
      %v3534 = vadd.f32 %v3387, %v3533
      %v3535 = vpop.f32.mrb[0].mxu0
      %3536 = vmatprep.mubr.f32.mxu0 0.0
      %3537 = vmatmul.mubr.f32.gmra.mrb[0].mxu0 %v3411
      %v3538 = vpop.f32.mrb[0].mxu0
      %v3539 = vadd.f32 %v3387, %v3538
      %v3540 = vpop.f32.mrb[0].mxu0
      %3541 = vmatprep.mubr.f32.mxu0 0.0
      %3542 = vmatmul.mubr.f32.gmra.mrb[0].mxu0 %v3414
      %v3543 = vpop.f32.mrb[0].mxu0
      %v3544 = vadd.f32 %v3387, %v3543
      %v3545 = vpop.f32.mrb[0].mxu0
      %3546 = vmatprep.mubr.f32.mxu0 0.0
      %3547 = vmatmul.mubr.f32.gmra.mrb[0].mxu0 %v3417
      %v3548 = vpop.f32.mrb[0].mxu0
      %v3549 = vadd.f32 %v3387, %v3548
      %v3550 = vpop.f32.mrb[0].mxu0
      %3551 = vmatprep.mubr.f32.mxu0 0.0
      %3552 = vmatmul.mubr.f32.gmra.mrb[0].mxu0 %v3420
      %v3553 = vpop.f32.mrb[0].mxu0
      %v3554 = vadd.f32 %v3387, %v3553
      %v3555 = vpop.f32.mrb[0].mxu0
      %3556 = vmatprep.mubr.f32.mxu0 0.0
      %3557 = vmatmul.mubr.f32.gmra.mrb[0].mxu0 %v3423
      %v3558 = vpop.f32.mrb[0].mxu0
      %v3559 = vadd.f32 %v3387, %v3558
      %v3560 = vpop.f32.mrb[0].mxu0
      %3561 = vmatprep.mubr.f32.mxu0 0.0
      %3562 = vmatmul.mubr.f32.gmra.mrb[0].mxu0 %v3426
      %v3563 = vpop.f32.mrb[0].mxu0
      %v3564 = vadd.f32 %v3387, %v3563
      %v3565 = vpop.f32.mrb[0].mxu0
      %3566 = vmatprep.mubr.f32.mxu0 0.0
      %3567 = vmatmul.mubr.f32.gmra.mrb[0].mxu0 %v3429
      %v3568 = vpop.f32.mrb[0].mxu0
      %v3569 = vadd.f32 %v3387, %v3568
      %v3570 = vpop.f32.mrb[0].mxu0
      %3571 = vmatprep.mubr.f32.mxu0 0.0
      %3572 = vmatmul.mubr.f32.gmra.mrb[0].mxu0 %v3432
      %v3573 = vpop.f32.mrb[0].mxu0
      %v3574 = vadd.f32 %v3387, %v3573
      %v3575 = vpop.f32.mrb[0].mxu0
      %3576 = vmatprep.mubr.f32.mxu0 0.0
      %3577 = vmatmul.mubr.f32.gmra.mrb[0].mxu0 %v3435
      %v3578 = vpop.f32.mrb[0].mxu0
      %v3579 = vadd.f32 %v3387, %v3578
      %v3580 = vpop.f32.mrb[0].mxu0
      %3581 = vdwg.mxu0
      %v3582 = vmax.f32 %v3504, 0.0
      %v3583 = vmax.f32 %v3509, 0.0
      %v3584 = vmax.f32 %v3514, 0.0
      %v3585 = vmax.f32 %v3519, 0.0
      %v3586 = vmax.f32 %v3524, 0.0
      %v3587 = vmax.f32 %v3529, 0.0
      %v3588 = vmax.f32 %v3534, 0.0
      %v3589 = vmax.f32 %v3539, 0.0
      %v3590 = vmax.f32 %v3544, 0.0
      %v3591 = vmax.f32 %v3549, 0.0
      %v3592 = vmax.f32 %v3554, 0.0
      %v3593 = vmax.f32 %v3559, 0.0
      %v3594 = vmax.f32 %v3564, 0.0
      %v3595 = vmax.f32 %v3569, 0.0
      %v3596 = vmax.f32 %v3574, 0.0
      %v3597 = vmax.f32 %v3579, 0.0
      %v3598 = vadd.f32 %v3138, %v3582
      %v3599 = vadd.f32 %v3139, %v3583
      %v3600 = vadd.f32 %v3140, %v3584
      %v3601 = vadd.f32 %v3141, %v3585
      %v3602 = vadd.f32 %v3142, %v3586
      %v3603 = vadd.f32 %v3143, %v3587
      %v3604 = vadd.f32 %v3144, %v3588
      %v3605 = vadd.f32 %v3145, %v3589
      %v3606 = vadd.f32 %v3146, %v3590
      %v3607 = vadd.f32 %v3147, %v3591
      %v3608 = vadd.f32 %v3148, %v3592
      %v3609 = vadd.f32 %v3149, %v3593
      %v3610 = vadd.f32 %v3150, %v3594
      %v3611 = vadd.f32 %v3151, %v3595
      %v3612 = vadd.f32 %v3152, %v3596
      %v3613 = vadd.f32 %v3153, %v3597
      %s3614 = scalar_lea.vmem %s12, 128
      %v3615 = vld [vmem:[%s3614] sm:$0xff]
      %v3616 = vld [vmem:[%s3614 + $0x8] sm:$0xff]
      %v3617 = vld [vmem:[%s3614 + $0x10] sm:$0xff]
      %v3618 = vld [vmem:[%s3614 + $0x18] sm:$0xff]
      %s3619 = scalar_lea.vmem %s13, 4
      %v3620 = vld [vmem:[%s3619] sm:$0x1]
      %v3622 = vlaneseq
      %v3623 = vshrl.u32 %v3622, 7
      %v3624 = vsub.s32 0, %v3623
      %v3625 = vrot.slane %v3620, %v3624
      %v3628 = vsel %vm2376, %v3598, 0
      %v3631 = vsel %vm2376, %v3599, 0
      %v3634 = vsel %vm2376, %v3600, 0
      %v3637 = vsel %vm2376, %v3601, 0
      %v3640 = vsel %vm2376, %v3602, 0
      %v3643 = vsel %vm2376, %v3603, 0
      %v3646 = vsel %vm2376, %v3604, 0
      %v3649 = vsel %vm2376, %v3605, 0
      %v3652 = vsel %vm2376, %v3606, 0
      %v3655 = vsel %vm2376, %v3607, 0
      %v3658 = vsel %vm2376, %v3608, 0
      %v3661 = vsel %vm2376, %v3609, 0
      %v3664 = vsel %vm2376, %v3610, 0
      %v3667 = vsel %vm2376, %v3611, 0
      %v3670 = vsel %vm2376, %v3612, 0
      %v3673 = vsel %vm2376, %v3613, 0
      %3675 = vmatprep.subr.mxu0 0.0
      %3676 = vmatpush1.msra.mxu0 %v3615
      %3677 = vmatprep.subr.mxu0 0.0
      %3678 = vmatpush1.msra.mxu0 %v3616
      %3679 = vmatprep.subr.mxu0 0.0
      %3680 = vmatpush1.msra.mxu0 %v3617
      %3681 = vmatprep.subr.mxu0 0.0
      %3682 = vmatpush1.msra.mxu0 %v3618
      %3683 = vmatprep.subr.mxu0 0.0
      %3684 = vmatpush1.msra.mxu0 0.0
      %3685 = vmatprep.subr.mxu0 0.0
      %3686 = vmatpush1.msra.mxu0 0.0
      %3687 = vmatprep.subr.mxu0 0.0
      %3688 = vmatpush1.msra.mxu0 0.0
      %3689 = vmatprep.subr.mxu0 0.0
      %3690 = vmatpush1.msra.mxu0 0.0
      %3691 = vmatprep.subr.mxu0 0.0
      %3692 = vmatpush1.msra.mxu0 0.0
      %3693 = vmatprep.subr.mxu0 0.0
      %3694 = vmatpush1.msra.mxu0 0.0
      %3695 = vmatprep.subr.mxu0 0.0
      %3696 = vmatpush1.msra.mxu0 0.0
      %3697 = vmatprep.subr.mxu0 0.0
      %3698 = vmatpush1.msra.mxu0 0.0
      %3699 = vmatprep.subr.mxu0 0.0
      %3700 = vmatpush1.msra.mxu0 0.0
      %3701 = vmatprep.subr.mxu0 0.0
      %3702 = vmatpush1.msra.mxu0 0.0
      %3703 = vmatprep.subr.mxu0 0.0
      %3704 = vmatpush1.msra.mxu0 0.0
      %3705 = vmatprep.subr.mxu0 0.0
      %3706 = vmatpush1.msra.mxu0 0.0
      %3707 = vmatprep.subr.mxu0 0.0
      %3708 = vmatpush1.msra.mxu0 0.0
      %3709 = vmatprep.subr.mxu0 0.0
      %3710 = vmatpush1.msra.mxu0 0.0
      %3711 = vmatprep.subr.mxu0 0.0
      %3712 = vmatpush1.msra.mxu0 0.0
      %3713 = vmatprep.subr.mxu0 0.0
      %3714 = vmatpush1.msra.mxu0 0.0
      %3715 = vmatprep.subr.mxu0 0.0
      %3716 = vmatpush1.msra.mxu0 0.0
      %3717 = vmatprep.subr.mxu0 0.0
      %3718 = vmatpush1.msra.mxu0 0.0
      %3719 = vmatprep.subr.mxu0 0.0
      %3720 = vmatpush1.msra.mxu0 0.0
      %3721 = vmatprep.subr.mxu0 0.0
      %3722 = vmatpush1.msra.mxu0 0.0
      %3723 = vmatprep.subr.mxu0 0.0
      %3724 = vmatpush1.msra.mxu0 0.0
      %3725 = vmatprep.subr.mxu0 0.0
      %3726 = vmatpush1.msra.mxu0 0.0
      %3727 = vmatprep.subr.mxu0 0.0
      %3728 = vmatpush1.msra.mxu0 0.0
      %3729 = vmatprep.subr.mxu0 0.0
      %3730 = vmatpush1.msra.mxu0 0.0
      %3731 = vmatprep.subr.mxu0 0.0
      %3732 = vmatpush1.msra.mxu0 0.0
      %3733 = vmatprep.subr.mxu0 0.0
      %3734 = vmatpush1.msra.mxu0 0.0
      %3735 = vmatprep.subr.mxu0 0.0
      %3736 = vmatpush1.msra.mxu0 0.0
      %3737 = vmatprep.subr.mxu0 0.0
      %3738 = vmatpush1.msra.mxu0 0.0
      %3739 = vmatprep.mubr.f32.mxu0 0.0
      %3740 = vmatmul.mubr.f32.gmra.mrb[0].mxu0 %v3628
      %v3741 = vpop.f32.mrb[0].mxu0
      %v3742 = vadd.f32 %v3625, %v3741
      %v3743 = vpop.f32.mrb[0].mxu0
      %3744 = vmatprep.mubr.f32.mxu0 0.0
      %3745 = vmatmul.mubr.f32.gmra.mrb[0].mxu0 %v3631
      %v3746 = vpop.f32.mrb[0].mxu0
      %v3747 = vadd.f32 %v3625, %v3746
      %v3748 = vpop.f32.mrb[0].mxu0
      %3749 = vmatprep.mubr.f32.mxu0 0.0
      %3750 = vmatmul.mubr.f32.gmra.mrb[0].mxu0 %v3634
      %v3751 = vpop.f32.mrb[0].mxu0
      %v3752 = vadd.f32 %v3625, %v3751
      %v3753 = vpop.f32.mrb[0].mxu0
      %3754 = vmatprep.mubr.f32.mxu0 0.0
      %3755 = vmatmul.mubr.f32.gmra.mrb[0].mxu0 %v3637
      %v3756 = vpop.f32.mrb[0].mxu0
      %v3757 = vadd.f32 %v3625, %v3756
      %v3758 = vpop.f32.mrb[0].mxu0
      %3759 = vmatprep.mubr.f32.mxu0 0.0
      %3760 = vmatmul.mubr.f32.gmra.mrb[0].mxu0 %v3640
      %v3761 = vpop.f32.mrb[0].mxu0
      %v3762 = vadd.f32 %v3625, %v3761
      %v3763 = vpop.f32.mrb[0].mxu0
      %3764 = vmatprep.mubr.f32.mxu0 0.0
      %3765 = vmatmul.mubr.f32.gmra.mrb[0].mxu0 %v3643
      %v3766 = vpop.f32.mrb[0].mxu0
      %v3767 = vadd.f32 %v3625, %v3766
      %v3768 = vpop.f32.mrb[0].mxu0
      %3769 = vmatprep.mubr.f32.mxu0 0.0
      %3770 = vmatmul.mubr.f32.gmra.mrb[0].mxu0 %v3646
      %v3771 = vpop.f32.mrb[0].mxu0
      %v3772 = vadd.f32 %v3625, %v3771
      %v3773 = vpop.f32.mrb[0].mxu0
      %3774 = vmatprep.mubr.f32.mxu0 0.0
      %3775 = vmatmul.mubr.f32.gmra.mrb[0].mxu0 %v3649
      %v3776 = vpop.f32.mrb[0].mxu0
      %v3777 = vadd.f32 %v3625, %v3776
      %v3778 = vpop.f32.mrb[0].mxu0
      %3779 = vmatprep.mubr.f32.mxu0 0.0
      %3780 = vmatmul.mubr.f32.gmra.mrb[0].mxu0 %v3652
      %v3781 = vpop.f32.mrb[0].mxu0
      %v3782 = vadd.f32 %v3625, %v3781
      %v3783 = vpop.f32.mrb[0].mxu0
      %3784 = vmatprep.mubr.f32.mxu0 0.0
      %3785 = vmatmul.mubr.f32.gmra.mrb[0].mxu0 %v3655
      %v3786 = vpop.f32.mrb[0].mxu0
      %v3787 = vadd.f32 %v3625, %v3786
      %v3788 = vpop.f32.mrb[0].mxu0
      %3789 = vmatprep.mubr.f32.mxu0 0.0
      %3790 = vmatmul.mubr.f32.gmra.mrb[0].mxu0 %v3658
      %v3791 = vpop.f32.mrb[0].mxu0
      %v3792 = vadd.f32 %v3625, %v3791
      %v3793 = vpop.f32.mrb[0].mxu0
      %3794 = vmatprep.mubr.f32.mxu0 0.0
      %3795 = vmatmul.mubr.f32.gmra.mrb[0].mxu0 %v3661
      %v3796 = vpop.f32.mrb[0].mxu0
      %v3797 = vadd.f32 %v3625, %v3796
      %v3798 = vpop.f32.mrb[0].mxu0
      %3799 = vmatprep.mubr.f32.mxu0 0.0
      %3800 = vmatmul.mubr.f32.gmra.mrb[0].mxu0 %v3664
      %v3801 = vpop.f32.mrb[0].mxu0
      %v3802 = vadd.f32 %v3625, %v3801
      %v3803 = vpop.f32.mrb[0].mxu0
      %3804 = vmatprep.mubr.f32.mxu0 0.0
      %3805 = vmatmul.mubr.f32.gmra.mrb[0].mxu0 %v3667
      %v3806 = vpop.f32.mrb[0].mxu0
      %v3807 = vadd.f32 %v3625, %v3806
      %v3808 = vpop.f32.mrb[0].mxu0
      %3809 = vmatprep.mubr.f32.mxu0 0.0
      %3810 = vmatmul.mubr.f32.gmra.mrb[0].mxu0 %v3670
      %v3811 = vpop.f32.mrb[0].mxu0
      %v3812 = vadd.f32 %v3625, %v3811
      %v3813 = vpop.f32.mrb[0].mxu0
      %3814 = vmatprep.mubr.f32.mxu0 0.0
      %3815 = vmatmul.mubr.f32.gmra.mrb[0].mxu0 %v3673
      %v3816 = vpop.f32.mrb[0].mxu0
      %v3817 = vadd.f32 %v3625, %v3816
      %v3818 = vpop.f32.mrb[0].mxu0
      %3819 = vdwg.mxu0
      %v3820 = vmax.f32 %v3742, 0.0
      %v3821 = vmax.f32 %v3747, 0.0
      %v3822 = vmax.f32 %v3752, 0.0
      %v3823 = vmax.f32 %v3757, 0.0
      %v3824 = vmax.f32 %v3762, 0.0
      %v3825 = vmax.f32 %v3767, 0.0
      %v3826 = vmax.f32 %v3772, 0.0
      %v3827 = vmax.f32 %v3777, 0.0
      %v3828 = vmax.f32 %v3782, 0.0
      %v3829 = vmax.f32 %v3787, 0.0
      %v3830 = vmax.f32 %v3792, 0.0
      %v3831 = vmax.f32 %v3797, 0.0
      %v3832 = vmax.f32 %v3802, 0.0
      %v3833 = vmax.f32 %v3807, 0.0
      %v3834 = vmax.f32 %v3812, 0.0
      %v3835 = vmax.f32 %v3817, 0.0
      %s3836 = scalar_lea.vmem %s12, 160
      %v3837 = vld [vmem:[%s3836] sm:$0xff]
      %v3838 = vld [vmem:[%s3836 + $0x8] sm:$0xff]
      %v3839 = vld [vmem:[%s3836 + $0x10] sm:$0xff]
      %v3840 = vld [vmem:[%s3836 + $0x18] sm:$0xff]
      %s3841 = scalar_lea.vmem %s13, 5
      %v3842 = vld [vmem:[%s3841] sm:$0x1]
      %v3844 = vlaneseq
      %v3845 = vshrl.u32 %v3844, 7
      %v3846 = vsub.s32 0, %v3845
      %v3847 = vrot.slane %v3842, %v3846
      %v3850 = vsel %vm2376, %v3820, 0
      %v3853 = vsel %vm2376, %v3821, 0
      %v3856 = vsel %vm2376, %v3822, 0
      %v3859 = vsel %vm2376, %v3823, 0
      %v3862 = vsel %vm2376, %v3824, 0
      %v3865 = vsel %vm2376, %v3825, 0
      %v3868 = vsel %vm2376, %v3826, 0
      %v3871 = vsel %vm2376, %v3827, 0
      %v3874 = vsel %vm2376, %v3828, 0
      %v3877 = vsel %vm2376, %v3829, 0
      %v3880 = vsel %vm2376, %v3830, 0
      %v3883 = vsel %vm2376, %v3831, 0
      %v3886 = vsel %vm2376, %v3832, 0
      %v3889 = vsel %vm2376, %v3833, 0
      %v3892 = vsel %vm2376, %v3834, 0
      %v3895 = vsel %vm2376, %v3835, 0
      %3897 = vmatprep.subr.mxu0 0.0
      %3898 = vmatpush1.msra.mxu0 %v3837
      %3899 = vmatprep.subr.mxu0 0.0
      %3900 = vmatpush1.msra.mxu0 %v3838
      %3901 = vmatprep.subr.mxu0 0.0
      %3902 = vmatpush1.msra.mxu0 %v3839
      %3903 = vmatprep.subr.mxu0 0.0
      %3904 = vmatpush1.msra.mxu0 %v3840
      %3905 = vmatprep.subr.mxu0 0.0
      %3906 = vmatpush1.msra.mxu0 0.0
      %3907 = vmatprep.subr.mxu0 0.0
      %3908 = vmatpush1.msra.mxu0 0.0
      %3909 = vmatprep.subr.mxu0 0.0
      %3910 = vmatpush1.msra.mxu0 0.0
      %3911 = vmatprep.subr.mxu0 0.0
      %3912 = vmatpush1.msra.mxu0 0.0
      %3913 = vmatprep.subr.mxu0 0.0
      %3914 = vmatpush1.msra.mxu0 0.0
      %3915 = vmatprep.subr.mxu0 0.0
      %3916 = vmatpush1.msra.mxu0 0.0
      %3917 = vmatprep.subr.mxu0 0.0
      %3918 = vmatpush1.msra.mxu0 0.0
      %3919 = vmatprep.subr.mxu0 0.0
      %3920 = vmatpush1.msra.mxu0 0.0
      %3921 = vmatprep.subr.mxu0 0.0
      %3922 = vmatpush1.msra.mxu0 0.0
      %3923 = vmatprep.subr.mxu0 0.0
      %3924 = vmatpush1.msra.mxu0 0.0
      %3925 = vmatprep.subr.mxu0 0.0
      %3926 = vmatpush1.msra.mxu0 0.0
      %3927 = vmatprep.subr.mxu0 0.0
      %3928 = vmatpush1.msra.mxu0 0.0
      %3929 = vmatprep.subr.mxu0 0.0
      %3930 = vmatpush1.msra.mxu0 0.0
      %3931 = vmatprep.subr.mxu0 0.0
      %3932 = vmatpush1.msra.mxu0 0.0
      %3933 = vmatprep.subr.mxu0 0.0
      %3934 = vmatpush1.msra.mxu0 0.0
      %3935 = vmatprep.subr.mxu0 0.0
      %3936 = vmatpush1.msra.mxu0 0.0
      %3937 = vmatprep.subr.mxu0 0.0
      %3938 = vmatpush1.msra.mxu0 0.0
      %3939 = vmatprep.subr.mxu0 0.0
      %3940 = vmatpush1.msra.mxu0 0.0
      %3941 = vmatprep.subr.mxu0 0.0
      %3942 = vmatpush1.msra.mxu0 0.0
      %3943 = vmatprep.subr.mxu0 0.0
      %3944 = vmatpush1.msra.mxu0 0.0
      %3945 = vmatprep.subr.mxu0 0.0
      %3946 = vmatpush1.msra.mxu0 0.0
      %3947 = vmatprep.subr.mxu0 0.0
      %3948 = vmatpush1.msra.mxu0 0.0
      %3949 = vmatprep.subr.mxu0 0.0
      %3950 = vmatpush1.msra.mxu0 0.0
      %3951 = vmatprep.subr.mxu0 0.0
      %3952 = vmatpush1.msra.mxu0 0.0
      %3953 = vmatprep.subr.mxu0 0.0
      %3954 = vmatpush1.msra.mxu0 0.0
      %3955 = vmatprep.subr.mxu0 0.0
      %3956 = vmatpush1.msra.mxu0 0.0
      %3957 = vmatprep.subr.mxu0 0.0
      %3958 = vmatpush1.msra.mxu0 0.0
      %3959 = vmatprep.subr.mxu0 0.0
      %3960 = vmatpush1.msra.mxu0 0.0
      %3961 = vmatprep.mubr.f32.mxu0 0.0
      %3962 = vmatmul.mubr.f32.gmra.mrb[0].mxu0 %v3850
      %v3963 = vpop.f32.mrb[0].mxu0
      %v3964 = vadd.f32 %v3847, %v3963
      %v3965 = vpop.f32.mrb[0].mxu0
      %3966 = vmatprep.mubr.f32.mxu0 0.0
      %3967 = vmatmul.mubr.f32.gmra.mrb[0].mxu0 %v3853
      %v3968 = vpop.f32.mrb[0].mxu0
      %v3969 = vadd.f32 %v3847, %v3968
      %v3970 = vpop.f32.mrb[0].mxu0
      %3971 = vmatprep.mubr.f32.mxu0 0.0
      %3972 = vmatmul.mubr.f32.gmra.mrb[0].mxu0 %v3856
      %v3973 = vpop.f32.mrb[0].mxu0
      %v3974 = vadd.f32 %v3847, %v3973
      %v3975 = vpop.f32.mrb[0].mxu0
      %3976 = vmatprep.mubr.f32.mxu0 0.0
      %3977 = vmatmul.mubr.f32.gmra.mrb[0].mxu0 %v3859
      %v3978 = vpop.f32.mrb[0].mxu0
      %v3979 = vadd.f32 %v3847, %v3978
      %v3980 = vpop.f32.mrb[0].mxu0
      %3981 = vmatprep.mubr.f32.mxu0 0.0
      %3982 = vmatmul.mubr.f32.gmra.mrb[0].mxu0 %v3862
      %v3983 = vpop.f32.mrb[0].mxu0
      %v3984 = vadd.f32 %v3847, %v3983
      %v3985 = vpop.f32.mrb[0].mxu0
      %3986 = vmatprep.mubr.f32.mxu0 0.0
      %3987 = vmatmul.mubr.f32.gmra.mrb[0].mxu0 %v3865
      %v3988 = vpop.f32.mrb[0].mxu0
      %v3989 = vadd.f32 %v3847, %v3988
      %v3990 = vpop.f32.mrb[0].mxu0
      %3991 = vmatprep.mubr.f32.mxu0 0.0
      %3992 = vmatmul.mubr.f32.gmra.mrb[0].mxu0 %v3868
      %v3993 = vpop.f32.mrb[0].mxu0
      %v3994 = vadd.f32 %v3847, %v3993
      %v3995 = vpop.f32.mrb[0].mxu0
      %3996 = vmatprep.mubr.f32.mxu0 0.0
      %3997 = vmatmul.mubr.f32.gmra.mrb[0].mxu0 %v3871
      %v3998 = vpop.f32.mrb[0].mxu0
      %v3999 = vadd.f32 %v3847, %v3998
      %v4000 = vpop.f32.mrb[0].mxu0
      %4001 = vmatprep.mubr.f32.mxu0 0.0
      %4002 = vmatmul.mubr.f32.gmra.mrb[0].mxu0 %v3874
      %v4003 = vpop.f32.mrb[0].mxu0
      %v4004 = vadd.f32 %v3847, %v4003
      %v4005 = vpop.f32.mrb[0].mxu0
      %4006 = vmatprep.mubr.f32.mxu0 0.0
      %4007 = vmatmul.mubr.f32.gmra.mrb[0].mxu0 %v3877
      %v4008 = vpop.f32.mrb[0].mxu0
      %v4009 = vadd.f32 %v3847, %v4008
      %v4010 = vpop.f32.mrb[0].mxu0
      %4011 = vmatprep.mubr.f32.mxu0 0.0
      %4012 = vmatmul.mubr.f32.gmra.mrb[0].mxu0 %v3880
      %v4013 = vpop.f32.mrb[0].mxu0
      %v4014 = vadd.f32 %v3847, %v4013
      %v4015 = vpop.f32.mrb[0].mxu0
      %4016 = vmatprep.mubr.f32.mxu0 0.0
      %4017 = vmatmul.mubr.f32.gmra.mrb[0].mxu0 %v3883
      %v4018 = vpop.f32.mrb[0].mxu0
      %v4019 = vadd.f32 %v3847, %v4018
      %v4020 = vpop.f32.mrb[0].mxu0
      %4021 = vmatprep.mubr.f32.mxu0 0.0
      %4022 = vmatmul.mubr.f32.gmra.mrb[0].mxu0 %v3886
      %v4023 = vpop.f32.mrb[0].mxu0
      %v4024 = vadd.f32 %v3847, %v4023
      %v4025 = vpop.f32.mrb[0].mxu0
      %4026 = vmatprep.mubr.f32.mxu0 0.0
      %4027 = vmatmul.mubr.f32.gmra.mrb[0].mxu0 %v3889
      %v4028 = vpop.f32.mrb[0].mxu0
      %v4029 = vadd.f32 %v3847, %v4028
      %v4030 = vpop.f32.mrb[0].mxu0
      %4031 = vmatprep.mubr.f32.mxu0 0.0
      %4032 = vmatmul.mubr.f32.gmra.mrb[0].mxu0 %v3892
      %v4033 = vpop.f32.mrb[0].mxu0
      %v4034 = vadd.f32 %v3847, %v4033
      %v4035 = vpop.f32.mrb[0].mxu0
      %4036 = vmatprep.mubr.f32.mxu0 0.0
      %4037 = vmatmul.mubr.f32.gmra.mrb[0].mxu0 %v3895
      %v4038 = vpop.f32.mrb[0].mxu0
      %v4039 = vadd.f32 %v3847, %v4038
      %v4040 = vpop.f32.mrb[0].mxu0
      %4041 = vdwg.mxu0
      %v4042 = vmax.f32 %v3964, 0.0
      %v4043 = vmax.f32 %v3969, 0.0
      %v4044 = vmax.f32 %v3974, 0.0
      %v4045 = vmax.f32 %v3979, 0.0
      %v4046 = vmax.f32 %v3984, 0.0
      %v4047 = vmax.f32 %v3989, 0.0
      %v4048 = vmax.f32 %v3994, 0.0
      %v4049 = vmax.f32 %v3999, 0.0
      %v4050 = vmax.f32 %v4004, 0.0
      %v4051 = vmax.f32 %v4009, 0.0
      %v4052 = vmax.f32 %v4014, 0.0
      %v4053 = vmax.f32 %v4019, 0.0
      %v4054 = vmax.f32 %v4024, 0.0
      %v4055 = vmax.f32 %v4029, 0.0
      %v4056 = vmax.f32 %v4034, 0.0
      %v4057 = vmax.f32 %v4039, 0.0
      %v4058 = vadd.f32 %v3598, %v4042
      %v4059 = vadd.f32 %v3599, %v4043
      %v4060 = vadd.f32 %v3600, %v4044
      %v4061 = vadd.f32 %v3601, %v4045
      %v4062 = vadd.f32 %v3602, %v4046
      %v4063 = vadd.f32 %v3603, %v4047
      %v4064 = vadd.f32 %v3604, %v4048
      %v4065 = vadd.f32 %v3605, %v4049
      %v4066 = vadd.f32 %v3606, %v4050
      %v4067 = vadd.f32 %v3607, %v4051
      %v4068 = vadd.f32 %v3608, %v4052
      %v4069 = vadd.f32 %v3609, %v4053
      %v4070 = vadd.f32 %v3610, %v4054
      %v4071 = vadd.f32 %v3611, %v4055
      %v4072 = vadd.f32 %v3612, %v4056
      %v4073 = vadd.f32 %v3613, %v4057
      %v4074 = vld [vmem:[%s16] sm:$0xff]
      %v4075 = vld [vmem:[%s16 + $0x8] sm:$0xff]
      %v4076 = vld [vmem:[%s16 + $0x10] sm:$0xff]
      %v4077 = vld [vmem:[%s16 + $0x18] sm:$0xff]
      %v4078 = vld [vmem:[%s17] sm:$0x1]
      %v4080 = vlaneseq
      %v4081 = vshrl.u32 %v4080, 7
      %v4082 = vsub.s32 0, %v4081
      %v4083 = vrot.slane %v4078, %v4082
      %v4086 = vsel %vm2376, %v4058, 0
      %v4089 = vsel %vm2376, %v4059, 0
      %v4092 = vsel %vm2376, %v4060, 0
      %v4095 = vsel %vm2376, %v4061, 0
      %v4098 = vsel %vm2376, %v4062, 0
      %v4101 = vsel %vm2376, %v4063, 0
      %v4104 = vsel %vm2376, %v4064, 0
      %v4107 = vsel %vm2376, %v4065, 0
      %v4110 = vsel %vm2376, %v4066, 0
      %v4113 = vsel %vm2376, %v4067, 0
      %v4116 = vsel %vm2376, %v4068, 0
      %v4119 = vsel %vm2376, %v4069, 0
      %v4122 = vsel %vm2376, %v4070, 0
      %v4125 = vsel %vm2376, %v4071, 0
      %v4128 = vsel %vm2376, %v4072, 0
      %v4131 = vsel %vm2376, %v4073, 0
      %4133 = vmatprep.subr.mxu0 0.0
      %4134 = vmatpush1.msra.mxu0 %v4074
      %4135 = vmatprep.subr.mxu0 0.0
      %4136 = vmatpush1.msra.mxu0 %v4075
      %4137 = vmatprep.subr.mxu0 0.0
      %4138 = vmatpush1.msra.mxu0 %v4076
      %4139 = vmatprep.subr.mxu0 0.0
      %4140 = vmatpush1.msra.mxu0 %v4077
      %4141 = vmatprep.subr.mxu0 0.0
      %4142 = vmatpush1.msra.mxu0 0.0
      %4143 = vmatprep.subr.mxu0 0.0
      %4144 = vmatpush1.msra.mxu0 0.0
      %4145 = vmatprep.subr.mxu0 0.0
      %4146 = vmatpush1.msra.mxu0 0.0
      %4147 = vmatprep.subr.mxu0 0.0
      %4148 = vmatpush1.msra.mxu0 0.0
      %4149 = vmatprep.subr.mxu0 0.0
      %4150 = vmatpush1.msra.mxu0 0.0
      %4151 = vmatprep.subr.mxu0 0.0
      %4152 = vmatpush1.msra.mxu0 0.0
      %4153 = vmatprep.subr.mxu0 0.0
      %4154 = vmatpush1.msra.mxu0 0.0
      %4155 = vmatprep.subr.mxu0 0.0
      %4156 = vmatpush1.msra.mxu0 0.0
      %4157 = vmatprep.subr.mxu0 0.0
      %4158 = vmatpush1.msra.mxu0 0.0
      %4159 = vmatprep.subr.mxu0 0.0
      %4160 = vmatpush1.msra.mxu0 0.0
      %4161 = vmatprep.subr.mxu0 0.0
      %4162 = vmatpush1.msra.mxu0 0.0
      %4163 = vmatprep.subr.mxu0 0.0
      %4164 = vmatpush1.msra.mxu0 0.0
      %4165 = vmatprep.subr.mxu0 0.0
      %4166 = vmatpush1.msra.mxu0 0.0
      %4167 = vmatprep.subr.mxu0 0.0
      %4168 = vmatpush1.msra.mxu0 0.0
      %4169 = vmatprep.subr.mxu0 0.0
      %4170 = vmatpush1.msra.mxu0 0.0
      %4171 = vmatprep.subr.mxu0 0.0
      %4172 = vmatpush1.msra.mxu0 0.0
      %4173 = vmatprep.subr.mxu0 0.0
      %4174 = vmatpush1.msra.mxu0 0.0
      %4175 = vmatprep.subr.mxu0 0.0
      %4176 = vmatpush1.msra.mxu0 0.0
      %4177 = vmatprep.subr.mxu0 0.0
      %4178 = vmatpush1.msra.mxu0 0.0
      %4179 = vmatprep.subr.mxu0 0.0
      %4180 = vmatpush1.msra.mxu0 0.0
      %4181 = vmatprep.subr.mxu0 0.0
      %4182 = vmatpush1.msra.mxu0 0.0
      %4183 = vmatprep.subr.mxu0 0.0
      %4184 = vmatpush1.msra.mxu0 0.0
      %4185 = vmatprep.subr.mxu0 0.0
      %4186 = vmatpush1.msra.mxu0 0.0
      %4187 = vmatprep.subr.mxu0 0.0
      %4188 = vmatpush1.msra.mxu0 0.0
      %4189 = vmatprep.subr.mxu0 0.0
      %4190 = vmatpush1.msra.mxu0 0.0
      %4191 = vmatprep.subr.mxu0 0.0
      %4192 = vmatpush1.msra.mxu0 0.0
      %4193 = vmatprep.subr.mxu0 0.0
      %4194 = vmatpush1.msra.mxu0 0.0
      %4195 = vmatprep.subr.mxu0 0.0
      %4196 = vmatpush1.msra.mxu0 0.0
      %4197 = vmatprep.mubr.f32.mxu0 0.0
      %4198 = vmatmul.mubr.f32.gmra.mrb[0].mxu0 %v4086
      %v4199 = vpop.f32.mrb[0].mxu0
      %v4200 = vadd.f32 %v4083, %v4199
      %v4201 = vpop.f32.mrb[0].mxu0
      %4202 = vmatprep.mubr.f32.mxu0 0.0
      %4203 = vmatmul.mubr.f32.gmra.mrb[0].mxu0 %v4089
      %v4204 = vpop.f32.mrb[0].mxu0
      %v4205 = vadd.f32 %v4083, %v4204
      %v4206 = vpop.f32.mrb[0].mxu0
      %4207 = vmatprep.mubr.f32.mxu0 0.0
      %4208 = vmatmul.mubr.f32.gmra.mrb[0].mxu0 %v4092
      %v4209 = vpop.f32.mrb[0].mxu0
      %v4210 = vadd.f32 %v4083, %v4209
      %v4211 = vpop.f32.mrb[0].mxu0
      %4212 = vmatprep.mubr.f32.mxu0 0.0
      %4213 = vmatmul.mubr.f32.gmra.mrb[0].mxu0 %v4095
      %v4214 = vpop.f32.mrb[0].mxu0
      %v4215 = vadd.f32 %v4083, %v4214
      %v4216 = vpop.f32.mrb[0].mxu0
      %4217 = vmatprep.mubr.f32.mxu0 0.0
      %4218 = vmatmul.mubr.f32.gmra.mrb[0].mxu0 %v4098
      %v4219 = vpop.f32.mrb[0].mxu0
      %v4220 = vadd.f32 %v4083, %v4219
      %v4221 = vpop.f32.mrb[0].mxu0
      %4222 = vmatprep.mubr.f32.mxu0 0.0
      %4223 = vmatmul.mubr.f32.gmra.mrb[0].mxu0 %v4101
      %v4224 = vpop.f32.mrb[0].mxu0
      %v4225 = vadd.f32 %v4083, %v4224
      %v4226 = vpop.f32.mrb[0].mxu0
      %4227 = vmatprep.mubr.f32.mxu0 0.0
      %4228 = vmatmul.mubr.f32.gmra.mrb[0].mxu0 %v4104
      %v4229 = vpop.f32.mrb[0].mxu0
      %v4230 = vadd.f32 %v4083, %v4229
      %v4231 = vpop.f32.mrb[0].mxu0
      %4232 = vmatprep.mubr.f32.mxu0 0.0
      %4233 = vmatmul.mubr.f32.gmra.mrb[0].mxu0 %v4107
      %v4234 = vpop.f32.mrb[0].mxu0
      %v4235 = vadd.f32 %v4083, %v4234
      %v4236 = vpop.f32.mrb[0].mxu0
      %4237 = vmatprep.mubr.f32.mxu0 0.0
      %4238 = vmatmul.mubr.f32.gmra.mrb[0].mxu0 %v4110
      %v4239 = vpop.f32.mrb[0].mxu0
      %v4240 = vadd.f32 %v4083, %v4239
      %v4241 = vpop.f32.mrb[0].mxu0
      %4242 = vmatprep.mubr.f32.mxu0 0.0
      %4243 = vmatmul.mubr.f32.gmra.mrb[0].mxu0 %v4113
      %v4244 = vpop.f32.mrb[0].mxu0
      %v4245 = vadd.f32 %v4083, %v4244
      %v4246 = vpop.f32.mrb[0].mxu0
      %4247 = vmatprep.mubr.f32.mxu0 0.0
      %4248 = vmatmul.mubr.f32.gmra.mrb[0].mxu0 %v4116
      %v4249 = vpop.f32.mrb[0].mxu0
      %v4250 = vadd.f32 %v4083, %v4249
      %v4251 = vpop.f32.mrb[0].mxu0
      %4252 = vmatprep.mubr.f32.mxu0 0.0
      %4253 = vmatmul.mubr.f32.gmra.mrb[0].mxu0 %v4119
      %v4254 = vpop.f32.mrb[0].mxu0
      %v4255 = vadd.f32 %v4083, %v4254
      %v4256 = vpop.f32.mrb[0].mxu0
      %4257 = vmatprep.mubr.f32.mxu0 0.0
      %4258 = vmatmul.mubr.f32.gmra.mrb[0].mxu0 %v4122
      %v4259 = vpop.f32.mrb[0].mxu0
      %v4260 = vadd.f32 %v4083, %v4259
      %v4261 = vpop.f32.mrb[0].mxu0
      %4262 = vmatprep.mubr.f32.mxu0 0.0
      %4263 = vmatmul.mubr.f32.gmra.mrb[0].mxu0 %v4125
      %v4264 = vpop.f32.mrb[0].mxu0
      %v4265 = vadd.f32 %v4083, %v4264
      %v4266 = vpop.f32.mrb[0].mxu0
      %4267 = vmatprep.mubr.f32.mxu0 0.0
      %4268 = vmatmul.mubr.f32.gmra.mrb[0].mxu0 %v4128
      %v4269 = vpop.f32.mrb[0].mxu0
      %v4270 = vadd.f32 %v4083, %v4269
      %v4271 = vpop.f32.mrb[0].mxu0
      %4272 = vmatprep.mubr.f32.mxu0 0.0
      %4273 = vmatmul.mubr.f32.gmra.mrb[0].mxu0 %v4131
      %v4274 = vpop.f32.mrb[0].mxu0
      %v4275 = vadd.f32 %v4083, %v4274
      %v4276 = vpop.f32.mrb[0].mxu0
      %4277 = vdwg.mxu0
      %v4278 = vmax.f32 %v4200, 0.0
      %v4279 = vmax.f32 %v4205, 0.0
      %v4280 = vmax.f32 %v4210, 0.0
      %v4281 = vmax.f32 %v4215, 0.0
      %v4282 = vmax.f32 %v4220, 0.0
      %v4283 = vmax.f32 %v4225, 0.0
      %v4284 = vmax.f32 %v4230, 0.0
      %v4285 = vmax.f32 %v4235, 0.0
      %v4286 = vmax.f32 %v4240, 0.0
      %v4287 = vmax.f32 %v4245, 0.0
      %v4288 = vmax.f32 %v4250, 0.0
      %v4289 = vmax.f32 %v4255, 0.0
      %v4290 = vmax.f32 %v4260, 0.0
      %v4291 = vmax.f32 %v4265, 0.0
      %v4292 = vmax.f32 %v4270, 0.0
      %v4293 = vmax.f32 %v4275, 0.0
      %4294 = vst [vmem:[#allocation5] sm:$0xff] %v4278
      %4295 = vst [vmem:[#allocation5 + $0x8] sm:$0xff] %v4279
      %4296 = vst [vmem:[#allocation5 + $0x10] sm:$0xff] %v4280
      %4297 = vst [vmem:[#allocation5 + $0x18] sm:$0xff] %v4281
      %4298 = vst [vmem:[#allocation5 + $0x20] sm:$0xff] %v4282
      %4299 = vst [vmem:[#allocation5 + $0x28] sm:$0xff] %v4283
      %4300 = vst [vmem:[#allocation5 + $0x30] sm:$0xff] %v4284
      %4301 = vst [vmem:[#allocation5 + $0x38] sm:$0xff] %v4285
      %4302 = vst [vmem:[#allocation5 + $0x40] sm:$0xff] %v4286
      %4303 = vst [vmem:[#allocation5 + $0x48] sm:$0xff] %v4287
      %4304 = vst [vmem:[#allocation5 + $0x50] sm:$0xff] %v4288
      %4305 = vst [vmem:[#allocation5 + $0x58] sm:$0xff] %v4289
      %4306 = vst [vmem:[#allocation5 + $0x60] sm:$0xff] %v4290
      %4307 = vst [vmem:[#allocation5 + $0x68] sm:$0xff] %v4291
      %4308 = vst [vmem:[#allocation5 + $0x70] sm:$0xff] %v4292
      %4309 = vst [vmem:[#allocation5 + $0x78] sm:$0xff] %v4293
    $region81: #{tpu_custom_call.1} parent=1 // pred_fallthru
      _
    // Predicated region
    $region82: #{tpu_custom_call.1} parent=1 // pred_check
      _
    $region83: #{tpu_custom_call.1} parent=1 // pred_check_branch
      %4311 = sbr.rel (0) target = $region85
    $region84: #{tpu_custom_call.1} parent=1 // pred_region
      %s4313 = ssub.s32 2048, 2048
      %4314 = vsyncadd [#allocation6], %s4313
      %s4315 = sshll.u32 [#allocation5], 4
      %s4316 = int_to_ptr.vmem [resolvable:$true] %s4315
      %4321 = dma.vmem_to_hbm [thread:$0]  %s4316, 2048, %s18, [#allocation6], 128, 128, 8
    $region85: #{tpu_custom_call.1} parent=1 // pred_fallthru
      _
    // Predicated region
    $region86: #{tpu_custom_call.1} parent=1 // pred_check
      _
    $region87: #{tpu_custom_call.1} parent=1 // pred_check_branch
      %4323 = sbr.rel (0) target = $region89
    $region88: #{tpu_custom_call.1} parent=1 // pred_region
      %4324 = dma.done [#allocation6], 2048
    $region89: #{tpu_custom_call.1} parent=1 // pred_fallthru
      _
    %4325 = vsyncpa [#allocation6], 1

</llo_original>
